<compile_context>
chip_gen: v7x
topology: tpu7x:2x2x1
jax: 0.10.0
libtpu: 0.0.40
codegen_flags: <defaults>
</compile_context>

<pallas_src>
import math
import functools

import jax
import jax.numpy as jnp
from jax.experimental import pallas as pl
from jax.experimental.pallas import tpu as pltpu


# ----------------------------------------------------------------------------
# In-kernel helpers (f32 elementwise, bf16 MXU inputs / f32 accumulate)
# ----------------------------------------------------------------------------

def _layernorm(x, g, b, eps=1e-5):
    mean = jnp.mean(x, axis=-1, keepdims=True)
    xc = x - mean
    var = jnp.mean(xc * xc, axis=-1, keepdims=True)
    return xc * jax.lax.rsqrt(var + eps) * g + b


def _gelu_tanh(x):
    c = math.sqrt(2.0 / math.pi)
    return 0.5 * x * (1.0 + jnp.tanh(c * (x + 0.044715 * x * x * x)))


def _mxu(a, w):
    # bf16 x bf16 -> f32 accumulate (fast path on v5e/v6e/v7x MXUs)
    return jnp.dot(a.astype(jnp.bfloat16), w.astype(jnp.bfloat16),
                   preferred_element_type=jnp.float32)


# ----------------------------------------------------------------------------
# Fused kernels
# ----------------------------------------------------------------------------

def _encoder_kernel(p_ref, w_ref, b_ref, pos_ref, g_ref, be_ref, o_ref):
    # patch-embed matmul + bias + positional embedding + LayerNorm
    h = _mxu(p_ref[...], w_ref[...]) + b_ref[...]
    h = h + pos_ref[...]
    o_ref[...] = _layernorm(h, g_ref[...], be_ref[...])


def _vis_prefix_kernel(f_ref, w1_ref, b1_ref, w2_ref, b2_ref, g_ref, b_ref,
                       o_ref):
    # visual_projection -> visual_projection2 -> LayerNorm, fused
    h = _mxu(f_ref[...], w1_ref[...]) + b1_ref[...]
    h = _mxu(h, w2_ref[...]) + b2_ref[...]
    o_ref[...] = _layernorm(h, g_ref[...], b_ref[...])


def _block_kernel(x_ref, ln1g_ref, ln1b_ref, wqkv_ref, bqkv_ref,
                  wproj_ref, bproj_ref, ln2g_ref, ln2b_ref,
                  wfc_ref, bfc_ref, wmp_ref, bmp_ref,
                  xo_ref, att_ref, *, n_head):
    """One full GPT Block for one batch element, fully VMEM-resident."""
    T, C = x_ref.shape
    hd = C // n_head
    scale = 1.0 / math.sqrt(hd)

    x = x_ref[...]                                            # (T, C) f32

    # ---- ln_1 + fused QKV projection -------------------------------------
    h = _layernorm(x, ln1g_ref[...], ln1b_ref[...])
    qkv = _mxu(h, wqkv_ref[...]) + bqkv_ref[...]              # (T, 3C)

    # causal mask in-registers (row >= col) -- no mask input DMA
    row = jax.lax.broadcasted_iota(jnp.int32, (T, T), 0)
    col = jax.lax.broadcasted_iota(jnp.int32, (T, T), 1)
    causal = row >= col

    head_outs = []
    for hh in range(n_head):                                  # unrolled, tiny
        q = jax.lax.slice(qkv, (0, hh * hd), (T, (hh + 1) * hd))
        k = jax.lax.slice(qkv, (0, C + hh * hd), (T, C + (hh + 1) * hd))
        v = jax.lax.slice(qkv, (0, 2 * C + hh * hd), (T, 2 * C + (hh + 1) * hd))
        s = jax.lax.dot_general(
            q.astype(jnp.bfloat16), k.astype(jnp.bfloat16),
            (((1,), (1,)), ((), ())),
            preferred_element_type=jnp.float32) * scale       # (T, T)
        s = jnp.where(causal, s, -1e30)
        m = jnp.max(s, axis=-1, keepdims=True)
        e = jnp.exp(s - m)
        p = e * pl.reciprocal(jnp.sum(e, axis=-1, keepdims=True), approx=True)
        att_ref[0, hh, :, :] = p                              # attention map out
        head_outs.append(_mxu(p, v))                          # (T, hd)
    attn_out = jnp.concatenate(head_outs, axis=-1)            # (T, C)

    # ---- c_proj + residual -------------------------------------------------
    x = x + _mxu(attn_out, wproj_ref[...]) + bproj_ref[...]

    # ---- ln_2 + LoRA-merged MLP + residual ---------------------------------
    h2 = _layernorm(x, ln2g_ref[...], ln2b_ref[...])
    hid = _gelu_tanh(_mxu(h2, wfc_ref[...]) + bfc_ref[...])   # (T, 4C)
    x = x + _mxu(hid, wmp_ref[...]) + bmp_ref[...]

    xo_ref[...] = x


def _final_kernel(x_ref, g_ref, b_ref, wT_ref, o_ref):
    # ln_f + tied lm_head (no bias); vocab output is lane-dense (128)
    h = _layernorm(x_ref[...], g_ref[...], b_ref[...])
    o_ref[...] = _mxu(h, wT_ref[...])


# ----------------------------------------------------------------------------
# Forward pass (glue = embedding gather / concat / reshapes only)
# ----------------------------------------------------------------------------

_PAR = pltpu.CompilerParams(dimension_semantics=("parallel",))


def encoder_forward(params, image, cfg):
    # TODO(synk): stand-in for timm vit_giant_patch14_clip_224 forward_features;
    # keeps the (B, num_patches, feat_dim) interface with the CLS slot dropped.
    B, Cimg, H, W = image.shape
    P = cfg["patch"]
    nh, nw = H // P, W // P
    N = nh * nw
    D = cfg["vis_feat"]
    patches = image.reshape(B, Cimg, nh, P, nw, P).transpose(0, 2, 4, 1, 3, 5)
    patches = patches.reshape(B * N, Cimg * P * P).astype(jnp.float32)
    pos = params["enc_pos"][1:N + 1]                          # drop CLS slot
    PK = Cimg * P * P
    return pl.pallas_call(
        _encoder_kernel,
        out_shape=jax.ShapeDtypeStruct((B * N, D), jnp.float32),
        grid=(B,),
        in_specs=[
            pl.BlockSpec((N, PK), lambda b: (b, 0)),
            pl.BlockSpec((PK, D), lambda b: (0, 0)),
            pl.BlockSpec((1, D), lambda b: (0, 0)),
            pl.BlockSpec((N, D), lambda b: (0, 0)),
            pl.BlockSpec((1, D), lambda b: (0, 0)),
            pl.BlockSpec((1, D), lambda b: (0, 0)),
        ],
        out_specs=pl.BlockSpec((N, D), lambda b: (b, 0)),
        compiler_params=_PAR,
    )(patches, params["patch_w"], params["patch_b"], pos,
      params["enc_ln_g"], params["enc_ln_b"])


def visual_prefix_forward(params, feat, B, N, cfg):
    Fi, Fm, C = cfg["vis_feat"], cfg["vis_mid"], cfg["n_embd"]
    return pl.pallas_call(
        _vis_prefix_kernel,
        out_shape=jax.ShapeDtypeStruct((B * N, C), jnp.float32),
        grid=(B,),
        in_specs=[
            pl.BlockSpec((N, Fi), lambda b: (b, 0)),
            pl.BlockSpec((Fi, Fm), lambda b: (0, 0)),
            pl.BlockSpec((1, Fm), lambda b: (0, 0)),
            pl.BlockSpec((Fm, C), lambda b: (0, 0)),
            pl.BlockSpec((1, C), lambda b: (0, 0)),
            pl.BlockSpec((1, C), lambda b: (0, 0)),
            pl.BlockSpec((1, C), lambda b: (0, 0)),
        ],
        out_specs=pl.BlockSpec((N, C), lambda b: (b, 0)),
        compiler_params=_PAR,
    )(feat, params["visproj1_w"], params["visproj1_b"],
      params["visproj2_w"], params["visproj2_b"],
      params["ln_vis_g"], params["ln_vis_b"])


def decoder_forward(params, caption_ids, vis_prefix, B, N, cfg):
    C = cfg["n_embd"]
    H = cfg["n_head"]
    V = cfg["vocab_size"]

    tok = params["wte"][caption_ids].astype(jnp.float32)      # embedding gather
    vis = vis_prefix.reshape(B, N, C)
    x = jnp.concatenate([vis, tok], axis=1)                   # (B, N+Tcap, C)
    T = min(x.shape[1], cfg["block_size"])
    x = x[:, :T, :] + params["wpe"][:T][None, :, :]           # positional embed
    x2d = x.reshape(B * T, C)

    blk_kernel = functools.partial(_block_kernel, n_head=H)
    attn_list = []
    for blk in params["blocks"]:
        x2d, att = pl.pallas_call(
            blk_kernel,
            out_shape=(jax.ShapeDtypeStruct((B * T, C), jnp.float32),
                       jax.ShapeDtypeStruct((B, H, T, T), jnp.float32)),
            grid=(B,),
            in_specs=[
                pl.BlockSpec((T, C), lambda b: (b, 0)),        # x
                pl.BlockSpec((1, C), lambda b: (0, 0)),        # ln1 g
                pl.BlockSpec((1, C), lambda b: (0, 0)),        # ln1 b
                pl.BlockSpec((C, 3 * C), lambda b: (0, 0)),    # c_attn w
                pl.BlockSpec((1, 3 * C), lambda b: (0, 0)),    # c_attn b
                pl.BlockSpec((C, C), lambda b: (0, 0)),        # c_proj w
                pl.BlockSpec((1, C), lambda b: (0, 0)),        # c_proj b
                pl.BlockSpec((1, C), lambda b: (0, 0)),        # ln2 g
                pl.BlockSpec((1, C), lambda b: (0, 0)),        # ln2 b
                pl.BlockSpec((C, 4 * C), lambda b: (0, 0)),    # c_fc w (LoRA-merged)
                pl.BlockSpec((1, 4 * C), lambda b: (0, 0)),    # c_fc b
                pl.BlockSpec((4 * C, C), lambda b: (0, 0)),    # mlp c_proj w (LoRA-merged)
                pl.BlockSpec((1, C), lambda b: (0, 0)),        # mlp c_proj b
            ],
            out_specs=(pl.BlockSpec((T, C), lambda b: (b, 0)),
                       pl.BlockSpec((1, H, T, T), lambda b: (b, 0, 0, 0))),
            compiler_params=_PAR,
        )(x2d, blk["ln1_g"], blk["ln1_b"], blk["attn_w"], blk["attn_b"],
          blk["proj_w"], blk["proj_b"], blk["ln2_g"], blk["ln2_b"],
          blk["fc_w"], blk["fc_b"], blk["mlp_proj_w"], blk["mlp_proj_b"])
        attn_list.append(att)

    logits = pl.pallas_call(
        _final_kernel,
        out_shape=jax.ShapeDtypeStruct((B * T, V), jnp.float32),
        grid=(B,),
        in_specs=[
            pl.BlockSpec((T, C), lambda b: (b, 0)),
            pl.BlockSpec((1, C), lambda b: (0, 0)),
            pl.BlockSpec((1, C), lambda b: (0, 0)),
            pl.BlockSpec((C, V), lambda b: (0, 0)),
        ],
        out_specs=pl.BlockSpec((T, V), lambda b: (b, 0)),
        compiler_params=_PAR,
    )(x2d, params["lnf_g"], params["lnf_b"], params["lm_head_w"])
    return logits.reshape(B, T, V), attn_list


def model_forward(params, image, caption_ids, cfg):
    B = image.shape[0]
    N = (cfg["img_size"] // cfg["patch"]) ** 2
    feat = encoder_forward(params, image, cfg)                 # (B*N, vis_feat)
    vis = visual_prefix_forward(params, feat, B, N, cfg)       # (B*N, n_embd)
    return decoder_forward(params, caption_ids, vis, B, N, cfg)


# ----------------------------------------------------------------------------
# Deterministic synthetic parameter init (shapes follow the module __init__,
# scaled down; LoRA deltas merged into MLP weights: W + (B@A)*alpha/r).
# Matmul weights stored bf16 (MXU input dtype); biases / LN params f32.
# ----------------------------------------------------------------------------

def init_params(key, cfg):
    n_embd, vocab, block = cfg["n_embd"], cfg["vocab_size"], cfg["block_size"]
    vis_in, vis_mid = cfg["vis_feat"], cfg["vis_mid"]
    keys = iter(jax.random.split(key, 256))
    wdt = jnp.bfloat16

    def nrm(shape, scale=0.02, dtype=jnp.float32):
        return (scale * jax.random.normal(next(keys), shape,
                                          dtype=jnp.float32)).astype(dtype)

    p = {}
    p["wte"] = nrm((vocab, n_embd), dtype=wdt)            # embedding table
    p["lm_head_w"] = p["wte"].T                           # tied lm_head (init-time transpose)
    p["wpe"] = nrm((block, n_embd))
    p["visproj1_w"] = nrm((vis_in, vis_mid), dtype=wdt)
    p["visproj1_b"] = nrm((1, vis_mid))
    p["visproj2_w"] = nrm((vis_mid, n_embd), dtype=wdt)
    p["visproj2_b"] = nrm((1, n_embd))
    p["ln_vis_g"] = jnp.ones((1, n_embd)); p["ln_vis_b"] = jnp.zeros((1, n_embd))
    p["lnf_g"] = jnp.ones((1, n_embd));    p["lnf_b"] = jnp.zeros((1, n_embd))

    r = 16
    scaling = 1.0 / r
    blocks = []
    for _ in range(cfg["n_layer"]):
        b = {}
        b["ln1_g"] = jnp.ones((1, n_embd)); b["ln1_b"] = jnp.zeros((1, n_embd))
        b["ln2_g"] = jnp.ones((1, n_embd)); b["ln2_b"] = jnp.zeros((1, n_embd))
        b["attn_w"] = nrm((n_embd, 3 * n_embd), dtype=wdt)
        b["attn_b"] = nrm((1, 3 * n_embd))
        b["proj_w"] = nrm((n_embd, n_embd), dtype=wdt)
        b["proj_b"] = nrm((1, n_embd))
        # lora.Linear(n_embd, 4*n_embd, r=16): merge base + LoRA delta
        w = nrm((n_embd, 4 * n_embd))
        A = nrm((r, n_embd)); Bm = nrm((4 * n_embd, r))
        b["fc_w"] = (w + scaling * (A.T @ Bm.T)).astype(wdt)
        b["fc_b"] = nrm((1, 4 * n_embd))
        w = nrm((4 * n_embd, n_embd))
        A = nrm((r, 4 * n_embd)); Bm = nrm((n_embd, r))
        b["mlp_proj_w"] = (w + scaling * (A.T @ Bm.T)).astype(wdt)
        b["mlp_proj_b"] = nrm((1, n_embd))
        blocks.append(b)
    p["blocks"] = blocks

    # encoder stand-in
    P = cfg["patch"]
    n_patches = (cfg["img_size"] // P) ** 2
    p["patch_w"] = nrm((3 * P * P, vis_in), dtype=wdt)
    p["patch_b"] = nrm((1, vis_in))
    p["enc_pos"] = nrm((n_patches + 1, vis_in))
    p["enc_ln_g"] = jnp.ones((1, vis_in)); p["enc_ln_b"] = jnp.zeros((1, vis_in))
    return p


# ----------------------------------------------------------------------------
if __name__ == "__main__":
    # Small config consistent with the module structure (scaled-down GPT-2 cfg).
    cfg = dict(n_layer=2, n_head=4, n_embd=32, vocab_size=128, block_size=64,
               vis_feat=64, vis_mid=48, img_size=16, patch=4)

    key = jax.random.PRNGKey(0)
    kp, ki, kc = jax.random.split(key, 3)
    params = init_params(kp, cfg)

    image = jax.random.normal(ki, (2, 3, cfg["img_size"], cfg["img_size"]),
                              dtype=jnp.float32)                 # NCHW like PyTorch
    caption_input = jax.random.randint(kc, (2, 8), 0, cfg["vocab_size"])

    fwd = jax.jit(lambda p, im, cap: model_forward(p, im, cap, cfg))
    logits, attn_list = fwd(params, image, caption_input)
    jax.block_until_ready(logits)
    for a in attn_list:
        jax.block_until_ready(a)

    assert logits.shape == (2, 16 + 8, cfg["vocab_size"])
    assert attn_list[0].shape == (2, cfg["n_head"], 24, 24)
    print("KERNEL_OK")
</pallas_src>

<mosaic_0001>
module attributes {stable_mosaic.version = 11 : i64} {
  func.func @_encoder_kernel(%arg0: i32, %arg1: memref<16x48xf32, #tpu.memory_space<vmem>>, %arg2: memref<48x64xbf16, #tpu.memory_space<vmem>>, %arg3: memref<1x64xf32, #tpu.memory_space<vmem>>, %arg4: memref<16x64xf32, #tpu.memory_space<vmem>>, %arg5: memref<1x64xf32, #tpu.memory_space<vmem>>, %arg6: memref<1x64xf32, #tpu.memory_space<vmem>>, %arg7: memref<16x64xf32, #tpu.memory_space<vmem>>) attributes {dimension_semantics = [#tpu.dimension_semantics<parallel>], iteration_bounds = array<i64: 2>, scalar_prefetch = 0 : i64, scratch_operands = 0 : i64, tpu.core_type = #tpu.core_type<tc>, window_params = [{transform_indices = @transform_0, window_bounds = array<i64: 16, 48>}, {pipeline_mode = #tpu.pipeline_mode<synchronous>, transform_indices = @transform_1, window_bounds = array<i64: 48, 64>}, {pipeline_mode = #tpu.pipeline_mode<synchronous>, transform_indices = @transform_2, window_bounds = array<i64: 1, 64>}, {pipeline_mode = #tpu.pipeline_mode<synchronous>, transform_indices = @transform_3, window_bounds = array<i64: 16, 64>}, {pipeline_mode = #tpu.pipeline_mode<synchronous>, transform_indices = @transform_4, window_bounds = array<i64: 1, 64>}, {pipeline_mode = #tpu.pipeline_mode<synchronous>, transform_indices = @transform_5, window_bounds = array<i64: 1, 64>}, {transform_indices = @transform_6, window_bounds = array<i64: 16, 64>}]} {
    %c0 = arith.constant 0 : index
    %c0_0 = arith.constant 0 : index
    %0 = vector.load %arg1[%c0, %c0_0] : memref<16x48xf32, #tpu.memory_space<vmem>>, vector<16x48xf32>
    %c0_1 = arith.constant 0 : index
    %c0_2 = arith.constant 0 : index
    %1 = vector.load %arg2[%c0_1, %c0_2] : memref<48x64xbf16, #tpu.memory_space<vmem>>, vector<48x64xbf16>
    %2 = arith.truncf %0 : vector<16x48xf32> to vector<16x48xbf16>
    %cst = arith.constant dense<0.000000e+00> : vector<16x64xf32>
    %3 = tpu.matmul %2, %1, %cst {dimension_numbers = #tpu.dot_dimension_numbers<[1], [0], [0], [1], [0, 0, 1, 1], [], []>} : vector<16x48xbf16>, vector<48x64xbf16>, vector<16x64xf32> -> vector<16x64xf32>
    %c0_3 = arith.constant 0 : index
    %c0_4 = arith.constant 0 : index
    %4 = vector.load %arg3[%c0_3, %c0_4] : memref<1x64xf32, #tpu.memory_space<vmem>>, vector<1x64xf32>
    %5 = vector.broadcast %4 : vector<1x64xf32> to vector<16x64xf32>
    %6 = arith.addf %3, %5 : vector<16x64xf32>
    %c0_5 = arith.constant 0 : index
    %c0_6 = arith.constant 0 : index
    %7 = vector.load %arg4[%c0_5, %c0_6] : memref<16x64xf32, #tpu.memory_space<vmem>>, vector<16x64xf32>
    %8 = arith.addf %6, %7 : vector<16x64xf32>
    %c0_7 = arith.constant 0 : index
    %c0_8 = arith.constant 0 : index
    %9 = vector.load %arg5[%c0_7, %c0_8] : memref<1x64xf32, #tpu.memory_space<vmem>>, vector<1x64xf32>
    %c0_9 = arith.constant 0 : index
    %c0_10 = arith.constant 0 : index
    %10 = vector.load %arg6[%c0_9, %c0_10] : memref<1x64xf32, #tpu.memory_space<vmem>>, vector<1x64xf32>
    %cst_11 = arith.constant dense<0.000000e+00> : vector<16xf32>
    %11 = vector.multi_reduction <add>, %8, %cst_11 [1] : vector<16x64xf32> to vector<16xf32>
    %12 = vector.shape_cast %11 : vector<16xf32> to vector<16x1xf32>
    %cst_12 = arith.constant 6.400000e+01 : f32
    %13 = vector.broadcast %cst_12 : f32 to vector<16x1xf32>
    %14 = arith.divf %12, %13 : vector<16x1xf32>
    %15 = vector.broadcast %14 : vector<16x1xf32> to vector<16x64xf32>
    %16 = arith.subf %8, %15 : vector<16x64xf32>
    %17 = arith.mulf %16, %16 : vector<16x64xf32>
    %cst_13 = arith.constant dense<0.000000e+00> : vector<16xf32>
    %18 = vector.multi_reduction <add>, %17, %cst_13 [1] : vector<16x64xf32> to vector<16xf32>
    %19 = vector.shape_cast %18 : vector<16xf32> to vector<16x1xf32>
    %cst_14 = arith.constant 6.400000e+01 : f32
    %20 = vector.broadcast %cst_14 : f32 to vector<16x1xf32>
    %21 = arith.divf %19, %20 : vector<16x1xf32>
    %cst_15 = arith.constant 9.99999974E-6 : f32
    %22 = vector.broadcast %cst_15 : f32 to vector<16x1xf32>
    %23 = arith.addf %21, %22 : vector<16x1xf32>
    %24 = math.rsqrt %23 : vector<16x1xf32>
    %25 = vector.broadcast %24 : vector<16x1xf32> to vector<16x64xf32>
    %26 = arith.mulf %16, %25 : vector<16x64xf32>
    %27 = vector.broadcast %9 : vector<1x64xf32> to vector<16x64xf32>
    %28 = arith.mulf %26, %27 : vector<16x64xf32>
    %29 = vector.broadcast %10 : vector<1x64xf32> to vector<16x64xf32>
    %30 = arith.addf %28, %29 : vector<16x64xf32>
    %c0_16 = arith.constant 0 : index
    %c0_17 = arith.constant 0 : index
    %31 = vector.load %arg7[%c0_16, %c0_17] : memref<16x64xf32, #tpu.memory_space<vmem>>, vector<16x64xf32>
    tpu.vector_store %arg7[%c0_16, %c0_17], %30 {strides = array<i32>} : memref<16x64xf32, #tpu.memory_space<vmem>>, vector<16x64xf32>,
    return
  }
  func.func @transform_0(%arg0: i32) -> (i32, i32) {
    %c0_i32 = arith.constant 0 : i32
    %c0_i32_0 = arith.constant 0 : i32
    return %arg0, %c0_i32 : i32, i32
  }
  func.func @transform_1(%arg0: i32) -> (i32, i32) {
    %c0_i32 = arith.constant 0 : i32
    %c0_i32_0 = arith.constant 0 : i32
    %c0_i32_1 = arith.constant 0 : i32
    return %c0_i32, %c0_i32_0 : i32, i32
  }
  func.func @transform_2(%arg0: i32) -> (i32, i32) {
    %c0_i32 = arith.constant 0 : i32
    %c0_i32_0 = arith.constant 0 : i32
    %c0_i32_1 = arith.constant 0 : i32
    return %c0_i32, %c0_i32_0 : i32, i32
  }
  func.func @transform_3(%arg0: i32) -> (i32, i32) {
    %c0_i32 = arith.constant 0 : i32
    %c0_i32_0 = arith.constant 0 : i32
    %c0_i32_1 = arith.constant 0 : i32
    return %c0_i32, %c0_i32_0 : i32, i32
  }
  func.func @transform_4(%arg0: i32) -> (i32, i32) {
    %c0_i32 = arith.constant 0 : i32
    %c0_i32_0 = arith.constant 0 : i32
    %c0_i32_1 = arith.constant 0 : i32
    return %c0_i32, %c0_i32_0 : i32, i32
  }
  func.func @transform_5(%arg0: i32) -> (i32, i32) {
    %c0_i32 = arith.constant 0 : i32
    %c0_i32_0 = arith.constant 0 : i32
    %c0_i32_1 = arith.constant 0 : i32
    return %c0_i32, %c0_i32_0 : i32, i32
  }
  func.func @transform_6(%arg0: i32) -> (i32, i32) {
    %c0_i32 = arith.constant 0 : i32
    %c0_i32_0 = arith.constant 0 : i32
    return %arg0, %c0_i32 : i32, i32
  }
}

module attributes {stable_mosaic.version = 11 : i64} {
  func.func @_vis_prefix_kernel(%arg0: i32, %arg1: memref<16x64xf32, #tpu.memory_space<vmem>>, %arg2: memref<64x48xbf16, #tpu.memory_space<vmem>>, %arg3: memref<1x48xf32, #tpu.memory_space<vmem>>, %arg4: memref<48x32xbf16, #tpu.memory_space<vmem>>, %arg5: memref<1x32xf32, #tpu.memory_space<vmem>>, %arg6: memref<1x32xf32, #tpu.memory_space<vmem>>, %arg7: memref<1x32xf32, #tpu.memory_space<vmem>>, %arg8: memref<16x32xf32, #tpu.memory_space<vmem>>) attributes {dimension_semantics = [#tpu.dimension_semantics<parallel>], iteration_bounds = array<i64: 2>, scalar_prefetch = 0 : i64, scratch_operands = 0 : i64, tpu.core_type = #tpu.core_type<tc>, window_params = [{transform_indices = @transform_0, window_bounds = array<i64: 16, 64>}, {pipeline_mode = #tpu.pipeline_mode<synchronous>, transform_indices = @transform_1, window_bounds = array<i64: 64, 48>}, {pipeline_mode = #tpu.pipeline_mode<synchronous>, transform_indices = @transform_2, window_bounds = array<i64: 1, 48>}, {pipeline_mode = #tpu.pipeline_mode<synchronous>, transform_indices = @transform_3, window_bounds = array<i64: 48, 32>}, {pipeline_mode = #tpu.pipeline_mode<synchronous>, transform_indices = @transform_4, window_bounds = array<i64: 1, 32>}, {pipeline_mode = #tpu.pipeline_mode<synchronous>, transform_indices = @transform_5, window_bounds = array<i64: 1, 32>}, {pipeline_mode = #tpu.pipeline_mode<synchronous>, transform_indices = @transform_6, window_bounds = array<i64: 1, 32>}, {transform_indices = @transform_7, window_bounds = array<i64: 16, 32>}]} {
    %c0 = arith.constant 0 : index
    %c0_0 = arith.constant 0 : index
    %0 = vector.load %arg1[%c0, %c0_0] : memref<16x64xf32, #tpu.memory_space<vmem>>, vector<16x64xf32>
    %c0_1 = arith.constant 0 : index
    %c0_2 = arith.constant 0 : index
    %1 = vector.load %arg2[%c0_1, %c0_2] : memref<64x48xbf16, #tpu.memory_space<vmem>>, vector<64x48xbf16>
    %2 = arith.truncf %0 : vector<16x64xf32> to vector<16x64xbf16>
    %cst = arith.constant dense<0.000000e+00> : vector<16x48xf32>
    %3 = tpu.matmul %2, %1, %cst {dimension_numbers = #tpu.dot_dimension_numbers<[1], [0], [0], [1], [0, 0, 1, 1], [], []>} : vector<16x64xbf16>, vector<64x48xbf16>, vector<16x48xf32> -> vector<16x48xf32>
    %c0_3 = arith.constant 0 : index
    %c0_4 = arith.constant 0 : index
    %4 = vector.load %arg3[%c0_3, %c0_4] : memref<1x48xf32, #tpu.memory_space<vmem>>, vector<1x48xf32>
    %5 = vector.broadcast %4 : vector<1x48xf32> to vector<16x48xf32>
    %6 = arith.addf %3, %5 : vector<16x48xf32>
    %c0_5 = arith.constant 0 : index
    %c0_6 = arith.constant 0 : index
    %7 = vector.load %arg4[%c0_5, %c0_6] : memref<48x32xbf16, #tpu.memory_space<vmem>>, vector<48x32xbf16>
    %8 = arith.truncf %6 : vector<16x48xf32> to vector<16x48xbf16>
    %cst_7 = arith.constant dense<0.000000e+00> : vector<16x32xf32>
    %9 = tpu.matmul %8, %7, %cst_7 {dimension_numbers = #tpu.dot_dimension_numbers<[1], [0], [0], [1], [0, 0, 1, 1], [], []>} : vector<16x48xbf16>, vector<48x32xbf16>, vector<16x32xf32> -> vector<16x32xf32>
    %c0_8 = arith.constant 0 : index
    %c0_9 = arith.constant 0 : index
    %10 = vector.load %arg5[%c0_8, %c0_9] : memref<1x32xf32, #tpu.memory_space<vmem>>, vector<1x32xf32>
    %11 = vector.broadcast %10 : vector<1x32xf32> to vector<16x32xf32>
    %12 = arith.addf %9, %11 : vector<16x32xf32>
    %c0_10 = arith.constant 0 : index
    %c0_11 = arith.constant 0 : index
    %13 = vector.load %arg6[%c0_10, %c0_11] : memref<1x32xf32, #tpu.memory_space<vmem>>, vector<1x32xf32>
    %c0_12 = arith.constant 0 : index
    %c0_13 = arith.constant 0 : index
    %14 = vector.load %arg7[%c0_12, %c0_13] : memref<1x32xf32, #tpu.memory_space<vmem>>, vector<1x32xf32>
    %cst_14 = arith.constant dense<0.000000e+00> : vector<16xf32>
    %15 = vector.multi_reduction <add>, %12, %cst_14 [1] : vector<16x32xf32> to vector<16xf32>
    %16 = vector.shape_cast %15 : vector<16xf32> to vector<16x1xf32>
    %cst_15 = arith.constant 3.200000e+01 : f32
    %17 = vector.broadcast %cst_15 : f32 to vector<16x1xf32>
    %18 = arith.divf %16, %17 : vector<16x1xf32>
    %19 = vector.broadcast %18 : vector<16x1xf32> to vector<16x32xf32>
    %20 = arith.subf %12, %19 : vector<16x32xf32>
    %21 = arith.mulf %20, %20 : vector<16x32xf32>
    %cst_16 = arith.constant dense<0.000000e+00> : vector<16xf32>
    %22 = vector.multi_reduction <add>, %21, %cst_16 [1] : vector<16x32xf32> to vector<16xf32>
    %23 = vector.shape_cast %22 : vector<16xf32> to vector<16x1xf32>
    %cst_17 = arith.constant 3.200000e+01 : f32
    %24 = vector.broadcast %cst_17 : f32 to vector<16x1xf32>
    %25 = arith.divf %23, %24 : vector<16x1xf32>
    %cst_18 = arith.constant 9.99999974E-6 : f32
    %26 = vector.broadcast %cst_18 : f32 to vector<16x1xf32>
    %27 = arith.addf %25, %26 : vector<16x1xf32>
    %28 = math.rsqrt %27 : vector<16x1xf32>
    %29 = vector.broadcast %28 : vector<16x1xf32> to vector<16x32xf32>
    %30 = arith.mulf %20, %29 : vector<16x32xf32>
    %31 = vector.broadcast %13 : vector<1x32xf32> to vector<16x32xf32>
    %32 = arith.mulf %30, %31 : vector<16x32xf32>
    %33 = vector.broadcast %14 : vector<1x32xf32> to vector<16x32xf32>
    %34 = arith.addf %32, %33 : vector<16x32xf32>
    %c0_19 = arith.constant 0 : index
    %c0_20 = arith.constant 0 : index
    %35 = vector.load %arg8[%c0_19, %c0_20] : memref<16x32xf32, #tpu.memory_space<vmem>>, vector<16x32xf32>
    tpu.vector_store %arg8[%c0_19, %c0_20], %34 {strides = array<i32>} : memref<16x32xf32, #tpu.memory_space<vmem>>, vector<16x32xf32>,
    return
  }
  func.func @transform_0(%arg0: i32) -> (i32, i32) {
    %c0_i32 = arith.constant 0 : i32
    %c0_i32_0 = arith.constant 0 : i32
    return %arg0, %c0_i32 : i32, i32
  }
  func.func @transform_1(%arg0: i32) -> (i32, i32) {
    %c0_i32 = arith.constant 0 : i32
    %c0_i32_0 = arith.constant 0 : i32
    %c0_i32_1 = arith.constant 0 : i32
    return %c0_i32, %c0_i32_0 : i32, i32
  }
  func.func @transform_2(%arg0: i32) -> (i32, i32) {
    %c0_i32 = arith.constant 0 : i32
    %c0_i32_0 = arith.constant 0 : i32
    %c0_i32_1 = arith.constant 0 : i32
    return %c0_i32, %c0_i32_0 : i32, i32
  }
  func.func @transform_3(%arg0: i32) -> (i32, i32) {
    %c0_i32 = arith.constant 0 : i32
    %c0_i32_0 = arith.constant 0 : i32
    %c0_i32_1 = arith.constant 0 : i32
    return %c0_i32, %c0_i32_0 : i32, i32
  }
  func.func @transform_4(%arg0: i32) -> (i32, i32) {
    %c0_i32 = arith.constant 0 : i32
    %c0_i32_0 = arith.constant 0 : i32
    %c0_i32_1 = arith.constant 0 : i32
    return %c0_i32, %c0_i32_0 : i32, i32
  }
  func.func @transform_5(%arg0: i32) -> (i32, i32) {
    %c0_i32 = arith.constant 0 : i32
    %c0_i32_0 = arith.constant 0 : i32
    %c0_i32_1 = arith.constant 0 : i32
    return %c0_i32, %c0_i32_0 : i32, i32
  }
  func.func @transform_6(%arg0: i32) -> (i32, i32) {
    %c0_i32 = arith.constant 0 : i32
    %c0_i32_0 = arith.constant 0 : i32
    %c0_i32_1 = arith.constant 0 : i32
    return %c0_i32, %c0_i32_0 : i32, i32
  }
  func.func @transform_7(%arg0: i32) -> (i32, i32) {
    %c0_i32 = arith.constant 0 : i32
    %c0_i32_0 = arith.constant 0 : i32
    return %arg0, %c0_i32 : i32, i32
  }
}

module attributes {stable_mosaic.version = 11 : i64} {
  func.func @_final_kernel(%arg0: i32, %arg1: memref<24x32xf32, #tpu.memory_space<vmem>>, %arg2: memref<1x32xf32, #tpu.memory_space<vmem>>, %arg3: memref<1x32xf32, #tpu.memory_space<vmem>>, %arg4: memref<32x128xbf16, #tpu.memory_space<vmem>>, %arg5: memref<24x128xf32, #tpu.memory_space<vmem>>) attributes {dimension_semantics = [#tpu.dimension_semantics<parallel>], iteration_bounds = array<i64: 2>, scalar_prefetch = 0 : i64, scratch_operands = 0 : i64, tpu.core_type = #tpu.core_type<tc>, window_params = [{transform_indices = @transform_0, window_bounds = array<i64: 24, 32>}, {pipeline_mode = #tpu.pipeline_mode<synchronous>, transform_indices = @transform_1, window_bounds = array<i64: 1, 32>}, {pipeline_mode = #tpu.pipeline_mode<synchronous>, transform_indices = @transform_2, window_bounds = array<i64: 1, 32>}, {pipeline_mode = #tpu.pipeline_mode<synchronous>, transform_indices = @transform_3, window_bounds = array<i64: 32, 128>}, {transform_indices = @transform_4, window_bounds = array<i64: 24, 128>}]} {
    %c0 = arith.constant 0 : index
    %c0_0 = arith.constant 0 : index
    %0 = vector.load %arg1[%c0, %c0_0] : memref<24x32xf32, #tpu.memory_space<vmem>>, vector<24x32xf32>
    %c0_1 = arith.constant 0 : index
    %c0_2 = arith.constant 0 : index
    %1 = vector.load %arg2[%c0_1, %c0_2] : memref<1x32xf32, #tpu.memory_space<vmem>>, vector<1x32xf32>
    %c0_3 = arith.constant 0 : index
    %c0_4 = arith.constant 0 : index
    %2 = vector.load %arg3[%c0_3, %c0_4] : memref<1x32xf32, #tpu.memory_space<vmem>>, vector<1x32xf32>
    %cst = arith.constant dense<0.000000e+00> : vector<24xf32>
    %3 = vector.multi_reduction <add>, %0, %cst [1] : vector<24x32xf32> to vector<24xf32>
    %4 = vector.shape_cast %3 : vector<24xf32> to vector<24x1xf32>
    %cst_5 = arith.constant 3.200000e+01 : f32
    %5 = vector.broadcast %cst_5 : f32 to vector<24x1xf32>
    %6 = arith.divf %4, %5 : vector<24x1xf32>
    %7 = vector.broadcast %6 : vector<24x1xf32> to vector<24x32xf32>
    %8 = arith.subf %0, %7 : vector<24x32xf32>
    %9 = arith.mulf %8, %8 : vector<24x32xf32>
    %cst_6 = arith.constant dense<0.000000e+00> : vector<24xf32>
    %10 = vector.multi_reduction <add>, %9, %cst_6 [1] : vector<24x32xf32> to vector<24xf32>
    %11 = vector.shape_cast %10 : vector<24xf32> to vector<24x1xf32>
    %cst_7 = arith.constant 3.200000e+01 : f32
    %12 = vector.broadcast %cst_7 : f32 to vector<24x1xf32>
    %13 = arith.divf %11, %12 : vector<24x1xf32>
    %cst_8 = arith.constant 9.99999974E-6 : f32
    %14 = vector.broadcast %cst_8 : f32 to vector<24x1xf32>
    %15 = arith.addf %13, %14 : vector<24x1xf32>
    %16 = math.rsqrt %15 : vector<24x1xf32>
    %17 = vector.broadcast %16 : vector<24x1xf32> to vector<24x32xf32>
    %18 = arith.mulf %8, %17 : vector<24x32xf32>
    %19 = vector.broadcast %1 : vector<1x32xf32> to vector<24x32xf32>
    %20 = arith.mulf %18, %19 : vector<24x32xf32>
    %21 = vector.broadcast %2 : vector<1x32xf32> to vector<24x32xf32>
    %22 = arith.addf %20, %21 : vector<24x32xf32>
    %c0_9 = arith.constant 0 : index
    %c0_10 = arith.constant 0 : index
    %23 = vector.load %arg4[%c0_9, %c0_10] : memref<32x128xbf16, #tpu.memory_space<vmem>>, vector<32x128xbf16>
    %24 = arith.truncf %22 : vector<24x32xf32> to vector<24x32xbf16>
    %cst_11 = arith.constant dense<0.000000e+00> : vector<24x128xf32>
    %25 = tpu.matmul %24, %23, %cst_11 {dimension_numbers = #tpu.dot_dimension_numbers<[1], [0], [0], [1], [0, 0, 1, 1], [], []>} : vector<24x32xbf16>, vector<32x128xbf16>, vector<24x128xf32> -> vector<24x128xf32>
    %c0_12 = arith.constant 0 : index
    %c0_13 = arith.constant 0 : index
    %26 = vector.load %arg5[%c0_12, %c0_13] : memref<24x128xf32, #tpu.memory_space<vmem>>, vector<24x128xf32>
    tpu.vector_store %arg5[%c0_12, %c0_13], %25 {strides = array<i32>} : memref<24x128xf32, #tpu.memory_space<vmem>>, vector<24x128xf32>,
    return
  }
  func.func @transform_0(%arg0: i32) -> (i32, i32) {
    %c0_i32 = arith.constant 0 : i32
    %c0_i32_0 = arith.constant 0 : i32
    return %arg0, %c0_i32 : i32, i32
  }
  func.func @transform_1(%arg0: i32) -> (i32, i32) {
    %c0_i32 = arith.constant 0 : i32
    %c0_i32_0 = arith.constant 0 : i32
    %c0_i32_1 = arith.constant 0 : i32
    return %c0_i32, %c0_i32_0 : i32, i32
  }
  func.func @transform_2(%arg0: i32) -> (i32, i32) {
    %c0_i32 = arith.constant 0 : i32
    %c0_i32_0 = arith.constant 0 : i32
    %c0_i32_1 = arith.constant 0 : i32
    return %c0_i32, %c0_i32_0 : i32, i32
  }
  func.func @transform_3(%arg0: i32) -> (i32, i32) {
    %c0_i32 = arith.constant 0 : i32
    %c0_i32_0 = arith.constant 0 : i32
    %c0_i32_1 = arith.constant 0 : i32
    return %c0_i32, %c0_i32_0 : i32, i32
  }
  func.func @transform_4(%arg0: i32) -> (i32, i32) {
    %c0_i32 = arith.constant 0 : i32
    %c0_i32_0 = arith.constant 0 : i32
    return %arg0, %c0_i32 : i32, i32
  }
}

module attributes {stable_mosaic.version = 11 : i64} {
  func.func @_block_kernel(%arg0: i32, %arg1: memref<24x32xf32, #tpu.memory_space<vmem>>, %arg2: memref<1x32xf32, #tpu.memory_space<vmem>>, %arg3: memref<1x32xf32, #tpu.memory_space<vmem>>, %arg4: memref<32x96xbf16, #tpu.memory_space<vmem>>, %arg5: memref<1x96xf32, #tpu.memory_space<vmem>>, %arg6: memref<32x32xbf16, #tpu.memory_space<vmem>>, %arg7: memref<1x32xf32, #tpu.memory_space<vmem>>, %arg8: memref<1x32xf32, #tpu.memory_space<vmem>>, %arg9: memref<1x32xf32, #tpu.memory_space<vmem>>, %arg10: memref<32x128xbf16, #tpu.memory_space<vmem>>, %arg11: memref<1x128xf32, #tpu.memory_space<vmem>>, %arg12: memref<128x32xbf16, #tpu.memory_space<vmem>>, %arg13: memref<1x32xf32, #tpu.memory_space<vmem>>, %arg14: memref<24x32xf32, #tpu.memory_space<vmem>>, %arg15: memref<1x4x24x24xf32, #tpu.memory_space<vmem>>) attributes {dimension_semantics = [#tpu.dimension_semantics<parallel>], iteration_bounds = array<i64: 2>, scalar_prefetch = 0 : i64, scratch_operands = 0 : i64, tpu.core_type = #tpu.core_type<tc>, window_params = [{transform_indices = @transform_0, window_bounds = array<i64: 24, 32>}, {pipeline_mode = #tpu.pipeline_mode<synchronous>, transform_indices = @transform_1, window_bounds = array<i64: 1, 32>}, {pipeline_mode = #tpu.pipeline_mode<synchronous>, transform_indices = @transform_2, window_bounds = array<i64: 1, 32>}, {pipeline_mode = #tpu.pipeline_mode<synchronous>, transform_indices = @transform_3, window_bounds = array<i64: 32, 96>}, {pipeline_mode = #tpu.pipeline_mode<synchronous>, transform_indices = @transform_4, window_bounds = array<i64: 1, 96>}, {pipeline_mode = #tpu.pipeline_mode<synchronous>, transform_indices = @transform_5, window_bounds = array<i64: 32, 32>}, {pipeline_mode = #tpu.pipeline_mode<synchronous>, transform_indices = @transform_6, window_bounds = array<i64: 1, 32>}, {pipeline_mode = #tpu.pipeline_mode<synchronous>, transform_indices = @transform_7, window_bounds = array<i64: 1, 32>}, {pipeline_mode = #tpu.pipeline_mode<synchronous>, transform_indices = @transform_8, window_bounds = array<i64: 1, 32>}, {pipeline_mode = #tpu.pipeline_mode<synchronous>, transform_indices = @transform_9, window_bounds = array<i64: 32, 128>}, {pipeline_mode = #tpu.pipeline_mode<synchronous>, transform_indices = @transform_10, window_bounds = array<i64: 1, 128>}, {pipeline_mode = #tpu.pipeline_mode<synchronous>, transform_indices = @transform_11, window_bounds = array<i64: 128, 32>}, {pipeline_mode = #tpu.pipeline_mode<synchronous>, transform_indices = @transform_12, window_bounds = array<i64: 1, 32>}, {transform_indices = @transform_13, window_bounds = array<i64: 24, 32>}, {transform_indices = @transform_14, window_bounds = array<i64: 1, 4, 24, 24>}]} {
    %c0 = arith.constant 0 : index
    %c0_0 = arith.constant 0 : index
    %0 = vector.load %arg1[%c0, %c0_0] : memref<24x32xf32, #tpu.memory_space<vmem>>, vector<24x32xf32>
    %c0_1 = arith.constant 0 : index
    %c0_2 = arith.constant 0 : index
    %1 = vector.load %arg2[%c0_1, %c0_2] : memref<1x32xf32, #tpu.memory_space<vmem>>, vector<1x32xf32>
    %c0_3 = arith.constant 0 : index
    %c0_4 = arith.constant 0 : index
    %2 = vector.load %arg3[%c0_3, %c0_4] : memref<1x32xf32, #tpu.memory_space<vmem>>, vector<1x32xf32>
    %cst = arith.constant dense<0.000000e+00> : vector<24xf32>
    %3 = vector.multi_reduction <add>, %0, %cst [1] : vector<24x32xf32> to vector<24xf32>
    %4 = vector.shape_cast %3 : vector<24xf32> to vector<24x1xf32>
    %cst_5 = arith.constant 3.200000e+01 : f32
    %5 = vector.broadcast %cst_5 : f32 to vector<24x1xf32>
    %6 = arith.divf %4, %5 : vector<24x1xf32>
    %7 = vector.broadcast %6 : vector<24x1xf32> to vector<24x32xf32>
    %8 = arith.subf %0, %7 : vector<24x32xf32>
    %9 = arith.mulf %8, %8 : vector<24x32xf32>
    %cst_6 = arith.constant dense<0.000000e+00> : vector<24xf32>
    %10 = vector.multi_reduction <add>, %9, %cst_6 [1] : vector<24x32xf32> to vector<24xf32>
    %11 = vector.shape_cast %10 : vector<24xf32> to vector<24x1xf32>
    %cst_7 = arith.constant 3.200000e+01 : f32
    %12 = vector.broadcast %cst_7 : f32 to vector<24x1xf32>
    %13 = arith.divf %11, %12 : vector<24x1xf32>
    %cst_8 = arith.constant 9.99999974E-6 : f32
    %14 = vector.broadcast %cst_8 : f32 to vector<24x1xf32>
    %15 = arith.addf %13, %14 : vector<24x1xf32>
    %16 = math.rsqrt %15 : vector<24x1xf32>
    %17 = vector.broadcast %16 : vector<24x1xf32> to vector<24x32xf32>
    %18 = arith.mulf %8, %17 : vector<24x32xf32>
    %19 = vector.broadcast %1 : vector<1x32xf32> to vector<24x32xf32>
    %20 = arith.mulf %18, %19 : vector<24x32xf32>
    %21 = vector.broadcast %2 : vector<1x32xf32> to vector<24x32xf32>
    %22 = arith.addf %20, %21 : vector<24x32xf32>
    %c0_9 = arith.constant 0 : index
    %c0_10 = arith.constant 0 : index
    %23 = vector.load %arg4[%c0_9, %c0_10] : memref<32x96xbf16, #tpu.memory_space<vmem>>, vector<32x96xbf16>
    %24 = arith.truncf %22 : vector<24x32xf32> to vector<24x32xbf16>
    %cst_11 = arith.constant dense<0.000000e+00> : vector<24x96xf32>
    %25 = tpu.matmul %24, %23, %cst_11 {dimension_numbers = #tpu.dot_dimension_numbers<[1], [0], [0], [1], [0, 0, 1, 1], [], []>} : vector<24x32xbf16>, vector<32x96xbf16>, vector<24x96xf32> -> vector<24x96xf32>
    %c0_12 = arith.constant 0 : index
    %c0_13 = arith.constant 0 : index
    %26 = vector.load %arg5[%c0_12, %c0_13] : memref<1x96xf32, #tpu.memory_space<vmem>>, vector<1x96xf32>
    %27 = vector.broadcast %26 : vector<1x96xf32> to vector<24x96xf32>
    %28 = arith.addf %25, %27 : vector<24x96xf32>
    %29 = tpu.iota {dimensions = array<i32: 0>} : vector<24x24xi32>
    %30 = tpu.iota {dimensions = array<i32: 1>} : vector<24x24xi32>
    %31 = arith.cmpi sge, %29, %30 : vector<24x24xi32>
    %32 = vector.extract_strided_slice %28 {offsets = [0, 0], sizes = [24, 8], strides = [1, 1]} : vector<24x96xf32> to vector<24x8xf32>
    %33 = vector.extract_strided_slice %28 {offsets = [0, 32], sizes = [24, 8], strides = [1, 1]} : vector<24x96xf32> to vector<24x8xf32>
    %34 = vector.extract_strided_slice %28 {offsets = [0, 64], sizes = [24, 8], strides = [1, 1]} : vector<24x96xf32> to vector<24x8xf32>
    %35 = arith.truncf %32 : vector<24x8xf32> to vector<24x8xbf16>
    %36 = arith.truncf %33 : vector<24x8xf32> to vector<24x8xbf16>
    %cst_14 = arith.constant dense<0.000000e+00> : vector<24x24xf32>
    %37 = tpu.matmul %35, %36, %cst_14 {dimension_numbers = #tpu.dot_dimension_numbers<[1], [1], [0], [0], [0, 0, 1, 0], [], []>} : vector<24x8xbf16>, vector<24x8xbf16>, vector<24x24xf32> -> vector<24x24xf32>
    %cst_15 = arith.constant 0.353553385 : f32
    %38 = vector.broadcast %cst_15 : f32 to vector<24x24xf32>
    %39 = arith.mulf %37, %38 : vector<24x24xf32>
    %cst_16 = arith.constant -1.000000e+30 : f32
    %40 = vector.broadcast %cst_16 : f32 to vector<24x24xf32>
    %41 = arith.select %31, %39, %40 : vector<24x24xi1>, vector<24x24xf32>
    %cst_17 = arith.constant dense<0xFF800000> : vector<24xf32>
    %42 = vector.multi_reduction <maximumf>, %41, %cst_17 [1] : vector<24x24xf32> to vector<24xf32>
    %43 = vector.shape_cast %42 : vector<24xf32> to vector<24x1xf32>
    %44 = vector.broadcast %43 : vector<24x1xf32> to vector<24x24xf32>
    %45 = arith.subf %41, %44 : vector<24x24xf32>
    %46 = math.exp %45 : vector<24x24xf32>
    %cst_18 = arith.constant dense<0.000000e+00> : vector<24xf32>
    %47 = vector.multi_reduction <add>, %46, %cst_18 [1] : vector<24x24xf32> to vector<24xf32>
    %48 = vector.shape_cast %47 : vector<24xf32> to vector<24x1xf32>
    %49 = tpu.reciprocal %48 {approx = true} : vector<24x1xf32> -> vector<24x1xf32>
    %50 = vector.broadcast %49 : vector<24x1xf32> to vector<24x24xf32>
    %51 = arith.mulf %46, %50 : vector<24x24xf32>
    %c0_19 = arith.constant 0 : index
    %c0_20 = arith.constant 0 : index
    %c0_21 = arith.constant 0 : index
    %c0_22 = arith.constant 0 : index
    %52 = vector.load %arg15[%c0_19, %c0_20, %c0_21, %c0_22] : memref<1x4x24x24xf32, #tpu.memory_space<vmem>>, vector<1x1x24x24xf32>
    %53 = vector.shape_cast %52 : vector<1x1x24x24xf32> to vector<24x24xf32>
    %54 = vector.shape_cast %51 : vector<24x24xf32> to vector<1x1x24x24xf32>
    tpu.vector_store %arg15[%c0_19, %c0_20, %c0_21, %c0_22], %54 {strides = array<i32>} : memref<1x4x24x24xf32, #tpu.memory_space<vmem>>, vector<1x1x24x24xf32>,
    %55 = arith.truncf %51 : vector<24x24xf32> to vector<24x24xbf16>
    %56 = arith.truncf %34 : vector<24x8xf32> to vector<24x8xbf16>
    %cst_23 = arith.constant dense<0.000000e+00> : vector<24x8xf32>
    %57 = tpu.matmul %55, %56, %cst_23 {dimension_numbers = #tpu.dot_dimension_numbers<[1], [0], [0], [1], [0, 0, 1, 1], [], []>} : vector<24x24xbf16>, vector<24x8xbf16>, vector<24x8xf32> -> vector<24x8xf32>
    %58 = vector.extract_strided_slice %28 {offsets = [0, 8], sizes = [24, 8], strides = [1, 1]} : vector<24x96xf32> to vector<24x8xf32>
    %59 = vector.extract_strided_slice %28 {offsets = [0, 40], sizes = [24, 8], strides = [1, 1]} : vector<24x96xf32> to vector<24x8xf32>
    %60 = vector.extract_strided_slice %28 {offsets = [0, 72], sizes = [24, 8], strides = [1, 1]} : vector<24x96xf32> to vector<24x8xf32>
    %61 = arith.truncf %58 : vector<24x8xf32> to vector<24x8xbf16>
    %62 = arith.truncf %59 : vector<24x8xf32> to vector<24x8xbf16>
    %cst_24 = arith.constant dense<0.000000e+00> : vector<24x24xf32>
    %63 = tpu.matmul %61, %62, %cst_24 {dimension_numbers = #tpu.dot_dimension_numbers<[1], [1], [0], [0], [0, 0, 1, 0], [], []>} : vector<24x8xbf16>, vector<24x8xbf16>, vector<24x24xf32> -> vector<24x24xf32>
    %cst_25 = arith.constant 0.353553385 : f32
    %64 = vector.broadcast %cst_25 : f32 to vector<24x24xf32>
    %65 = arith.mulf %63, %64 : vector<24x24xf32>
    %cst_26 = arith.constant -1.000000e+30 : f32
    %66 = vector.broadcast %cst_26 : f32 to vector<24x24xf32>
    %67 = arith.select %31, %65, %66 : vector<24x24xi1>, vector<24x24xf32>
    %cst_27 = arith.constant dense<0xFF800000> : vector<24xf32>
    %68 = vector.multi_reduction <maximumf>, %67, %cst_27 [1] : vector<24x24xf32> to vector<24xf32>
    %69 = vector.shape_cast %68 : vector<24xf32> to vector<24x1xf32>
    %70 = vector.broadcast %69 : vector<24x1xf32> to vector<24x24xf32>
    %71 = arith.subf %67, %70 : vector<24x24xf32>
    %72 = math.exp %71 : vector<24x24xf32>
    %cst_28 = arith.constant dense<0.000000e+00> : vector<24xf32>
    %73 = vector.multi_reduction <add>, %72, %cst_28 [1] : vector<24x24xf32> to vector<24xf32>
    %74 = vector.shape_cast %73 : vector<24xf32> to vector<24x1xf32>
    %75 = tpu.reciprocal %74 {approx = true} : vector<24x1xf32> -> vector<24x1xf32>
    %76 = vector.broadcast %75 : vector<24x1xf32> to vector<24x24xf32>
    %77 = arith.mulf %72, %76 : vector<24x24xf32>
    %c0_29 = arith.constant 0 : index
    %c1 = arith.constant 1 : index
    %c0_30 = arith.constant 0 : index
    %c0_31 = arith.constant 0 : index
    %78 = vector.load %arg15[%c0_29, %c1, %c0_30, %c0_31] : memref<1x4x24x24xf32, #tpu.memory_space<vmem>>, vector<1x1x24x24xf32>
    %79 = vector.shape_cast %78 : vector<1x1x24x24xf32> to vector<24x24xf32>
    %80 = vector.shape_cast %77 : vector<24x24xf32> to vector<1x1x24x24xf32>
    tpu.vector_store %arg15[%c0_29, %c1, %c0_30, %c0_31], %80 {strides = array<i32>} : memref<1x4x24x24xf32, #tpu.memory_space<vmem>>, vector<1x1x24x24xf32>,
    %81 = arith.truncf %77 : vector<24x24xf32> to vector<24x24xbf16>
    %82 = arith.truncf %60 : vector<24x8xf32> to vector<24x8xbf16>
    %cst_32 = arith.constant dense<0.000000e+00> : vector<24x8xf32>
    %83 = tpu.matmul %81, %82, %cst_32 {dimension_numbers = #tpu.dot_dimension_numbers<[1], [0], [0], [1], [0, 0, 1, 1], [], []>} : vector<24x24xbf16>, vector<24x8xbf16>, vector<24x8xf32> -> vector<24x8xf32>
    %84 = vector.extract_strided_slice %28 {offsets = [0, 16], sizes = [24, 8], strides = [1, 1]} : vector<24x96xf32> to vector<24x8xf32>
    %85 = vector.extract_strided_slice %28 {offsets = [0, 48], sizes = [24, 8], strides = [1, 1]} : vector<24x96xf32> to vector<24x8xf32>
    %86 = vector.extract_strided_slice %28 {offsets = [0, 80], sizes = [24, 8], strides = [1, 1]} : vector<24x96xf32> to vector<24x8xf32>
    %87 = arith.truncf %84 : vector<24x8xf32> to vector<24x8xbf16>
    %88 = arith.truncf %85 : vector<24x8xf32> to vector<24x8xbf16>
    %cst_33 = arith.constant dense<0.000000e+00> : vector<24x24xf32>
    %89 = tpu.matmul %87, %88, %cst_33 {dimension_numbers = #tpu.dot_dimension_numbers<[1], [1], [0], [0], [0, 0, 1, 0], [], []>} : vector<24x8xbf16>, vector<24x8xbf16>, vector<24x24xf32> -> vector<24x24xf32>
    %cst_34 = arith.constant 0.353553385 : f32
    %90 = vector.broadcast %cst_34 : f32 to vector<24x24xf32>
    %91 = arith.mulf %89, %90 : vector<24x24xf32>
    %cst_35 = arith.constant -1.000000e+30 : f32
    %92 = vector.broadcast %cst_35 : f32 to vector<24x24xf32>
    %93 = arith.select %31, %91, %92 : vector<24x24xi1>, vector<24x24xf32>
    %cst_36 = arith.constant dense<0xFF800000> : vector<24xf32>
    %94 = vector.multi_reduction <maximumf>, %93, %cst_36 [1] : vector<24x24xf32> to vector<24xf32>
    %95 = vector.shape_cast %94 : vector<24xf32> to vector<24x1xf32>
    %96 = vector.broadcast %95 : vector<24x1xf32> to vector<24x24xf32>
    %97 = arith.subf %93, %96 : vector<24x24xf32>
    %98 = math.exp %97 : vector<24x24xf32>
    %cst_37 = arith.constant dense<0.000000e+00> : vector<24xf32>
    %99 = vector.multi_reduction <add>, %98, %cst_37 [1] : vector<24x24xf32> to vector<24xf32>
    %100 = vector.shape_cast %99 : vector<24xf32> to vector<24x1xf32>
    %101 = tpu.reciprocal %100 {approx = true} : vector<24x1xf32> -> vector<24x1xf32>
    %102 = vector.broadcast %101 : vector<24x1xf32> to vector<24x24xf32>
    %103 = arith.mulf %98, %102 : vector<24x24xf32>
    %c0_38 = arith.constant 0 : index
    %c2 = arith.constant 2 : index
    %c0_39 = arith.constant 0 : index
    %c0_40 = arith.constant 0 : index
    %104 = vector.load %arg15[%c0_38, %c2, %c0_39, %c0_40] : memref<1x4x24x24xf32, #tpu.memory_space<vmem>>, vector<1x1x24x24xf32>
    %105 = vector.shape_cast %104 : vector<1x1x24x24xf32> to vector<24x24xf32>
    %106 = vector.shape_cast %103 : vector<24x24xf32> to vector<1x1x24x24xf32>
    tpu.vector_store %arg15[%c0_38, %c2, %c0_39, %c0_40], %106 {strides = array<i32>} : memref<1x4x24x24xf32, #tpu.memory_space<vmem>>, vector<1x1x24x24xf32>,
    %107 = arith.truncf %103 : vector<24x24xf32> to vector<24x24xbf16>
    %108 = arith.truncf %86 : vector<24x8xf32> to vector<24x8xbf16>
    %cst_41 = arith.constant dense<0.000000e+00> : vector<24x8xf32>
    %109 = tpu.matmul %107, %108, %cst_41 {dimension_numbers = #tpu.dot_dimension_numbers<[1], [0], [0], [1], [0, 0, 1, 1], [], []>} : vector<24x24xbf16>, vector<24x8xbf16>, vector<24x8xf32> -> vector<24x8xf32>
    %110 = vector.extract_strided_slice %28 {offsets = [0, 24], sizes = [24, 8], strides = [1, 1]} : vector<24x96xf32> to vector<24x8xf32>
    %111 = vector.extract_strided_slice %28 {offsets = [0, 56], sizes = [24, 8], strides = [1, 1]} : vector<24x96xf32> to vector<24x8xf32>
    %112 = vector.extract_strided_slice %28 {offsets = [0, 88], sizes = [24, 8], strides = [1, 1]} : vector<24x96xf32> to vector<24x8xf32>
    %113 = arith.truncf %110 : vector<24x8xf32> to vector<24x8xbf16>
    %114 = arith.truncf %111 : vector<24x8xf32> to vector<24x8xbf16>
    %cst_42 = arith.constant dense<0.000000e+00> : vector<24x24xf32>
    %115 = tpu.matmul %113, %114, %cst_42 {dimension_numbers = #tpu.dot_dimension_numbers<[1], [1], [0], [0], [0, 0, 1, 0], [], []>} : vector<24x8xbf16>, vector<24x8xbf16>, vector<24x24xf32> -> vector<24x24xf32>
    %cst_43 = arith.constant 0.353553385 : f32
    %116 = vector.broadcast %cst_43 : f32 to vector<24x24xf32>
    %117 = arith.mulf %115, %116 : vector<24x24xf32>
    %cst_44 = arith.constant -1.000000e+30 : f32
    %118 = vector.broadcast %cst_44 : f32 to vector<24x24xf32>
    %119 = arith.select %31, %117, %118 : vector<24x24xi1>, vector<24x24xf32>
    %cst_45 = arith.constant dense<0xFF800000> : vector<24xf32>
    %120 = vector.multi_reduction <maximumf>, %119, %cst_45 [1] : vector<24x24xf32> to vector<24xf32>
    %121 = vector.shape_cast %120 : vector<24xf32> to vector<24x1xf32>
    %122 = vector.broadcast %121 : vector<24x1xf32> to vector<24x24xf32>
    %123 = arith.subf %119, %122 : vector<24x24xf32>
    %124 = math.exp %123 : vector<24x24xf32>
    %cst_46 = arith.constant dense<0.000000e+00> : vector<24xf32>
    %125 = vector.multi_reduction <add>, %124, %cst_46 [1] : vector<24x24xf32> to vector<24xf32>
    %126 = vector.shape_cast %125 : vector<24xf32> to vector<24x1xf32>
    %127 = tpu.reciprocal %126 {approx = true} : vector<24x1xf32> -> vector<24x1xf32>
    %128 = vector.broadcast %127 : vector<24x1xf32> to vector<24x24xf32>
    %129 = arith.mulf %124, %128 : vector<24x24xf32>
    %c0_47 = arith.constant 0 : index
    %c3 = arith.constant 3 : index
    %c0_48 = arith.constant 0 : index
    %c0_49 = arith.constant 0 : index
    %130 = vector.load %arg15[%c0_47, %c3, %c0_48, %c0_49] : memref<1x4x24x24xf32, #tpu.memory_space<vmem>>, vector<1x1x24x24xf32>
    %131 = vector.shape_cast %130 : vector<1x1x24x24xf32> to vector<24x24xf32>
    %132 = vector.shape_cast %129 : vector<24x24xf32> to vector<1x1x24x24xf32>
    tpu.vector_store %arg15[%c0_47, %c3, %c0_48, %c0_49], %132 {strides = array<i32>} : memref<1x4x24x24xf32, #tpu.memory_space<vmem>>, vector<1x1x24x24xf32>,
    %133 = arith.truncf %129 : vector<24x24xf32> to vector<24x24xbf16>
    %134 = arith.truncf %112 : vector<24x8xf32> to vector<24x8xbf16>
    %cst_50 = arith.constant dense<0.000000e+00> : vector<24x8xf32>
    %135 = tpu.matmul %133, %134, %cst_50 {dimension_numbers = #tpu.dot_dimension_numbers<[1], [0], [0], [1], [0, 0, 1, 1], [], []>} : vector<24x24xbf16>, vector<24x8xbf16>, vector<24x8xf32> -> vector<24x8xf32>
    %136 = tpu.concatenate %57, %83, %109, %135 in 1 : vector<24x8xf32>, vector<24x8xf32>, vector<24x8xf32>, vector<24x8xf32> -> vector<24x32xf32>
    %c0_51 = arith.constant 0 : index
    %c0_52 = arith.constant 0 : index
    %137 = vector.load %arg6[%c0_51, %c0_52] : memref<32x32xbf16, #tpu.memory_space<vmem>>, vector<32x32xbf16>
    %138 = arith.truncf %136 : vector<24x32xf32> to vector<24x32xbf16>
    %cst_53 = arith.constant dense<0.000000e+00> : vector<24x32xf32>
    %139 = tpu.matmul %138, %137, %cst_53 {dimension_numbers = #tpu.dot_dimension_numbers<[1], [0], [0], [1], [0, 0, 1, 1], [], []>} : vector<24x32xbf16>, vector<32x32xbf16>, vector<24x32xf32> -> vector<24x32xf32>
    %140 = arith.addf %0, %139 : vector<24x32xf32>
    %c0_54 = arith.constant 0 : index
    %c0_55 = arith.constant 0 : index
    %141 = vector.load %arg7[%c0_54, %c0_55] : memref<1x32xf32, #tpu.memory_space<vmem>>, vector<1x32xf32>
    %142 = vector.broadcast %141 : vector<1x32xf32> to vector<24x32xf32>
    %143 = arith.addf %140, %142 : vector<24x32xf32>
    %c0_56 = arith.constant 0 : index
    %c0_57 = arith.constant 0 : index
    %144 = vector.load %arg8[%c0_56, %c0_57] : memref<1x32xf32, #tpu.memory_space<vmem>>, vector<1x32xf32>
    %c0_58 = arith.constant 0 : index
    %c0_59 = arith.constant 0 : index
    %145 = vector.load %arg9[%c0_58, %c0_59] : memref<1x32xf32, #tpu.memory_space<vmem>>, vector<1x32xf32>
    %cst_60 = arith.constant dense<0.000000e+00> : vector<24xf32>
    %146 = vector.multi_reduction <add>, %143, %cst_60 [1] : vector<24x32xf32> to vector<24xf32>
    %147 = vector.shape_cast %146 : vector<24xf32> to vector<24x1xf32>
    %cst_61 = arith.constant 3.200000e+01 : f32
    %148 = vector.broadcast %cst_61 : f32 to vector<24x1xf32>
    %149 = arith.divf %147, %148 : vector<24x1xf32>
    %150 = vector.broadcast %149 : vector<24x1xf32> to vector<24x32xf32>
    %151 = arith.subf %143, %150 : vector<24x32xf32>
    %152 = arith.mulf %151, %151 : vector<24x32xf32>
    %cst_62 = arith.constant dense<0.000000e+00> : vector<24xf32>
    %153 = vector.multi_reduction <add>, %152, %cst_62 [1] : vector<24x32xf32> to vector<24xf32>
    %154 = vector.shape_cast %153 : vector<24xf32> to vector<24x1xf32>
    %cst_63 = arith.constant 3.200000e+01 : f32
    %155 = vector.broadcast %cst_63 : f32 to vector<24x1xf32>
    %156 = arith.divf %154, %155 : vector<24x1xf32>
    %cst_64 = arith.constant 9.99999974E-6 : f32
    %157 = vector.broadcast %cst_64 : f32 to vector<24x1xf32>
    %158 = arith.addf %156, %157 : vector<24x1xf32>
    %159 = math.rsqrt %158 : vector<24x1xf32>
    %160 = vector.broadcast %159 : vector<24x1xf32> to vector<24x32xf32>
    %161 = arith.mulf %151, %160 : vector<24x32xf32>
    %162 = vector.broadcast %144 : vector<1x32xf32> to vector<24x32xf32>
    %163 = arith.mulf %161, %162 : vector<24x32xf32>
    %164 = vector.broadcast %145 : vector<1x32xf32> to vector<24x32xf32>
    %165 = arith.addf %163, %164 : vector<24x32xf32>
    %c0_65 = arith.constant 0 : index
    %c0_66 = arith.constant 0 : index
    %166 = vector.load %arg10[%c0_65, %c0_66] : memref<32x128xbf16, #tpu.memory_space<vmem>>, vector<32x128xbf16>
    %167 = arith.truncf %165 : vector<24x32xf32> to vector<24x32xbf16>
    %cst_67 = arith.constant dense<0.000000e+00> : vector<24x128xf32>
    %168 = tpu.matmul %167, %166, %cst_67 {dimension_numbers = #tpu.dot_dimension_numbers<[1], [0], [0], [1], [0, 0, 1, 1], [], []>} : vector<24x32xbf16>, vector<32x128xbf16>, vector<24x128xf32> -> vector<24x128xf32>
    %c0_68 = arith.constant 0 : index
    %c0_69 = arith.constant 0 : index
    %169 = vector.load %arg11[%c0_68, %c0_69] : memref<1x128xf32, #tpu.memory_space<vmem>>, vector<1x128xf32>
    %170 = vector.broadcast %169 : vector<1x128xf32> to vector<24x128xf32>
    %171 = arith.addf %168, %170 : vector<24x128xf32>
    %cst_70 = arith.constant 5.000000e-01 : f32
    %172 = vector.broadcast %cst_70 : f32 to vector<24x128xf32>
    %173 = arith.mulf %172, %171 : vector<24x128xf32>
    %cst_71 = arith.constant 4.471500e-02 : f32
    %174 = vector.broadcast %cst_71 : f32 to vector<24x128xf32>
    %175 = arith.mulf %174, %171 : vector<24x128xf32>
    %176 = arith.mulf %175, %171 : vector<24x128xf32>
    %177 = arith.mulf %176, %171 : vector<24x128xf32>
    %178 = arith.addf %171, %177 : vector<24x128xf32>
    %cst_72 = arith.constant 0.797884583 : f32
    %179 = vector.broadcast %cst_72 : f32 to vector<24x128xf32>
    %180 = arith.mulf %179, %178 : vector<24x128xf32>
    %181 = math.tanh %180 : vector<24x128xf32>
    %cst_73 = arith.constant 1.000000e+00 : f32
    %182 = vector.broadcast %cst_73 : f32 to vector<24x128xf32>
    %183 = arith.addf %182, %181 : vector<24x128xf32>
    %184 = arith.mulf %173, %183 : vector<24x128xf32>
    %c0_74 = arith.constant 0 : index
    %c0_75 = arith.constant 0 : index
    %185 = vector.load %arg12[%c0_74, %c0_75] : memref<128x32xbf16, #tpu.memory_space<vmem>>, vector<128x32xbf16>
    %186 = arith.truncf %184 : vector<24x128xf32> to vector<24x128xbf16>
    %cst_76 = arith.constant dense<0.000000e+00> : vector<24x32xf32>
    %187 = tpu.matmul %186, %185, %cst_76 {dimension_numbers = #tpu.dot_dimension_numbers<[1], [0], [0], [1], [0, 0, 1, 1], [], []>} : vector<24x128xbf16>, vector<128x32xbf16>, vector<24x32xf32> -> vector<24x32xf32>
    %188 = arith.addf %143, %187 : vector<24x32xf32>
    %c0_77 = arith.constant 0 : index
    %c0_78 = arith.constant 0 : index
    %189 = vector.load %arg13[%c0_77, %c0_78] : memref<1x32xf32, #tpu.memory_space<vmem>>, vector<1x32xf32>
    %190 = vector.broadcast %189 : vector<1x32xf32> to vector<24x32xf32>
    %191 = arith.addf %188, %190 : vector<24x32xf32>
    %c0_79 = arith.constant 0 : index
    %c0_80 = arith.constant 0 : index
    %192 = vector.load %arg14[%c0_79, %c0_80] : memref<24x32xf32, #tpu.memory_space<vmem>>, vector<24x32xf32>
    tpu.vector_store %arg14[%c0_79, %c0_80], %191 {strides = array<i32>} : memref<24x32xf32, #tpu.memory_space<vmem>>, vector<24x32xf32>,
    return
  }
  func.func @transform_0(%arg0: i32) -> (i32, i32) {
    %c0_i32 = arith.constant 0 : i32
    %c0_i32_0 = arith.constant 0 : i32
    return %arg0, %c0_i32 : i32, i32
  }
  func.func @transform_1(%arg0: i32) -> (i32, i32) {
    %c0_i32 = arith.constant 0 : i32
    %c0_i32_0 = arith.constant 0 : i32
    %c0_i32_1 = arith.constant 0 : i32
    return %c0_i32, %c0_i32_0 : i32, i32
  }
  func.func @transform_2(%arg0: i32) -> (i32, i32) {
    %c0_i32 = arith.constant 0 : i32
    %c0_i32_0 = arith.constant 0 : i32
    %c0_i32_1 = arith.constant 0 : i32
    return %c0_i32, %c0_i32_0 : i32, i32
  }
  func.func @transform_3(%arg0: i32) -> (i32, i32) {
    %c0_i32 = arith.constant 0 : i32
    %c0_i32_0 = arith.constant 0 : i32
    %c0_i32_1 = arith.constant 0 : i32
    return %c0_i32, %c0_i32_0 : i32, i32
  }
  func.func @transform_4(%arg0: i32) -> (i32, i32) {
    %c0_i32 = arith.constant 0 : i32
    %c0_i32_0 = arith.constant 0 : i32
    %c0_i32_1 = arith.constant 0 : i32
    return %c0_i32, %c0_i32_0 : i32, i32
  }
  func.func @transform_5(%arg0: i32) -> (i32, i32) {
    %c0_i32 = arith.constant 0 : i32
    %c0_i32_0 = arith.constant 0 : i32
    %c0_i32_1 = arith.constant 0 : i32
    return %c0_i32, %c0_i32_0 : i32, i32
  }
  func.func @transform_6(%arg0: i32) -> (i32, i32) {
    %c0_i32 = arith.constant 0 : i32
    %c0_i32_0 = arith.constant 0 : i32
    %c0_i32_1 = arith.constant 0 : i32
    return %c0_i32, %c0_i32_0 : i32, i32
  }
  func.func @transform_7(%arg0: i32) -> (i32, i32) {
    %c0_i32 = arith.constant 0 : i32
    %c0_i32_0 = arith.constant 0 : i32
    %c0_i32_1 = arith.constant 0 : i32
    return %c0_i32, %c0_i32_0 : i32, i32
  }
  func.func @transform_8(%arg0: i32) -> (i32, i32) {
    %c0_i32 = arith.constant 0 : i32
    %c0_i32_0 = arith.constant 0 : i32
    %c0_i32_1 = arith.constant 0 : i32
    return %c0_i32, %c0_i32_0 : i32, i32
  }
  func.func @transform_9(%arg0: i32) -> (i32, i32) {
    %c0_i32 = arith.constant 0 : i32
    %c0_i32_0 = arith.constant 0 : i32
    %c0_i32_1 = arith.constant 0 : i32
    return %c0_i32, %c0_i32_0 : i32, i32
  }
  func.func @transform_10(%arg0: i32) -> (i32, i32) {
    %c0_i32 = arith.constant 0 : i32
    %c0_i32_0 = arith.constant 0 : i32
    %c0_i32_1 = arith.constant 0 : i32
    return %c0_i32, %c0_i32_0 : i32, i32
  }
  func.func @transform_11(%arg0: i32) -> (i32, i32) {
    %c0_i32 = arith.constant 0 : i32
    %c0_i32_0 = arith.constant 0 : i32
    %c0_i32_1 = arith.constant 0 : i32
    return %c0_i32, %c0_i32_0 : i32, i32
  }
  func.func @transform_12(%arg0: i32) -> (i32, i32) {
    %c0_i32 = arith.constant 0 : i32
    %c0_i32_0 = arith.constant 0 : i32
    %c0_i32_1 = arith.constant 0 : i32
    return %c0_i32, %c0_i32_0 : i32, i32
  }
  func.func @transform_13(%arg0: i32) -> (i32, i32) {
    %c0_i32 = arith.constant 0 : i32
    %c0_i32_0 = arith.constant 0 : i32
    return %arg0, %c0_i32 : i32, i32
  }
  func.func @transform_14(%arg0: i32) -> (i32, i32, i32, i32) {
    %c0_i32 = arith.constant 0 : i32
    %c0_i32_0 = arith.constant 0 : i32
    %c0_i32_1 = arith.constant 0 : i32
    %c0_i32_2 = arith.constant 0 : i32
    return %arg0, %c0_i32, %c0_i32_0, %c0_i32_1 : i32, i32, i32, i32
  }
}

</mosaic_0001>

<llo_original>
// kernel: _lambda_.5
$region0: #{_lambda_.5}
  #allocation0 [shape = 'u32[]', space=smem, size = 0x4, offset = 0x4, fixed_abs, tag = 'smem constant byte address 0x4 - core index']
  #allocation1 [shape = 'u32[144,128]{1,0:T(1,128)}', space=vmem, size = 0x12000, scoped, tag = 'internal scratch']
  %s0 = inlined_call_operand.vmem [shape: f32[32,48], index: 0, kind: input, shape index: {}]
  %s1 = inlined_call_operand.vmem [shape: bf16[48,64], index: 1, kind: input, shape index: {}]
  %s2 = inlined_call_operand.vmem [shape: f32[1,64], index: 2, kind: input, shape index: {}]
  %s3 = inlined_call_operand.vmem [shape: f32[16,64], index: 3, kind: input, shape index: {}]
  %s4 = inlined_call_operand.vmem [shape: f32[1,64], index: 4, kind: input, shape index: {}]
  %s5 = inlined_call_operand.vmem [shape: f32[1,64], index: 5, kind: input, shape index: {}]
  %s6 = inlined_call_operand.vmem [shape: f32[32,64], index: 6, kind: output, shape index: {}]
  %s7 = sld [smem:[#allocation0]]
  $region57: #{_lambda_.5} parent=0
    _
  %s9 = ssub.s32 1, %s7
  %s10 = scalar_select 0, %s9, %s7
  loop: start=0, step=1, limit=4
  $region2: #{_lambda_.5} parent=0 // loop_pre_header
    _
  $region3: #{_lambda_.5} parent=0 // loop_header
    %s12 = sphi 0, %s16
    %p13 = scmp.ge.s32.totalorder %s12, 4
    %s22 = sphi 0, %s24
    %s25 = sphi 0, %s22
    %s26 = sphi 0, %s25
    %s42 = sphi 0, %s26
    %s46 = sphi 0, %s46
    %s48 = sphi 0, %s46
    %s49 = sphi 0, %s48
    %s63 = sphi 0, %s49
    %s67 = sphi 0, %s67
    %s69 = sphi 0, %s67
    %s70 = sphi 0, %s69
    %s84 = sphi 0, %s70
    %s88 = sphi 0, %s88
    %s90 = sphi 0, %s88
    %s91 = sphi 0, %s90
    %s105 = sphi 0, %s91
    %s109 = sphi 0, %s109
    %s111 = sphi 0, %s109
    %s112 = sphi 0, %s111
    %s126 = sphi 0, %s112
    %s130 = sphi 0, %s130
    %s132 = sphi 0, %s130
    %s133 = sphi 0, %s132
    %s147 = sphi 0, %s133
    %s153 = sphi 0, %s155
    %s156 = sphi 0, %s153
    %s157 = sphi 0, %s156
    %s173 = sphi 0, %s157
  $region4: #{_lambda_.5} parent=0 // loop_header_branch
    %15 = sbr.rel (%p13) target = $region8
  $region5: #{_lambda_.5} parent=0 // loop_body
    %s17 = ssub.s32 %s12, 1
    %s18 = ssub.s32 %s12, 2
    %s19 = sadd.s32 %s12, 1
    %s20 = ssub.s32 %s12, %s19
    %p21 = scmp.eq.s32.totalorder %s20, 0
    %s23 = sadd.s32 %s22, 1
    %s24 = scalar_select %p21, %s22, %s23
    %p27 = pneg %p21
    %p28 = scmp.eq.s32.totalorder %s12, 1
    %p29 = por %p27, %p28
    %p30 = scmp.ne.s32.totalorder %s22, %s25
    %p31 = scmp.eq.s32.totalorder %s12, 0
    %p32 = por %p30, %p31
    %p33 = scmp.ne.s32.totalorder %s22, %s25
    %p34 = scmp.eq.s32.totalorder %s17, 1
    %p35 = por %p33, %p34
    %p36 = scmp.ne.s32.totalorder %s25, %s26
    %p37 = scmp.eq.s32.totalorder %s17, 0
    %p38 = por %p36, %p37
    %p39 = scmp.ne.s32.totalorder %s25, %s26
    %p40 = scmp.eq.s32.totalorder %s18, 1
    %p41 = por %p39, %p40
    %p43 = scmp.ne.s32.totalorder %s26, %s42
    %p44 = scmp.eq.s32.totalorder %s18, 0
    %p45 = por %p43, %p44
    %s47 = sadd.s32 %s46, 1
    %p50 = scmp.eq.s32.totalorder %s12, 1
    %p51 = scmp.ne.s32.totalorder %s46, %s48
    %p52 = scmp.eq.s32.totalorder %s12, 0
    %p53 = por %p51, %p52
    %p54 = scmp.ne.s32.totalorder %s46, %s48
    %p55 = scmp.eq.s32.totalorder %s17, 1
    %p56 = por %p54, %p55
    %p57 = scmp.ne.s32.totalorder %s48, %s49
    %p58 = scmp.eq.s32.totalorder %s17, 0
    %p59 = por %p57, %p58
    %p60 = scmp.ne.s32.totalorder %s48, %s49
    %p61 = scmp.eq.s32.totalorder %s18, 1
    %p62 = por %p60, %p61
    %p64 = scmp.ne.s32.totalorder %s49, %s63
    %p65 = scmp.eq.s32.totalorder %s18, 0
    %p66 = por %p64, %p65
    %s68 = sadd.s32 %s67, 1
    %p71 = scmp.eq.s32.totalorder %s12, 1
    %p72 = scmp.ne.s32.totalorder %s67, %s69
    %p73 = scmp.eq.s32.totalorder %s12, 0
    %p74 = por %p72, %p73
    %p75 = scmp.ne.s32.totalorder %s67, %s69
    %p76 = scmp.eq.s32.totalorder %s17, 1
    %p77 = por %p75, %p76
    %p78 = scmp.ne.s32.totalorder %s69, %s70
    %p79 = scmp.eq.s32.totalorder %s17, 0
    %p80 = por %p78, %p79
    %p81 = scmp.ne.s32.totalorder %s69, %s70
    %p82 = scmp.eq.s32.totalorder %s18, 1
    %p83 = por %p81, %p82
    %p85 = scmp.ne.s32.totalorder %s70, %s84
    %p86 = scmp.eq.s32.totalorder %s18, 0
    %p87 = por %p85, %p86
    %s89 = sadd.s32 %s88, 1
    %p92 = scmp.eq.s32.totalorder %s12, 1
    %p93 = scmp.ne.s32.totalorder %s88, %s90
    %p94 = scmp.eq.s32.totalorder %s12, 0
    %p95 = por %p93, %p94
    %p96 = scmp.ne.s32.totalorder %s88, %s90
    %p97 = scmp.eq.s32.totalorder %s17, 1
    %p98 = por %p96, %p97
    %p99 = scmp.ne.s32.totalorder %s90, %s91
    %p100 = scmp.eq.s32.totalorder %s17, 0
    %p101 = por %p99, %p100
    %p102 = scmp.ne.s32.totalorder %s90, %s91
    %p103 = scmp.eq.s32.totalorder %s18, 1
    %p104 = por %p102, %p103
    %p106 = scmp.ne.s32.totalorder %s91, %s105
    %p107 = scmp.eq.s32.totalorder %s18, 0
    %p108 = por %p106, %p107
    %s110 = sadd.s32 %s109, 1
    %p113 = scmp.eq.s32.totalorder %s12, 1
    %p114 = scmp.ne.s32.totalorder %s109, %s111
    %p115 = scmp.eq.s32.totalorder %s12, 0
    %p116 = por %p114, %p115
    %p117 = scmp.ne.s32.totalorder %s109, %s111
    %p118 = scmp.eq.s32.totalorder %s17, 1
    %p119 = por %p117, %p118
    %p120 = scmp.ne.s32.totalorder %s111, %s112
    %p121 = scmp.eq.s32.totalorder %s17, 0
    %p122 = por %p120, %p121
    %p123 = scmp.ne.s32.totalorder %s111, %s112
    %p124 = scmp.eq.s32.totalorder %s18, 1
    %p125 = por %p123, %p124
    %p127 = scmp.ne.s32.totalorder %s112, %s126
    %p128 = scmp.eq.s32.totalorder %s18, 0
    %p129 = por %p127, %p128
    %s131 = sadd.s32 %s130, 1
    %p134 = scmp.eq.s32.totalorder %s12, 1
    %p135 = scmp.ne.s32.totalorder %s130, %s132
    %p136 = scmp.eq.s32.totalorder %s12, 0
    %p137 = por %p135, %p136
    %p138 = scmp.ne.s32.totalorder %s130, %s132
    %p139 = scmp.eq.s32.totalorder %s17, 1
    %p140 = por %p138, %p139
    %p141 = scmp.ne.s32.totalorder %s132, %s133
    %p142 = scmp.eq.s32.totalorder %s17, 0
    %p143 = por %p141, %p142
    %p144 = scmp.ne.s32.totalorder %s132, %s133
    %p145 = scmp.eq.s32.totalorder %s18, 1
    %p146 = por %p144, %p145
    %p148 = scmp.ne.s32.totalorder %s133, %s147
    %p149 = scmp.eq.s32.totalorder %s18, 0
    %p150 = por %p148, %p149
    %s151 = ssub.s32 %s12, %s19
    %p152 = scmp.eq.s32.totalorder %s151, 0
    %s154 = sadd.s32 %s153, 1
    %s155 = scalar_select %p152, %s153, %s154
    %p158 = pneg %p152
    %p159 = scmp.eq.s32.totalorder %s12, 1
    %p160 = por %p158, %p159
    %p161 = scmp.ne.s32.totalorder %s153, %s156
    %p162 = scmp.eq.s32.totalorder %s12, 0
    %p163 = por %p161, %p162
    %p164 = scmp.ne.s32.totalorder %s153, %s156
    %p165 = scmp.eq.s32.totalorder %s17, 1
    %p166 = por %p164, %p165
    %p167 = scmp.ne.s32.totalorder %s156, %s157
    %p168 = scmp.eq.s32.totalorder %s17, 0
    %p169 = por %p167, %p168
    %p170 = scmp.ne.s32.totalorder %s156, %s157
    %p171 = scmp.eq.s32.totalorder %s18, 1
    %p172 = por %p170, %p171
    %p174 = scmp.ne.s32.totalorder %s157, %s173
    %p175 = scmp.eq.s32.totalorder %s18, 0
    %p176 = por %p174, %p175
    %p177 = scmp.le.s32.totalorder 1, %s12
    %p178 = scmp.lt.s32.totalorder %s12, 3
    %p179 = pnand %p177, %p178
    %p180 = pneg %p179
    // Predicated region
    $region9: #{_lambda_.5} parent=5 // pred_check
      _
    $region10: #{_lambda_.5} parent=5 // pred_check_branch
      %182 = sbr.rel (%p179) target = $region12
    $region11: #{_lambda_.5} parent=5 // pred_region
      %s183 = ssub.s32 %s12, 1
      // Predicated region
      $region13: #{_lambda_.5} parent=11 // pred_check
        %p184 = pneg %p59
      $region14: #{_lambda_.5} parent=11 // pred_check_branch
        %186 = sbr.rel (%p184) target = $region16
      $region15: #{_lambda_.5} parent=11 // pred_region
        _
      $region16: #{_lambda_.5} parent=11 // pred_fallthru
        _
      // Predicated region
      $region17: #{_lambda_.5} parent=11 // pred_check
        %p187 = pneg %p80
      $region18: #{_lambda_.5} parent=11 // pred_check_branch
        %189 = sbr.rel (%p187) target = $region20
      $region19: #{_lambda_.5} parent=11 // pred_region
        _
      $region20: #{_lambda_.5} parent=11 // pred_fallthru
        _
      // Predicated region
      $region21: #{_lambda_.5} parent=11 // pred_check
        %p190 = pneg %p101
      $region22: #{_lambda_.5} parent=11 // pred_check_branch
        %192 = sbr.rel (%p190) target = $region24
      $region23: #{_lambda_.5} parent=11 // pred_region
        _
      $region24: #{_lambda_.5} parent=11 // pred_fallthru
        _
      // Predicated region
      $region25: #{_lambda_.5} parent=11 // pred_check
        %p193 = pneg %p122
      $region26: #{_lambda_.5} parent=11 // pred_check_branch
        %195 = sbr.rel (%p193) target = $region28
      $region27: #{_lambda_.5} parent=11 // pred_region
        _
      $region28: #{_lambda_.5} parent=11 // pred_fallthru
        _
      // Predicated region
      $region29: #{_lambda_.5} parent=11 // pred_check
        %p196 = pneg %p143
      $region30: #{_lambda_.5} parent=11 // pred_check_branch
        %198 = sbr.rel (%p196) target = $region32
      $region31: #{_lambda_.5} parent=11 // pred_region
        _
      $region32: #{_lambda_.5} parent=11 // pred_fallthru
        _
    $region12: #{_lambda_.5} parent=5 // pred_fallthru
      _
    %p199 = scmp.lt.s32.totalorder %s12, 2
    // Predicated region
    $region33: #{_lambda_.5} parent=5 // pred_check
      %p200 = pneg %p199
    $region34: #{_lambda_.5} parent=5 // pred_check_branch
      %202 = sbr.rel (%p200) target = $region36
    $region35: #{_lambda_.5} parent=5 // pred_region
      // Predicated region
      $region37: #{_lambda_.5} parent=35 // pred_check
        %p203 = pneg %p32
      $region38: #{_lambda_.5} parent=35 // pred_check_branch
        %205 = sbr.rel (%p203) target = $region40
      $region39: #{_lambda_.5} parent=35 // pred_region
        %s206 = smul.u32 2, %s12
        %p207 = scmp.lt.s32.totalorder %s206, 3
        %s208 = scalar_select %p207, %s206, 3
        %s209 = smul.addr %s208, 8
        %s210 = scalar_lea.vmem %s0, %s209
        %s211 = smul.u32 2, %s12
      $region40: #{_lambda_.5} parent=35 // pred_fallthru
        _
    $region36: #{_lambda_.5} parent=5 // pred_fallthru
      _
    %p212 = scmp.le.s32.totalorder 1, %s12
    %p213 = scmp.lt.s32.totalorder %s12, 3
    %p214 = pnand %p212, %p213
    %p215 = pneg %p214
    // Predicated region
    $region41: #{_lambda_.5} parent=5 // pred_check
      _
    $region42: #{_lambda_.5} parent=5 // pred_check_branch
      %217 = sbr.rel (%p214) target = $region44
    $region43: #{_lambda_.5} parent=5 // pred_region
      %s218 = ssub.s32 %s12, 1
      %s219 = smul.u32 2, %s17
      %p220 = scmp.lt.s32.totalorder %s219, 3
      %s221 = scalar_select %p220, %s219, 3
      %s222 = smul.addr %s221, 8
      %s223 = scalar_lea.vmem %s0, %s222
      %p224 = pneg %p38
      %p225 = pneg %p35
      %p226 = pneg %p59
      %p227 = pneg %p56
      %p228 = pneg %p80
      %p229 = pneg %p77
      %p230 = pneg %p101
      %p231 = pneg %p98
      %p232 = pneg %p122
      %p233 = pneg %p119
      %p234 = pneg %p143
      %p235 = pneg %p140
      %p236 = pneg %p169
      %p237 = pneg %p166
      %s238 = smul.u32 2, %s17
      %p239 = scmp.lt.s32.totalorder %s238, 3
      %s240 = scalar_select %p239, %s238, 3
      %s241 = smul.addr %s240, 8
      %s242 = scalar_lea.vmem %s6, %s241
      %s243 = smul.u32 2, %s17
      %p244 = scmp.lt.s32.totalorder %s243, 3
      %s245 = scalar_select %p244, %s243, 3
      %s246 = smul.addr %s245, 8
      %s247 = scalar_lea.vmem %s0, %s246
      %s248 = smul.u32 2, %s17
      %s249 = smul.u32 2, %s17
      %p250 = scmp.lt.s32.totalorder %s249, 3
      %s251 = scalar_select %p250, %s249, 3
      %s252 = smul.addr %s251, 8
      %s253 = scalar_lea.vmem %s6, %s252
      %s254 = smul.u32 2, %s17
      %v256 = vld [vmem:[%s247] sm:$0xff]
      %v257 = vld [vmem:[%s247 + $0x8] sm:$0xff]
      %v258 = vld [vmem:[%s1] sm:$0xf]
      %v259 = vld [vmem:[%s1 + $0x4] sm:$0xf]
      %v260 = vld [vmem:[%s1 + $0x8] sm:$0xf]
      %v261 = vld [vmem:[%s1 + $0xc] sm:$0xf]
      %v262 = vld [vmem:[%s1 + $0x10] sm:$0xf]
      %v263 = vld [vmem:[%s1 + $0x14] sm:$0xf]
      %v264 = vpack.c.bf16 %v257, %v256
      %v265 = vld [vmem:[%s2] sm:$0x1]
      %v267 = vlaneseq
      %v268 = vshrl.u32 %v267, 7
      %v269 = vsub.s32 0, %v268
      %v270 = vrot.slane %v265, %v269
      %v278 = vunpack.c.l.b16 %v258
      %v279 = vunpack.c.l.b16 %v259
      %v280 = vunpack.c.l.b16 %v260
      %v281 = vunpack.c.l.b16 %v261
      %v282 = vunpack.c.l.b16 %v262
      %v283 = vunpack.c.l.b16 %v263
      %v284 = vpack.c.b16 %v279, %v278
      %v285 = vpack.c.b16 %v281, %v280
      %v286 = vpack.c.b16 %v283, %v282
      %vm290 = vcmask 392192
      %v292 = vsel %vm290, %v264, 0
      %294 = vmatprep.subr.bf16.mxu0 0
      %295 = vmatpush1.bf16.msra.mxu0 %v284
      %296 = vmatprep.subr.bf16.mxu0 0
      %297 = vmatpush1.bf16.msra.mxu0 %v285
      %298 = vmatprep.subr.bf16.mxu0 0
      %299 = vmatpush1.bf16.msra.mxu0 %v286
      %300 = vmatprep.subr.bf16.mxu0 0
      %301 = vmatpush1.bf16.msra.mxu0 0
      %302 = vmatprep.subr.bf16.mxu0 0
      %303 = vmatpush1.bf16.msra.mxu0 0
      %304 = vmatprep.subr.bf16.mxu0 0
      %305 = vmatpush1.bf16.msra.mxu0 0
      %306 = vmatprep.subr.bf16.mxu0 0
      %307 = vmatpush1.bf16.msra.mxu0 0
      %308 = vmatprep.subr.bf16.mxu0 0
      %309 = vmatpush1.bf16.msra.mxu0 0
      %310 = vmatprep.subr.bf16.mxu0 0
      %311 = vmatpush1.bf16.msra.mxu0 0
      %312 = vmatprep.subr.bf16.mxu0 0
      %313 = vmatpush1.bf16.msra.mxu0 0
      %314 = vmatprep.subr.bf16.mxu0 0
      %315 = vmatpush1.bf16.msra.mxu0 0
      %316 = vmatprep.subr.bf16.mxu0 0
      %317 = vmatpush1.bf16.msra.mxu0 0
      %318 = vmatprep.subr.bf16.mxu0 0
      %319 = vmatpush1.bf16.msra.mxu0 0
      %320 = vmatprep.subr.bf16.mxu0 0
      %321 = vmatpush1.bf16.msra.mxu0 0
      %322 = vmatprep.subr.bf16.mxu0 0
      %323 = vmatpush1.bf16.msra.mxu0 0
      %324 = vmatprep.subr.bf16.mxu0 0
      %325 = vmatpush1.bf16.msra.mxu0 0
      %326 = vmatprep.mubr.bf16.mxu0 0
      %327 = vmatmul.mubr.bf16.gmra.mrb[0].mxu0 %v292
      %v328 = vpop.f32.mrb[0].mxu0
      %v329 = vadd.f32 %v270, %v328
      %v330 = vpop.f32.mrb[0].mxu0
      %v331 = vpop.f32.mrb[0].mxu0
      %v332 = vadd.f32 %v270, %v331
      %v333 = vpop.f32.mrb[0].mxu0
      %334 = vdwg.mxu0
      %v335 = vld [vmem:[%s3] sm:$0xff]
      %v336 = vld [vmem:[%s3 + $0x8] sm:$0xff]
      %v337 = vadd.f32 %v329, %v335
      %v338 = vadd.f32 %v332, %v336
      %v339 = vld [vmem:[%s4] sm:$0x1]
      %v340 = vld [vmem:[%s5] sm:$0x1]
      %vm341 = vcmask 523264
      %v342 = vsel %vm341, %v337, 0.0
      %343 = vadd.xlane.f32.xlu0 %v342
      %v344 = vpop.xlane.xlu0 %343
      %v345 = vsel %vm341, %v338, 0.0
      %346 = vadd.xlane.f32.xlu0 %v345
      %v347 = vpop.xlane.xlu0 %346
      %v348 = vrcp.pop 64.0
      %v349 = vmul.f32 %v344, %v348
      %v350 = vmul.f32 %v347, %v348
      %v351 = vsub.f32 %v337, %v349
      %v352 = vsub.f32 %v338, %v350
      %v353 = vmul.f32 %v351, %v351
      %v354 = vmul.f32 %v352, %v352
      %v355 = vsel %vm341, %v353, 0.0
      %356 = vadd.xlane.f32.xlu0 %v355
      %v357 = vpop.xlane.xlu0 %356
      %v358 = vsel %vm341, %v354, 0.0
      %359 = vadd.xlane.f32.xlu0 %v358
      %v360 = vpop.xlane.xlu0 %359
      %v361 = vmul.f32 %v357, %v348
      %v362 = vmul.f32 %v360, %v348
      %v363 = vadd.f32 %v361, 1e-05
      %v364 = vadd.f32 %v362, 1e-05
      %v365 = vrsqrt.pop %v363
      %v366 = vrsqrt.pop %v364
      %v367 = vmul.f32 %v351, %v365
      %v368 = vmul.f32 %v352, %v366
      %v370 = vlaneseq
      %v371 = vshrl.u32 %v370, 7
      %v372 = vsub.s32 0, %v371
      %v373 = vrot.slane %v339, %v372
      %v375 = vmul.f32 %v367, %v373
      %v376 = vmul.f32 %v368, %v373
      %v378 = vlaneseq
      %v379 = vshrl.u32 %v378, 7
      %v380 = vsub.s32 0, %v379
      %v381 = vrot.slane %v340, %v380
      %v383 = vadd.f32 %v375, %v381
      %v384 = vadd.f32 %v376, %v381
      %385 = vst.msk [vmem:[%s253] sm:$0xff] %vm341, %v383
      %386 = vst.msk [vmem:[%s253 + $0x8] sm:$0xff] %vm341, %v384
      %s387 = smul.u32 2, %s17
      %p388 = scmp.lt.s32.totalorder %s387, 3
      %s389 = scalar_select %p388, %s387, 3
      %s390 = smul.addr %s389, 8
      %s391 = scalar_lea.vmem %s6, %s390
      // Predicated region
      $region45: #{_lambda_.5} parent=43 // pred_check
        %p392 = pneg %p166
      $region46: #{_lambda_.5} parent=43 // pred_check_branch
        %394 = sbr.rel (%p392) target = $region48
      $region47: #{_lambda_.5} parent=43 // pred_region
        %s395 = smul.u32 2, %s17
      $region48: #{_lambda_.5} parent=43 // pred_fallthru
        _
    $region44: #{_lambda_.5} parent=5 // pred_fallthru
      _
    %p396 = scmp.le.s32.totalorder 2, %s12
    // Predicated region
    $region49: #{_lambda_.5} parent=5 // pred_check
      %p397 = pneg %p396
    $region50: #{_lambda_.5} parent=5 // pred_check_branch
      %399 = sbr.rel (%p397) target = $region52
    $region51: #{_lambda_.5} parent=5 // pred_region
      %s400 = ssub.s32 %s12, 2
      // Predicated region
      $region53: #{_lambda_.5} parent=51 // pred_check
        %p401 = pneg %p172
      $region54: #{_lambda_.5} parent=51 // pred_check_branch
        %403 = sbr.rel (%p401) target = $region56
      $region55: #{_lambda_.5} parent=51 // pred_region
        %s404 = smul.u32 2, %s18
        %p405 = scmp.lt.s32.totalorder %s404, 3
        %s406 = scalar_select %p405, %s404, 3
        %s407 = smul.addr %s406, 8
        %s408 = scalar_lea.vmem %s6, %s407
      $region56: #{_lambda_.5} parent=51 // pred_fallthru
        _
    $region52: #{_lambda_.5} parent=5 // pred_fallthru
      _
  $region6: #{_lambda_.5} parent=0 // loop_footer
    %s16 = sadd.s32 1, %s12
  $region7: #{_lambda_.5} parent=0 // loop_footer_branch
    %11 = sbr.rel target = $region3
  $region8: #{_lambda_.5} parent=0 // loop_exit
    _

// kernel: _lambda_.6
$region0: #{_lambda_.6}
  #allocation0 [shape = 'u32[]', space=smem, size = 0x4, offset = 0x4, fixed_abs, tag = 'smem constant byte address 0x4 - core index']
  #allocation1 [shape = 'u32[144,128]{1,0:T(1,128)}', space=vmem, size = 0x12000, scoped, tag = 'internal scratch']
  %s0 = inlined_call_operand.vmem [shape: f32[32,64], index: 0, kind: input, shape index: {}]
  %s1 = inlined_call_operand.vmem [shape: bf16[64,48], index: 1, kind: input, shape index: {}]
  %s2 = inlined_call_operand.vmem [shape: f32[1,48], index: 2, kind: input, shape index: {}]
  %s3 = inlined_call_operand.vmem [shape: bf16[48,32], index: 3, kind: input, shape index: {}]
  %s4 = inlined_call_operand.vmem [shape: f32[1,32], index: 4, kind: input, shape index: {}]
  %s5 = inlined_call_operand.vmem [shape: f32[1,32], index: 5, kind: input, shape index: {}]
  %s6 = inlined_call_operand.vmem [shape: f32[1,32], index: 6, kind: input, shape index: {}]
  %s7 = inlined_call_operand.vmem [shape: f32[32,32], index: 7, kind: output, shape index: {}]
  %s8 = sld [smem:[#allocation0]]
  $region61: #{_lambda_.6} parent=0
    _
  %s10 = ssub.s32 1, %s8
  %s11 = scalar_select 0, %s10, %s8
  loop: start=0, step=1, limit=4
  $region2: #{_lambda_.6} parent=0 // loop_pre_header
    _
  $region3: #{_lambda_.6} parent=0 // loop_header
    %s13 = sphi 0, %s17
    %p14 = scmp.ge.s32.totalorder %s13, 4
    %s23 = sphi 0, %s25
    %s26 = sphi 0, %s23
    %s27 = sphi 0, %s26
    %s43 = sphi 0, %s27
    %s47 = sphi 0, %s47
    %s49 = sphi 0, %s47
    %s50 = sphi 0, %s49
    %s64 = sphi 0, %s50
    %s68 = sphi 0, %s68
    %s70 = sphi 0, %s68
    %s71 = sphi 0, %s70
    %s85 = sphi 0, %s71
    %s89 = sphi 0, %s89
    %s91 = sphi 0, %s89
    %s92 = sphi 0, %s91
    %s106 = sphi 0, %s92
    %s110 = sphi 0, %s110
    %s112 = sphi 0, %s110
    %s113 = sphi 0, %s112
    %s127 = sphi 0, %s113
    %s131 = sphi 0, %s131
    %s133 = sphi 0, %s131
    %s134 = sphi 0, %s133
    %s148 = sphi 0, %s134
    %s152 = sphi 0, %s152
    %s154 = sphi 0, %s152
    %s155 = sphi 0, %s154
    %s169 = sphi 0, %s155
    %s175 = sphi 0, %s177
    %s178 = sphi 0, %s175
    %s179 = sphi 0, %s178
    %s195 = sphi 0, %s179
  $region4: #{_lambda_.6} parent=0 // loop_header_branch
    %16 = sbr.rel (%p14) target = $region8
  $region5: #{_lambda_.6} parent=0 // loop_body
    %s18 = ssub.s32 %s13, 1
    %s19 = ssub.s32 %s13, 2
    %s20 = sadd.s32 %s13, 1
    %s21 = ssub.s32 %s13, %s20
    %p22 = scmp.eq.s32.totalorder %s21, 0
    %s24 = sadd.s32 %s23, 1
    %s25 = scalar_select %p22, %s23, %s24
    %p28 = pneg %p22
    %p29 = scmp.eq.s32.totalorder %s13, 1
    %p30 = por %p28, %p29
    %p31 = scmp.ne.s32.totalorder %s23, %s26
    %p32 = scmp.eq.s32.totalorder %s13, 0
    %p33 = por %p31, %p32
    %p34 = scmp.ne.s32.totalorder %s23, %s26
    %p35 = scmp.eq.s32.totalorder %s18, 1
    %p36 = por %p34, %p35
    %p37 = scmp.ne.s32.totalorder %s26, %s27
    %p38 = scmp.eq.s32.totalorder %s18, 0
    %p39 = por %p37, %p38
    %p40 = scmp.ne.s32.totalorder %s26, %s27
    %p41 = scmp.eq.s32.totalorder %s19, 1
    %p42 = por %p40, %p41
    %p44 = scmp.ne.s32.totalorder %s27, %s43
    %p45 = scmp.eq.s32.totalorder %s19, 0
    %p46 = por %p44, %p45
    %s48 = sadd.s32 %s47, 1
    %p51 = scmp.eq.s32.totalorder %s13, 1
    %p52 = scmp.ne.s32.totalorder %s47, %s49
    %p53 = scmp.eq.s32.totalorder %s13, 0
    %p54 = por %p52, %p53
    %p55 = scmp.ne.s32.totalorder %s47, %s49
    %p56 = scmp.eq.s32.totalorder %s18, 1
    %p57 = por %p55, %p56
    %p58 = scmp.ne.s32.totalorder %s49, %s50
    %p59 = scmp.eq.s32.totalorder %s18, 0
    %p60 = por %p58, %p59
    %p61 = scmp.ne.s32.totalorder %s49, %s50
    %p62 = scmp.eq.s32.totalorder %s19, 1
    %p63 = por %p61, %p62
    %p65 = scmp.ne.s32.totalorder %s50, %s64
    %p66 = scmp.eq.s32.totalorder %s19, 0
    %p67 = por %p65, %p66
    %s69 = sadd.s32 %s68, 1
    %p72 = scmp.eq.s32.totalorder %s13, 1
    %p73 = scmp.ne.s32.totalorder %s68, %s70
    %p74 = scmp.eq.s32.totalorder %s13, 0
    %p75 = por %p73, %p74
    %p76 = scmp.ne.s32.totalorder %s68, %s70
    %p77 = scmp.eq.s32.totalorder %s18, 1
    %p78 = por %p76, %p77
    %p79 = scmp.ne.s32.totalorder %s70, %s71
    %p80 = scmp.eq.s32.totalorder %s18, 0
    %p81 = por %p79, %p80
    %p82 = scmp.ne.s32.totalorder %s70, %s71
    %p83 = scmp.eq.s32.totalorder %s19, 1
    %p84 = por %p82, %p83
    %p86 = scmp.ne.s32.totalorder %s71, %s85
    %p87 = scmp.eq.s32.totalorder %s19, 0
    %p88 = por %p86, %p87
    %s90 = sadd.s32 %s89, 1
    %p93 = scmp.eq.s32.totalorder %s13, 1
    %p94 = scmp.ne.s32.totalorder %s89, %s91
    %p95 = scmp.eq.s32.totalorder %s13, 0
    %p96 = por %p94, %p95
    %p97 = scmp.ne.s32.totalorder %s89, %s91
    %p98 = scmp.eq.s32.totalorder %s18, 1
    %p99 = por %p97, %p98
    %p100 = scmp.ne.s32.totalorder %s91, %s92
    %p101 = scmp.eq.s32.totalorder %s18, 0
    %p102 = por %p100, %p101
    %p103 = scmp.ne.s32.totalorder %s91, %s92
    %p104 = scmp.eq.s32.totalorder %s19, 1
    %p105 = por %p103, %p104
    %p107 = scmp.ne.s32.totalorder %s92, %s106
    %p108 = scmp.eq.s32.totalorder %s19, 0
    %p109 = por %p107, %p108
    %s111 = sadd.s32 %s110, 1
    %p114 = scmp.eq.s32.totalorder %s13, 1
    %p115 = scmp.ne.s32.totalorder %s110, %s112
    %p116 = scmp.eq.s32.totalorder %s13, 0
    %p117 = por %p115, %p116
    %p118 = scmp.ne.s32.totalorder %s110, %s112
    %p119 = scmp.eq.s32.totalorder %s18, 1
    %p120 = por %p118, %p119
    %p121 = scmp.ne.s32.totalorder %s112, %s113
    %p122 = scmp.eq.s32.totalorder %s18, 0
    %p123 = por %p121, %p122
    %p124 = scmp.ne.s32.totalorder %s112, %s113
    %p125 = scmp.eq.s32.totalorder %s19, 1
    %p126 = por %p124, %p125
    %p128 = scmp.ne.s32.totalorder %s113, %s127
    %p129 = scmp.eq.s32.totalorder %s19, 0
    %p130 = por %p128, %p129
    %s132 = sadd.s32 %s131, 1
    %p135 = scmp.eq.s32.totalorder %s13, 1
    %p136 = scmp.ne.s32.totalorder %s131, %s133
    %p137 = scmp.eq.s32.totalorder %s13, 0
    %p138 = por %p136, %p137
    %p139 = scmp.ne.s32.totalorder %s131, %s133
    %p140 = scmp.eq.s32.totalorder %s18, 1
    %p141 = por %p139, %p140
    %p142 = scmp.ne.s32.totalorder %s133, %s134
    %p143 = scmp.eq.s32.totalorder %s18, 0
    %p144 = por %p142, %p143
    %p145 = scmp.ne.s32.totalorder %s133, %s134
    %p146 = scmp.eq.s32.totalorder %s19, 1
    %p147 = por %p145, %p146
    %p149 = scmp.ne.s32.totalorder %s134, %s148
    %p150 = scmp.eq.s32.totalorder %s19, 0
    %p151 = por %p149, %p150
    %s153 = sadd.s32 %s152, 1
    %p156 = scmp.eq.s32.totalorder %s13, 1
    %p157 = scmp.ne.s32.totalorder %s152, %s154
    %p158 = scmp.eq.s32.totalorder %s13, 0
    %p159 = por %p157, %p158
    %p160 = scmp.ne.s32.totalorder %s152, %s154
    %p161 = scmp.eq.s32.totalorder %s18, 1
    %p162 = por %p160, %p161
    %p163 = scmp.ne.s32.totalorder %s154, %s155
    %p164 = scmp.eq.s32.totalorder %s18, 0
    %p165 = por %p163, %p164
    %p166 = scmp.ne.s32.totalorder %s154, %s155
    %p167 = scmp.eq.s32.totalorder %s19, 1
    %p168 = por %p166, %p167
    %p170 = scmp.ne.s32.totalorder %s155, %s169
    %p171 = scmp.eq.s32.totalorder %s19, 0
    %p172 = por %p170, %p171
    %s173 = ssub.s32 %s13, %s20
    %p174 = scmp.eq.s32.totalorder %s173, 0
    %s176 = sadd.s32 %s175, 1
    %s177 = scalar_select %p174, %s175, %s176
    %p180 = pneg %p174
    %p181 = scmp.eq.s32.totalorder %s13, 1
    %p182 = por %p180, %p181
    %p183 = scmp.ne.s32.totalorder %s175, %s178
    %p184 = scmp.eq.s32.totalorder %s13, 0
    %p185 = por %p183, %p184
    %p186 = scmp.ne.s32.totalorder %s175, %s178
    %p187 = scmp.eq.s32.totalorder %s18, 1
    %p188 = por %p186, %p187
    %p189 = scmp.ne.s32.totalorder %s178, %s179
    %p190 = scmp.eq.s32.totalorder %s18, 0
    %p191 = por %p189, %p190
    %p192 = scmp.ne.s32.totalorder %s178, %s179
    %p193 = scmp.eq.s32.totalorder %s19, 1
    %p194 = por %p192, %p193
    %p196 = scmp.ne.s32.totalorder %s179, %s195
    %p197 = scmp.eq.s32.totalorder %s19, 0
    %p198 = por %p196, %p197
    %p199 = scmp.le.s32.totalorder 1, %s13
    %p200 = scmp.lt.s32.totalorder %s13, 3
    %p201 = pnand %p199, %p200
    %p202 = pneg %p201
    // Predicated region
    $region9: #{_lambda_.6} parent=5 // pred_check
      _
    $region10: #{_lambda_.6} parent=5 // pred_check_branch
      %204 = sbr.rel (%p201) target = $region12
    $region11: #{_lambda_.6} parent=5 // pred_region
      %s205 = ssub.s32 %s13, 1
      // Predicated region
      $region13: #{_lambda_.6} parent=11 // pred_check
        %p206 = pneg %p60
      $region14: #{_lambda_.6} parent=11 // pred_check_branch
        %208 = sbr.rel (%p206) target = $region16
      $region15: #{_lambda_.6} parent=11 // pred_region
        _
      $region16: #{_lambda_.6} parent=11 // pred_fallthru
        _
      // Predicated region
      $region17: #{_lambda_.6} parent=11 // pred_check
        %p209 = pneg %p81
      $region18: #{_lambda_.6} parent=11 // pred_check_branch
        %211 = sbr.rel (%p209) target = $region20
      $region19: #{_lambda_.6} parent=11 // pred_region
        _
      $region20: #{_lambda_.6} parent=11 // pred_fallthru
        _
      // Predicated region
      $region21: #{_lambda_.6} parent=11 // pred_check
        %p212 = pneg %p102
      $region22: #{_lambda_.6} parent=11 // pred_check_branch
        %214 = sbr.rel (%p212) target = $region24
      $region23: #{_lambda_.6} parent=11 // pred_region
        _
      $region24: #{_lambda_.6} parent=11 // pred_fallthru
        _
      // Predicated region
      $region25: #{_lambda_.6} parent=11 // pred_check
        %p215 = pneg %p123
      $region26: #{_lambda_.6} parent=11 // pred_check_branch
        %217 = sbr.rel (%p215) target = $region28
      $region27: #{_lambda_.6} parent=11 // pred_region
        _
      $region28: #{_lambda_.6} parent=11 // pred_fallthru
        _
      // Predicated region
      $region29: #{_lambda_.6} parent=11 // pred_check
        %p218 = pneg %p144
      $region30: #{_lambda_.6} parent=11 // pred_check_branch
        %220 = sbr.rel (%p218) target = $region32
      $region31: #{_lambda_.6} parent=11 // pred_region
        _
      $region32: #{_lambda_.6} parent=11 // pred_fallthru
        _
      // Predicated region
      $region33: #{_lambda_.6} parent=11 // pred_check
        %p221 = pneg %p165
      $region34: #{_lambda_.6} parent=11 // pred_check_branch
        %223 = sbr.rel (%p221) target = $region36
      $region35: #{_lambda_.6} parent=11 // pred_region
        _
      $region36: #{_lambda_.6} parent=11 // pred_fallthru
        _
    $region12: #{_lambda_.6} parent=5 // pred_fallthru
      _
    %p224 = scmp.lt.s32.totalorder %s13, 2
    // Predicated region
    $region37: #{_lambda_.6} parent=5 // pred_check
      %p225 = pneg %p224
    $region38: #{_lambda_.6} parent=5 // pred_check_branch
      %227 = sbr.rel (%p225) target = $region40
    $region39: #{_lambda_.6} parent=5 // pred_region
      // Predicated region
      $region41: #{_lambda_.6} parent=39 // pred_check
        %p228 = pneg %p33
      $region42: #{_lambda_.6} parent=39 // pred_check_branch
        %230 = sbr.rel (%p228) target = $region44
      $region43: #{_lambda_.6} parent=39 // pred_region
        %s231 = smul.u32 2, %s13
        %p232 = scmp.lt.s32.totalorder %s231, 3
        %s233 = scalar_select %p232, %s231, 3
        %s234 = smul.addr %s233, 8
        %s235 = scalar_lea.vmem %s0, %s234
        %s236 = smul.u32 2, %s13
      $region44: #{_lambda_.6} parent=39 // pred_fallthru
        _
    $region40: #{_lambda_.6} parent=5 // pred_fallthru
      _
    %p237 = scmp.le.s32.totalorder 1, %s13
    %p238 = scmp.lt.s32.totalorder %s13, 3
    %p239 = pnand %p237, %p238
    %p240 = pneg %p239
    // Predicated region
    $region45: #{_lambda_.6} parent=5 // pred_check
      _
    $region46: #{_lambda_.6} parent=5 // pred_check_branch
      %242 = sbr.rel (%p239) target = $region48
    $region47: #{_lambda_.6} parent=5 // pred_region
      %s243 = ssub.s32 %s13, 1
      %s244 = smul.u32 2, %s18
      %p245 = scmp.lt.s32.totalorder %s244, 3
      %s246 = scalar_select %p245, %s244, 3
      %s247 = smul.addr %s246, 8
      %s248 = scalar_lea.vmem %s0, %s247
      %p249 = pneg %p39
      %p250 = pneg %p36
      %p251 = pneg %p60
      %p252 = pneg %p57
      %p253 = pneg %p81
      %p254 = pneg %p78
      %p255 = pneg %p102
      %p256 = pneg %p99
      %p257 = pneg %p123
      %p258 = pneg %p120
      %p259 = pneg %p144
      %p260 = pneg %p141
      %p261 = pneg %p165
      %p262 = pneg %p162
      %p263 = pneg %p191
      %p264 = pneg %p188
      %s265 = smul.u32 2, %s18
      %p266 = scmp.lt.s32.totalorder %s265, 3
      %s267 = scalar_select %p266, %s265, 3
      %s268 = smul.addr %s267, 8
      %s269 = scalar_lea.vmem %s7, %s268
      %s270 = smul.u32 2, %s18
      %p271 = scmp.lt.s32.totalorder %s270, 3
      %s272 = scalar_select %p271, %s270, 3
      %s273 = smul.addr %s272, 8
      %s274 = scalar_lea.vmem %s0, %s273
      %s275 = smul.u32 2, %s18
      %s276 = smul.u32 2, %s18
      %p277 = scmp.lt.s32.totalorder %s276, 3
      %s278 = scalar_select %p277, %s276, 3
      %s279 = smul.addr %s278, 8
      %s280 = scalar_lea.vmem %s7, %s279
      %s281 = smul.u32 2, %s18
      %v283 = vld [vmem:[%s274] sm:$0xff]
      %v284 = vld [vmem:[%s274 + $0x8] sm:$0xff]
      %v285 = vld [vmem:[%s1] sm:$0xf]
      %v286 = vld [vmem:[%s1 + $0x4] sm:$0xf]
      %v287 = vld [vmem:[%s1 + $0x8] sm:$0xf]
      %v288 = vld [vmem:[%s1 + $0xc] sm:$0xf]
      %v289 = vld [vmem:[%s1 + $0x10] sm:$0xf]
      %v290 = vld [vmem:[%s1 + $0x14] sm:$0xf]
      %v291 = vld [vmem:[%s1 + $0x18] sm:$0xf]
      %v292 = vld [vmem:[%s1 + $0x1c] sm:$0xf]
      %v293 = vpack.c.bf16 %v284, %v283
      %v294 = vld [vmem:[%s2] sm:$0x1]
      %v296 = vlaneseq
      %v297 = vshrl.u32 %v296, 7
      %v298 = vsub.s32 0, %v297
      %v299 = vrot.slane %v294, %v298
      %v309 = vunpack.c.l.b16 %v285
      %v310 = vunpack.c.l.b16 %v286
      %v311 = vunpack.c.l.b16 %v287
      %v312 = vunpack.c.l.b16 %v288
      %v313 = vunpack.c.l.b16 %v289
      %v314 = vunpack.c.l.b16 %v290
      %v315 = vunpack.c.l.b16 %v291
      %v316 = vunpack.c.l.b16 %v292
      %v317 = vpack.c.b16 %v310, %v309
      %v318 = vpack.c.b16 %v312, %v311
      %v319 = vpack.c.b16 %v314, %v313
      %v320 = vpack.c.b16 %v316, %v315
      %vm325 = vcmask 523264
      %v327 = vsel %vm325, %v293, 0
      %329 = vmatprep.subr.bf16.mxu0 0
      %330 = vmatpush1.bf16.msra.mxu0 %v317
      %331 = vmatprep.subr.bf16.mxu0 0
      %332 = vmatpush1.bf16.msra.mxu0 %v318
      %333 = vmatprep.subr.bf16.mxu0 0
      %334 = vmatpush1.bf16.msra.mxu0 %v319
      %335 = vmatprep.subr.bf16.mxu0 0
      %336 = vmatpush1.bf16.msra.mxu0 %v320
      %337 = vmatprep.subr.bf16.mxu0 0
      %338 = vmatpush1.bf16.msra.mxu0 0
      %339 = vmatprep.subr.bf16.mxu0 0
      %340 = vmatpush1.bf16.msra.mxu0 0
      %341 = vmatprep.subr.bf16.mxu0 0
      %342 = vmatpush1.bf16.msra.mxu0 0
      %343 = vmatprep.subr.bf16.mxu0 0
      %344 = vmatpush1.bf16.msra.mxu0 0
      %345 = vmatprep.subr.bf16.mxu0 0
      %346 = vmatpush1.bf16.msra.mxu0 0
      %347 = vmatprep.subr.bf16.mxu0 0
      %348 = vmatpush1.bf16.msra.mxu0 0
      %349 = vmatprep.subr.bf16.mxu0 0
      %350 = vmatpush1.bf16.msra.mxu0 0
      %351 = vmatprep.subr.bf16.mxu0 0
      %352 = vmatpush1.bf16.msra.mxu0 0
      %353 = vmatprep.subr.bf16.mxu0 0
      %354 = vmatpush1.bf16.msra.mxu0 0
      %355 = vmatprep.subr.bf16.mxu0 0
      %356 = vmatpush1.bf16.msra.mxu0 0
      %357 = vmatprep.subr.bf16.mxu0 0
      %358 = vmatpush1.bf16.msra.mxu0 0
      %359 = vmatprep.subr.bf16.mxu0 0
      %360 = vmatpush1.bf16.msra.mxu0 0
      %361 = vmatprep.mubr.bf16.mxu0 0
      %362 = vmatmul.mubr.bf16.gmra.mrb[0].mxu0 %v327
      %v363 = vpop.f32.mrb[0].mxu0
      %v364 = vadd.f32 %v299, %v363
      %v365 = vpop.f32.mrb[0].mxu0
      %v366 = vpop.f32.mrb[0].mxu0
      %v367 = vadd.f32 %v299, %v366
      %v368 = vpop.f32.mrb[0].mxu0
      %369 = vdwg.mxu0
      %v370 = vld [vmem:[%s3] sm:$0xf]
      %v371 = vld [vmem:[%s3 + $0x4] sm:$0xf]
      %v372 = vld [vmem:[%s3 + $0x8] sm:$0xf]
      %v373 = vld [vmem:[%s3 + $0xc] sm:$0xf]
      %v374 = vld [vmem:[%s3 + $0x10] sm:$0xf]
      %v375 = vld [vmem:[%s3 + $0x14] sm:$0xf]
      %v376 = vpack.c.bf16 %v367, %v364
      %v377 = vld [vmem:[%s4] sm:$0x1]
      %v379 = vlaneseq
      %v380 = vshrl.u32 %v379, 7
      %v381 = vsub.s32 0, %v380
      %v382 = vrot.slane %v377, %v381
      %v390 = vunpack.c.l.b16 %v370
      %v391 = vunpack.c.l.b16 %v371
      %v392 = vunpack.c.l.b16 %v372
      %v393 = vunpack.c.l.b16 %v373
      %v394 = vunpack.c.l.b16 %v374
      %v395 = vunpack.c.l.b16 %v375
      %v396 = vpack.c.b16 %v391, %v390
      %v397 = vpack.c.b16 %v393, %v392
      %v398 = vpack.c.b16 %v395, %v394
      %vm402 = vcmask 392192
      %v404 = vsel %vm402, %v376, 0
      %406 = vmatprep.subr.bf16.mxu0 0
      %407 = vmatpush1.bf16.msra.mxu0 %v396
      %408 = vmatprep.subr.bf16.mxu0 0
      %409 = vmatpush1.bf16.msra.mxu0 %v397
      %410 = vmatprep.subr.bf16.mxu0 0
      %411 = vmatpush1.bf16.msra.mxu0 %v398
      %412 = vmatprep.subr.bf16.mxu0 0
      %413 = vmatpush1.bf16.msra.mxu0 0
      %414 = vmatprep.subr.bf16.mxu0 0
      %415 = vmatpush1.bf16.msra.mxu0 0
      %416 = vmatprep.subr.bf16.mxu0 0
      %417 = vmatpush1.bf16.msra.mxu0 0
      %418 = vmatprep.subr.bf16.mxu0 0
      %419 = vmatpush1.bf16.msra.mxu0 0
      %420 = vmatprep.subr.bf16.mxu0 0
      %421 = vmatpush1.bf16.msra.mxu0 0
      %422 = vmatprep.subr.bf16.mxu0 0
      %423 = vmatpush1.bf16.msra.mxu0 0
      %424 = vmatprep.subr.bf16.mxu0 0
      %425 = vmatpush1.bf16.msra.mxu0 0
      %426 = vmatprep.subr.bf16.mxu0 0
      %427 = vmatpush1.bf16.msra.mxu0 0
      %428 = vmatprep.subr.bf16.mxu0 0
      %429 = vmatpush1.bf16.msra.mxu0 0
      %430 = vmatprep.subr.bf16.mxu0 0
      %431 = vmatpush1.bf16.msra.mxu0 0
      %432 = vmatprep.subr.bf16.mxu0 0
      %433 = vmatpush1.bf16.msra.mxu0 0
      %434 = vmatprep.subr.bf16.mxu0 0
      %435 = vmatpush1.bf16.msra.mxu0 0
      %436 = vmatprep.subr.bf16.mxu0 0
      %437 = vmatpush1.bf16.msra.mxu0 0
      %438 = vmatprep.mubr.bf16.mxu0 0
      %439 = vmatmul.mubr.bf16.gmra.mrb[0].mxu0 %v404
      %v440 = vpop.f32.mrb[0].mxu0
      %v441 = vadd.f32 %v382, %v440
      %v442 = vpop.f32.mrb[0].mxu0
      %v443 = vpop.f32.mrb[0].mxu0
      %v444 = vadd.f32 %v382, %v443
      %v445 = vpop.f32.mrb[0].mxu0
      %446 = vdwg.mxu0
      %v447 = vld [vmem:[%s5] sm:$0x1]
      %v448 = vld [vmem:[%s6] sm:$0x1]
      %vm449 = vcmask 261120
      %v450 = vsel %vm449, %v441, 0.0
      %451 = vadd.xlane.f32.xlu0 %v450
      %v452 = vpop.xlane.xlu0 %451
      %v453 = vsel %vm449, %v444, 0.0
      %454 = vadd.xlane.f32.xlu0 %v453
      %v455 = vpop.xlane.xlu0 %454
      %v456 = vrcp.pop 32.0
      %v457 = vmul.f32 %v452, %v456
      %v458 = vmul.f32 %v455, %v456
      %v459 = vsub.f32 %v441, %v457
      %v460 = vsub.f32 %v444, %v458
      %v461 = vmul.f32 %v459, %v459
      %v462 = vmul.f32 %v460, %v460
      %v463 = vsel %vm449, %v461, 0.0
      %464 = vadd.xlane.f32.xlu0 %v463
      %v465 = vpop.xlane.xlu0 %464
      %v466 = vsel %vm449, %v462, 0.0
      %467 = vadd.xlane.f32.xlu0 %v466
      %v468 = vpop.xlane.xlu0 %467
      %v469 = vmul.f32 %v465, %v456
      %v470 = vmul.f32 %v468, %v456
      %v471 = vadd.f32 %v469, 1e-05
      %v472 = vadd.f32 %v470, 1e-05
      %v473 = vrsqrt.pop %v471
      %v474 = vrsqrt.pop %v472
      %v475 = vmul.f32 %v459, %v473
      %v476 = vmul.f32 %v460, %v474
      %v478 = vlaneseq
      %v479 = vshrl.u32 %v478, 7
      %v480 = vsub.s32 0, %v479
      %v481 = vrot.slane %v447, %v480
      %v483 = vmul.f32 %v475, %v481
      %v484 = vmul.f32 %v476, %v481
      %v486 = vlaneseq
      %v487 = vshrl.u32 %v486, 7
      %v488 = vsub.s32 0, %v487
      %v489 = vrot.slane %v448, %v488
      %v491 = vadd.f32 %v483, %v489
      %v492 = vadd.f32 %v484, %v489
      %493 = vst.msk [vmem:[%s280] sm:$0xff] %vm449, %v491
      %494 = vst.msk [vmem:[%s280 + $0x8] sm:$0xff] %vm449, %v492
      %s495 = smul.u32 2, %s18
      %p496 = scmp.lt.s32.totalorder %s495, 3
      %s497 = scalar_select %p496, %s495, 3
      %s498 = smul.addr %s497, 8
      %s499 = scalar_lea.vmem %s7, %s498
      // Predicated region
      $region49: #{_lambda_.6} parent=47 // pred_check
        %p500 = pneg %p188
      $region50: #{_lambda_.6} parent=47 // pred_check_branch
        %502 = sbr.rel (%p500) target = $region52
      $region51: #{_lambda_.6} parent=47 // pred_region
        %s503 = smul.u32 2, %s18
      $region52: #{_lambda_.6} parent=47 // pred_fallthru
        _
    $region48: #{_lambda_.6} parent=5 // pred_fallthru
      _
    %p504 = scmp.le.s32.totalorder 2, %s13
    // Predicated region
    $region53: #{_lambda_.6} parent=5 // pred_check
      %p505 = pneg %p504
    $region54: #{_lambda_.6} parent=5 // pred_check_branch
      %507 = sbr.rel (%p505) target = $region56
    $region55: #{_lambda_.6} parent=5 // pred_region
      %s508 = ssub.s32 %s13, 2
      // Predicated region
      $region57: #{_lambda_.6} parent=55 // pred_check
        %p509 = pneg %p194
      $region58: #{_lambda_.6} parent=55 // pred_check_branch
        %511 = sbr.rel (%p509) target = $region60
      $region59: #{_lambda_.6} parent=55 // pred_region
        %s512 = smul.u32 2, %s19
        %p513 = scmp.lt.s32.totalorder %s512, 3
        %s514 = scalar_select %p513, %s512, 3
        %s515 = smul.addr %s514, 8
        %s516 = scalar_lea.vmem %s7, %s515
      $region60: #{_lambda_.6} parent=55 // pred_fallthru
        _
    $region56: #{_lambda_.6} parent=5 // pred_fallthru
      _
  $region6: #{_lambda_.6} parent=0 // loop_footer
    %s17 = sadd.s32 1, %s13
  $region7: #{_lambda_.6} parent=0 // loop_footer_branch
    %12 = sbr.rel target = $region3
  $region8: #{_lambda_.6} parent=0 // loop_exit
    _

// kernel: _lambda_.9
$region0: #{_lambda_.9}
  #allocation0 [shape = 'u32[]', space=smem, size = 0x4, offset = 0x4, fixed_abs, tag = 'smem constant byte address 0x4 - core index']
  #allocation1 [shape = 'u32[144,128]{1,0:T(1,128)}', space=vmem, size = 0x12000, scoped, tag = 'internal scratch']
  %s0 = inlined_call_operand.vmem [shape: f32[48,32], index: 0, kind: input, shape index: {}]
  %s1 = inlined_call_operand.vmem [shape: f32[1,32], index: 1, kind: input, shape index: {}]
  %s2 = inlined_call_operand.vmem [shape: f32[1,32], index: 2, kind: input, shape index: {}]
  %s3 = inlined_call_operand.vmem [shape: bf16[32,128], index: 3, kind: input, shape index: {}]
  %s4 = inlined_call_operand.hbm [shape: f32[48,128], index: 4, kind: output, shape index: {}]
  %s5 = sld [smem:[#allocation0]]
  $region49: #{_lambda_.9} parent=0
    _
  %s7 = ssub.s32 1, %s5
  %s8 = scalar_select 0, %s7, %s5
  $region1: #{_lambda_.9} parent=0
    #allocation2 [shape = 'u8[24576]{0}', space=vmem, size = 0x6000, scoped, tag = 'output window, operand 0']
    #allocation3 [shape = 's32[2]{0}', space=sflag, size = 0x8, scoped, tag = 'scoped memory for _lambda_.9']
    %9 = vsyncpa [#allocation3], 0
    %s10 = scalar_lea.sflag [#allocation3], 1
    %11 = vsyncpa %s10, 0
    loop: start=0, step=1, limit=4
    $region2: #{_lambda_.9} parent=1 // loop_pre_header
      _
    $region3: #{_lambda_.9} parent=1 // loop_header
      %s13 = sphi 0, %s17
      %p14 = scmp.ge.s32.totalorder %s13, 4
      %s23 = sphi 0, %s25
      %s26 = sphi 0, %s23
      %s27 = sphi 0, %s26
      %s43 = sphi 0, %s27
      %s47 = sphi 0, %s47
      %s49 = sphi 0, %s47
      %s50 = sphi 0, %s49
      %s64 = sphi 0, %s50
      %s68 = sphi 0, %s68
      %s70 = sphi 0, %s68
      %s71 = sphi 0, %s70
      %s85 = sphi 0, %s71
      %s89 = sphi 0, %s89
      %s91 = sphi 0, %s89
      %s92 = sphi 0, %s91
      %s106 = sphi 0, %s92
      %s112 = sphi 0, %s114
      %s115 = sphi 0, %s112
      %s116 = sphi 0, %s115
      %s132 = sphi 0, %s116
    $region4: #{_lambda_.9} parent=1 // loop_header_branch
      %16 = sbr.rel (%p14) target = $region8
    $region5: #{_lambda_.9} parent=1 // loop_body
      %s18 = ssub.s32 %s13, 1
      %s19 = ssub.s32 %s13, 2
      %s20 = sadd.s32 %s13, 1
      %s21 = ssub.s32 %s13, %s20
      %p22 = scmp.eq.s32.totalorder %s21, 0
      %s24 = sadd.s32 %s23, 1
      %s25 = scalar_select %p22, %s23, %s24
      %p28 = pneg %p22
      %p29 = scmp.eq.s32.totalorder %s13, 1
      %p30 = por %p28, %p29
      %p31 = scmp.ne.s32.totalorder %s23, %s26
      %p32 = scmp.eq.s32.totalorder %s13, 0
      %p33 = por %p31, %p32
      %p34 = scmp.ne.s32.totalorder %s23, %s26
      %p35 = scmp.eq.s32.totalorder %s18, 1
      %p36 = por %p34, %p35
      %p37 = scmp.ne.s32.totalorder %s26, %s27
      %p38 = scmp.eq.s32.totalorder %s18, 0
      %p39 = por %p37, %p38
      %p40 = scmp.ne.s32.totalorder %s26, %s27
      %p41 = scmp.eq.s32.totalorder %s19, 1
      %p42 = por %p40, %p41
      %p44 = scmp.ne.s32.totalorder %s27, %s43
      %p45 = scmp.eq.s32.totalorder %s19, 0
      %p46 = por %p44, %p45
      %s48 = sadd.s32 %s47, 1
      %p51 = scmp.eq.s32.totalorder %s13, 1
      %p52 = scmp.ne.s32.totalorder %s47, %s49
      %p53 = scmp.eq.s32.totalorder %s13, 0
      %p54 = por %p52, %p53
      %p55 = scmp.ne.s32.totalorder %s47, %s49
      %p56 = scmp.eq.s32.totalorder %s18, 1
      %p57 = por %p55, %p56
      %p58 = scmp.ne.s32.totalorder %s49, %s50
      %p59 = scmp.eq.s32.totalorder %s18, 0
      %p60 = por %p58, %p59
      %p61 = scmp.ne.s32.totalorder %s49, %s50
      %p62 = scmp.eq.s32.totalorder %s19, 1
      %p63 = por %p61, %p62
      %p65 = scmp.ne.s32.totalorder %s50, %s64
      %p66 = scmp.eq.s32.totalorder %s19, 0
      %p67 = por %p65, %p66
      %s69 = sadd.s32 %s68, 1
      %p72 = scmp.eq.s32.totalorder %s13, 1
      %p73 = scmp.ne.s32.totalorder %s68, %s70
      %p74 = scmp.eq.s32.totalorder %s13, 0
      %p75 = por %p73, %p74
      %p76 = scmp.ne.s32.totalorder %s68, %s70
      %p77 = scmp.eq.s32.totalorder %s18, 1
      %p78 = por %p76, %p77
      %p79 = scmp.ne.s32.totalorder %s70, %s71
      %p80 = scmp.eq.s32.totalorder %s18, 0
      %p81 = por %p79, %p80
      %p82 = scmp.ne.s32.totalorder %s70, %s71
      %p83 = scmp.eq.s32.totalorder %s19, 1
      %p84 = por %p82, %p83
      %p86 = scmp.ne.s32.totalorder %s71, %s85
      %p87 = scmp.eq.s32.totalorder %s19, 0
      %p88 = por %p86, %p87
      %s90 = sadd.s32 %s89, 1
      %p93 = scmp.eq.s32.totalorder %s13, 1
      %p94 = scmp.ne.s32.totalorder %s89, %s91
      %p95 = scmp.eq.s32.totalorder %s13, 0
      %p96 = por %p94, %p95
      %p97 = scmp.ne.s32.totalorder %s89, %s91
      %p98 = scmp.eq.s32.totalorder %s18, 1
      %p99 = por %p97, %p98
      %p100 = scmp.ne.s32.totalorder %s91, %s92
      %p101 = scmp.eq.s32.totalorder %s18, 0
      %p102 = por %p100, %p101
      %p103 = scmp.ne.s32.totalorder %s91, %s92
      %p104 = scmp.eq.s32.totalorder %s19, 1
      %p105 = por %p103, %p104
      %p107 = scmp.ne.s32.totalorder %s92, %s106
      %p108 = scmp.eq.s32.totalorder %s19, 0
      %p109 = por %p107, %p108
      %s110 = ssub.s32 %s13, %s20
      %p111 = scmp.eq.s32.totalorder %s110, 0
      %s113 = sadd.s32 %s112, 1
      %s114 = scalar_select %p111, %s112, %s113
      %p117 = pneg %p111
      %p118 = scmp.eq.s32.totalorder %s13, 1
      %p119 = por %p117, %p118
      %p120 = scmp.ne.s32.totalorder %s112, %s115
      %p121 = scmp.eq.s32.totalorder %s13, 0
      %p122 = por %p120, %p121
      %p123 = scmp.ne.s32.totalorder %s112, %s115
      %p124 = scmp.eq.s32.totalorder %s18, 1
      %p125 = por %p123, %p124
      %p126 = scmp.ne.s32.totalorder %s115, %s116
      %p127 = scmp.eq.s32.totalorder %s18, 0
      %p128 = por %p126, %p127
      %p129 = scmp.ne.s32.totalorder %s115, %s116
      %p130 = scmp.eq.s32.totalorder %s19, 1
      %p131 = por %p129, %p130
      %p133 = scmp.ne.s32.totalorder %s116, %s132
      %p134 = scmp.eq.s32.totalorder %s19, 0
      %p135 = por %p133, %p134
      %p136 = scmp.le.s32.totalorder 1, %s13
      %p137 = scmp.lt.s32.totalorder %s13, 3
      %p138 = pnand %p136, %p137
      %p139 = pneg %p138
      // Predicated region
      $region9: #{_lambda_.9} parent=5 // pred_check
        _
      $region10: #{_lambda_.9} parent=5 // pred_check_branch
        %141 = sbr.rel (%p138) target = $region12
      $region11: #{_lambda_.9} parent=5 // pred_region
        %s142 = ssub.s32 %s13, 1
        // Predicated region
        $region13: #{_lambda_.9} parent=11 // pred_check
          %p143 = pneg %p60
        $region14: #{_lambda_.9} parent=11 // pred_check_branch
          %145 = sbr.rel (%p143) target = $region16
        $region15: #{_lambda_.9} parent=11 // pred_region
          _
        $region16: #{_lambda_.9} parent=11 // pred_fallthru
          _
        // Predicated region
        $region17: #{_lambda_.9} parent=11 // pred_check
          %p146 = pneg %p81
        $region18: #{_lambda_.9} parent=11 // pred_check_branch
          %148 = sbr.rel (%p146) target = $region20
        $region19: #{_lambda_.9} parent=11 // pred_region
          _
        $region20: #{_lambda_.9} parent=11 // pred_fallthru
          _
        // Predicated region
        $region21: #{_lambda_.9} parent=11 // pred_check
          %p149 = pneg %p102
        $region22: #{_lambda_.9} parent=11 // pred_check_branch
          %151 = sbr.rel (%p149) target = $region24
        $region23: #{_lambda_.9} parent=11 // pred_region
          _
        $region24: #{_lambda_.9} parent=11 // pred_fallthru
          _
      $region12: #{_lambda_.9} parent=5 // pred_fallthru
        _
      %p152 = scmp.lt.s32.totalorder %s13, 2
      // Predicated region
      $region25: #{_lambda_.9} parent=5 // pred_check
        %p153 = pneg %p152
      $region26: #{_lambda_.9} parent=5 // pred_check_branch
        %155 = sbr.rel (%p153) target = $region28
      $region27: #{_lambda_.9} parent=5 // pred_region
        // Predicated region
        $region29: #{_lambda_.9} parent=27 // pred_check
          %p156 = pneg %p33
        $region30: #{_lambda_.9} parent=27 // pred_check_branch
          %158 = sbr.rel (%p156) target = $region32
        $region31: #{_lambda_.9} parent=27 // pred_region
          %s159 = smul.u32 3, %s13
          %p160 = scmp.lt.s32.totalorder %s159, 5
          %s161 = scalar_select %p160, %s159, 5
          %s162 = smul.addr %s161, 8
          %s163 = scalar_lea.vmem %s0, %s162
          %s164 = smul.u32 3, %s13
        $region32: #{_lambda_.9} parent=27 // pred_fallthru
          _
      $region28: #{_lambda_.9} parent=5 // pred_fallthru
        _
      %p165 = scmp.le.s32.totalorder 1, %s13
      %p166 = scmp.lt.s32.totalorder %s13, 3
      %p167 = pnand %p165, %p166
      %p168 = pneg %p167
      // Predicated region
      $region33: #{_lambda_.9} parent=5 // pred_check
        _
      $region34: #{_lambda_.9} parent=5 // pred_check_branch
        %170 = sbr.rel (%p167) target = $region36
      $region35: #{_lambda_.9} parent=5 // pred_region
        %s171 = ssub.s32 %s13, 1
        %s172 = smul.u32 3, %s18
        %p173 = scmp.lt.s32.totalorder %s172, 5
        %s174 = scalar_select %p173, %s172, 5
        %s175 = smul.addr %s174, 8
        %s176 = scalar_lea.vmem %s0, %s175
        %p177 = pneg %p39
        %p178 = pneg %p36
        %p179 = pneg %p60
        %p180 = pneg %p57
        %p181 = pneg %p81
        %p182 = pneg %p78
        %p183 = pneg %p102
        %p184 = pneg %p99
        %p185 = pneg %p128
        %p186 = pneg %p125
        %s187 = sand.u32 %s115, 1
        %s188 = scalar_lea.sflag [#allocation3], %s187
        %s189 = sand.u32 %s115, 1
        %s190 = smul.addr %s189, 24
        %s191 = scalar_lea.vmem [#allocation2], %s190
        %s192 = smul.u32 3, %s18
        %p193 = scmp.lt.s32.totalorder %s192, 5
        %s194 = scalar_select %p193, %s192, 5
        %s195 = smul.addr %s194, 8
        %s196 = scalar_lea.vmem %s0, %s195
        %s197 = smul.u32 3, %s18
        %s198 = smul.u32 3, %s18
        %v200 = vld [vmem:[%s196] sm:$0xff]
        %v201 = vld [vmem:[%s196 + $0x8] sm:$0xff]
        %v202 = vld [vmem:[%s196 + $0x10] sm:$0xff]
        %v203 = vld [vmem:[%s1] sm:$0x1]
        %v204 = vld [vmem:[%s2] sm:$0x1]
        %vm205 = vcmask 261120
        %v206 = vsel %vm205, %v200, 0.0
        %207 = vadd.xlane.f32.xlu0 %v206
        %v208 = vpop.xlane.xlu0 %207
        %v209 = vsel %vm205, %v201, 0.0
        %210 = vadd.xlane.f32.xlu0 %v209
        %v211 = vpop.xlane.xlu0 %210
        %v212 = vsel %vm205, %v202, 0.0
        %213 = vadd.xlane.f32.xlu0 %v212
        %v214 = vpop.xlane.xlu0 %213
        %v215 = vrcp.pop 32.0
        %v216 = vmul.f32 %v208, %v215
        %v217 = vmul.f32 %v211, %v215
        %v218 = vmul.f32 %v214, %v215
        %v219 = vsub.f32 %v200, %v216
        %v220 = vsub.f32 %v201, %v217
        %v221 = vsub.f32 %v202, %v218
        %v222 = vmul.f32 %v219, %v219
        %v223 = vmul.f32 %v220, %v220
        %v224 = vmul.f32 %v221, %v221
        %v225 = vsel %vm205, %v222, 0.0
        %226 = vadd.xlane.f32.xlu0 %v225
        %v227 = vpop.xlane.xlu0 %226
        %v228 = vsel %vm205, %v223, 0.0
        %229 = vadd.xlane.f32.xlu0 %v228
        %v230 = vpop.xlane.xlu0 %229
        %v231 = vsel %vm205, %v224, 0.0
        %232 = vadd.xlane.f32.xlu0 %v231
        %v233 = vpop.xlane.xlu0 %232
        %v234 = vmul.f32 %v227, %v215
        %v235 = vmul.f32 %v230, %v215
        %v236 = vmul.f32 %v233, %v215
        %v237 = vadd.f32 %v234, 1e-05
        %v238 = vadd.f32 %v235, 1e-05
        %v239 = vadd.f32 %v236, 1e-05
        %v240 = vrsqrt.pop %v237
        %v241 = vrsqrt.pop %v238
        %v242 = vrsqrt.pop %v239
        %v243 = vmul.f32 %v219, %v240
        %v244 = vmul.f32 %v220, %v241
        %v245 = vmul.f32 %v221, %v242
        %v247 = vlaneseq
        %v248 = vshrl.u32 %v247, 7
        %v249 = vsub.s32 0, %v248
        %v250 = vrot.slane %v203, %v249
        %v252 = vmul.f32 %v243, %v250
        %v253 = vmul.f32 %v244, %v250
        %v254 = vmul.f32 %v245, %v250
        %v256 = vlaneseq
        %v257 = vshrl.u32 %v256, 7
        %v258 = vsub.s32 0, %v257
        %v259 = vrot.slane %v204, %v258
        %v261 = vadd.f32 %v252, %v259
        %v262 = vadd.f32 %v253, %v259
        %v263 = vadd.f32 %v254, %v259
        %v264 = vld [vmem:[%s3] sm:$0xf]
        %v265 = vld [vmem:[%s3 + $0x4] sm:$0xf]
        %v266 = vld [vmem:[%s3 + $0x8] sm:$0xf]
        %v267 = vld [vmem:[%s3 + $0xc] sm:$0xf]
        %v268 = vpack.c.bf16 %v262, %v261
        %v269 = vpack.c.bf16 %v263, %v263
        %v274 = vunpack.c.l.b16 %v264
        %v275 = vunpack.c.l.b16 %v265
        %v276 = vunpack.c.l.b16 %v266
        %v277 = vunpack.c.l.b16 %v267
        %v278 = vpack.c.b16 %v275, %v274
        %v279 = vpack.c.b16 %v277, %v276
        %v283 = vsel %vm205, %v268, 0
        %v286 = vsel %vm205, %v269, 0
        %288 = vmatprep.subr.bf16.mxu0 0
        %289 = vmatpush1.bf16.msra.mxu0 %v278
        %290 = vmatprep.subr.bf16.mxu0 0
        %291 = vmatpush1.bf16.msra.mxu0 %v279
        %292 = vmatprep.subr.bf16.mxu0 0
        %293 = vmatpush1.bf16.msra.mxu0 0
        %294 = vmatprep.subr.bf16.mxu0 0
        %295 = vmatpush1.bf16.msra.mxu0 0
        %296 = vmatprep.subr.bf16.mxu0 0
        %297 = vmatpush1.bf16.msra.mxu0 0
        %298 = vmatprep.subr.bf16.mxu0 0
        %299 = vmatpush1.bf16.msra.mxu0 0
        %300 = vmatprep.subr.bf16.mxu0 0
        %301 = vmatpush1.bf16.msra.mxu0 0
        %302 = vmatprep.subr.bf16.mxu0 0
        %303 = vmatpush1.bf16.msra.mxu0 0
        %304 = vmatprep.subr.bf16.mxu0 0
        %305 = vmatpush1.bf16.msra.mxu0 0
        %306 = vmatprep.subr.bf16.mxu0 0
        %307 = vmatpush1.bf16.msra.mxu0 0
        %308 = vmatprep.subr.bf16.mxu0 0
        %309 = vmatpush1.bf16.msra.mxu0 0
        %310 = vmatprep.subr.bf16.mxu0 0
        %311 = vmatpush1.bf16.msra.mxu0 0
        %312 = vmatprep.subr.bf16.mxu0 0
        %313 = vmatpush1.bf16.msra.mxu0 0
        %314 = vmatprep.subr.bf16.mxu0 0
        %315 = vmatpush1.bf16.msra.mxu0 0
        %316 = vmatprep.subr.bf16.mxu0 0
        %317 = vmatpush1.bf16.msra.mxu0 0
        %318 = vmatprep.subr.bf16.mxu0 0
        %319 = vmatpush1.bf16.msra.mxu0 0
        %320 = vmatprep.mubr.bf16.mxu0 0
        %321 = vmatmul.mubr.bf16.gmra.mrb[0].mxu0 %v283
        %v322 = vpop.f32.mrb[0].mxu0
        %v323 = vadd.f32 0.0, %v322
        %v324 = vpop.f32.mrb[0].mxu0
        %v325 = vpop.f32.mrb[0].mxu0
        %v326 = vadd.f32 0.0, %v325
        %v327 = vpop.f32.mrb[0].mxu0
        %328 = vmatprep.mubr.bf16.mxu0 0
        %329 = vmatmul.mubr.bf16.gmra.mrb[0].mxu0 %v286
        %v330 = vpop.f32.mrb[0].mxu0
        %v331 = vadd.f32 0.0, %v330
        %v332 = vpop.f32.mrb[0].mxu0
        %v333 = vpop.f32.mrb[0].mxu0
        %v334 = vpop.f32.mrb[0].mxu0
        %335 = vdwg.mxu0
        %336 = vst [vmem:[%s191] sm:$0xff] %v323
        %337 = vst [vmem:[%s191 + $0x8] sm:$0xff] %v326
        %338 = vst [vmem:[%s191 + $0x10] sm:$0xff] %v331
        %s339 = sand.u32 %s115, 1
        %s340 = scalar_lea.sflag [#allocation3], %s339
        %s341 = sand.u32 %s115, 1
        %s342 = smul.addr %s341, 24
        %s343 = scalar_lea.vmem [#allocation2], %s342
        // Predicated region
        $region37: #{_lambda_.9} parent=35 // pred_check
          %p344 = pneg %p125
        $region38: #{_lambda_.9} parent=35 // pred_check_branch
          %346 = sbr.rel (%p344) target = $region40
        $region39: #{_lambda_.9} parent=35 // pred_region
          %s347 = smul.u32 3, %s18
          %s349 = ssub.s32 384, 384
          %350 = vsyncadd %s340, %s349
          %s351 = smul.addr %s347, 128
          %s352 = scalar_lea.hbm %s4, %s351
          %s353 = sshll.u32 %s343, 4
          %s354 = int_to_ptr.vmem [resolvable:$true] %s353
          %359 = dma.vmem_to_hbm [thread:$0]  %s354, 384, %s352, %s340, 128, 128, 8
        $region40: #{_lambda_.9} parent=35 // pred_fallthru
          _
      $region36: #{_lambda_.9} parent=5 // pred_fallthru
        _
      %p360 = scmp.le.s32.totalorder 2, %s13
      // Predicated region
      $region41: #{_lambda_.9} parent=5 // pred_check
        %p361 = pneg %p360
      $region42: #{_lambda_.9} parent=5 // pred_check_branch
        %363 = sbr.rel (%p361) target = $region44
      $region43: #{_lambda_.9} parent=5 // pred_region
        %s364 = ssub.s32 %s13, 2
        // Predicated region
        $region45: #{_lambda_.9} parent=43 // pred_check
          %p365 = pneg %p131
        $region46: #{_lambda_.9} parent=43 // pred_check_branch
          %367 = sbr.rel (%p365) target = $region48
        $region47: #{_lambda_.9} parent=43 // pred_region
          %s368 = sand.u32 %s116, 1
          %s369 = scalar_lea.sflag [#allocation3], %s368
          %s370 = sand.u32 %s116, 1
          %s371 = smul.addr %s370, 24
          %s372 = scalar_lea.vmem [#allocation2], %s371
          %373 = dma.done %s369, 384
        $region48: #{_lambda_.9} parent=43 // pred_fallthru
          _
      $region44: #{_lambda_.9} parent=5 // pred_fallthru
        _
    $region6: #{_lambda_.9} parent=1 // loop_footer
      %s17 = sadd.s32 1, %s13
    $region7: #{_lambda_.9} parent=1 // loop_footer_branch
      %12 = sbr.rel target = $region3
    $region8: #{_lambda_.9} parent=1 // loop_exit
      _
    %374 = vsyncpa [#allocation3], 1
    %s375 = scalar_lea.sflag [#allocation3], 1
    %376 = vsyncpa %s375, 1

// kernel: _lambda_.7
$region0: #{_lambda_.7}
  #allocation0 [shape = 'u32[]', space=smem, size = 0x4, offset = 0x4, fixed_abs, tag = 'smem constant byte address 0x4 - core index']
  #allocation1 [shape = 'u32[144,128]{1,0:T(1,128)}', space=vmem, size = 0x12000, scoped, tag = 'internal scratch']
  %s0 = inlined_call_operand.vmem [shape: f32[48,32], index: 0, kind: input, shape index: {}]
  %s1 = inlined_call_operand.vmem [shape: f32[1,32], index: 1, kind: input, shape index: {}]
  %s2 = inlined_call_operand.vmem [shape: f32[1,32], index: 2, kind: input, shape index: {}]
  %s3 = inlined_call_operand.vmem [shape: bf16[32,96], index: 3, kind: input, shape index: {}]
  %s4 = inlined_call_operand.vmem [shape: f32[1,96], index: 4, kind: input, shape index: {}]
  %s5 = inlined_call_operand.vmem [shape: bf16[32,32], index: 5, kind: input, shape index: {}]
  %s6 = inlined_call_operand.vmem [shape: f32[1,32], index: 6, kind: input, shape index: {}]
  %s7 = inlined_call_operand.vmem [shape: f32[1,32], index: 7, kind: input, shape index: {}]
  %s8 = inlined_call_operand.vmem [shape: f32[1,32], index: 8, kind: input, shape index: {}]
  %s9 = inlined_call_operand.vmem [shape: bf16[32,128], index: 9, kind: input, shape index: {}]
  %s10 = inlined_call_operand.vmem [shape: f32[1,128], index: 10, kind: input, shape index: {}]
  %s11 = inlined_call_operand.vmem [shape: bf16[128,32], index: 11, kind: input, shape index: {}]
  %s12 = inlined_call_operand.vmem [shape: f32[1,32], index: 12, kind: input, shape index: {}]
  %s13 = inlined_call_operand.vmem [shape: f32[48,32], index: 13, kind: output, shape index: {0}]
  %s14 = inlined_call_operand.hbm [shape: f32[2,4,24,24], index: 14, kind: output, shape index: {1}]
  %15 = xla_tuple %s13, %s14
  %s16 = sld [smem:[#allocation0]]
  $region93: #{_lambda_.7} parent=0
    _
  %s18 = ssub.s32 1, %s16
  %s19 = scalar_select 0, %s18, %s16
  $region1: #{_lambda_.7} parent=0
    #allocation2 [shape = 'u8[98304]{0}', space=vmem, size = 0x18000, scoped, tag = 'output window, operand 1']
    #allocation3 [shape = 's32[2]{0}', space=sflag, size = 0x8, scoped, tag = 'scoped memory for _lambda_.7']
    %20 = vsyncpa [#allocation3], 0
    %s21 = scalar_lea.sflag [#allocation3], 1
    %22 = vsyncpa %s21, 0
    loop: start=0, step=1, limit=4
    $region2: #{_lambda_.7} parent=1 // loop_pre_header
      _
    $region3: #{_lambda_.7} parent=1 // loop_header
      %s24 = sphi 0, %s28
      %p25 = scmp.ge.s32.totalorder %s24, 4
      %s34 = sphi 0, %s36
      %s37 = sphi 0, %s34
      %s38 = sphi 0, %s37
      %s54 = sphi 0, %s38
      %s58 = sphi 0, %s58
      %s60 = sphi 0, %s58
      %s61 = sphi 0, %s60
      %s75 = sphi 0, %s61
      %s79 = sphi 0, %s79
      %s81 = sphi 0, %s79
      %s82 = sphi 0, %s81
      %s96 = sphi 0, %s82
      %s100 = sphi 0, %s100
      %s102 = sphi 0, %s100
      %s103 = sphi 0, %s102
      %s117 = sphi 0, %s103
      %s121 = sphi 0, %s121
      %s123 = sphi 0, %s121
      %s124 = sphi 0, %s123
      %s138 = sphi 0, %s124
      %s142 = sphi 0, %s142
      %s144 = sphi 0, %s142
      %s145 = sphi 0, %s144
      %s159 = sphi 0, %s145
      %s163 = sphi 0, %s163
      %s165 = sphi 0, %s163
      %s166 = sphi 0, %s165
      %s180 = sphi 0, %s166
      %s184 = sphi 0, %s184
      %s186 = sphi 0, %s184
      %s187 = sphi 0, %s186
      %s201 = sphi 0, %s187
      %s205 = sphi 0, %s205
      %s207 = sphi 0, %s205
      %s208 = sphi 0, %s207
      %s222 = sphi 0, %s208
      %s226 = sphi 0, %s226
      %s228 = sphi 0, %s226
      %s229 = sphi 0, %s228
      %s243 = sphi 0, %s229
      %s247 = sphi 0, %s247
      %s249 = sphi 0, %s247
      %s250 = sphi 0, %s249
      %s264 = sphi 0, %s250
      %s268 = sphi 0, %s268
      %s270 = sphi 0, %s268
      %s271 = sphi 0, %s270
      %s285 = sphi 0, %s271
      %s289 = sphi 0, %s289
      %s291 = sphi 0, %s289
      %s292 = sphi 0, %s291
      %s306 = sphi 0, %s292
      %s312 = sphi 0, %s314
      %s315 = sphi 0, %s312
      %s316 = sphi 0, %s315
      %s332 = sphi 0, %s316
      %s338 = sphi 0, %s340
      %s341 = sphi 0, %s338
      %s342 = sphi 0, %s341
      %s358 = sphi 0, %s342
    $region4: #{_lambda_.7} parent=1 // loop_header_branch
      %27 = sbr.rel (%p25) target = $region8
    $region5: #{_lambda_.7} parent=1 // loop_body
      %s29 = ssub.s32 %s24, 1
      %s30 = ssub.s32 %s24, 2
      %s31 = sadd.s32 %s24, 1
      %s32 = ssub.s32 %s24, %s31
      %p33 = scmp.eq.s32.totalorder %s32, 0
      %s35 = sadd.s32 %s34, 1
      %s36 = scalar_select %p33, %s34, %s35
      %p39 = pneg %p33
      %p40 = scmp.eq.s32.totalorder %s24, 1
      %p41 = por %p39, %p40
      %p42 = scmp.ne.s32.totalorder %s34, %s37
      %p43 = scmp.eq.s32.totalorder %s24, 0
      %p44 = por %p42, %p43
      %p45 = scmp.ne.s32.totalorder %s34, %s37
      %p46 = scmp.eq.s32.totalorder %s29, 1
      %p47 = por %p45, %p46
      %p48 = scmp.ne.s32.totalorder %s37, %s38
      %p49 = scmp.eq.s32.totalorder %s29, 0
      %p50 = por %p48, %p49
      %p51 = scmp.ne.s32.totalorder %s37, %s38
      %p52 = scmp.eq.s32.totalorder %s30, 1
      %p53 = por %p51, %p52
      %p55 = scmp.ne.s32.totalorder %s38, %s54
      %p56 = scmp.eq.s32.totalorder %s30, 0
      %p57 = por %p55, %p56
      %s59 = sadd.s32 %s58, 1
      %p62 = scmp.eq.s32.totalorder %s24, 1
      %p63 = scmp.ne.s32.totalorder %s58, %s60
      %p64 = scmp.eq.s32.totalorder %s24, 0
      %p65 = por %p63, %p64
      %p66 = scmp.ne.s32.totalorder %s58, %s60
      %p67 = scmp.eq.s32.totalorder %s29, 1
      %p68 = por %p66, %p67
      %p69 = scmp.ne.s32.totalorder %s60, %s61
      %p70 = scmp.eq.s32.totalorder %s29, 0
      %p71 = por %p69, %p70
      %p72 = scmp.ne.s32.totalorder %s60, %s61
      %p73 = scmp.eq.s32.totalorder %s30, 1
      %p74 = por %p72, %p73
      %p76 = scmp.ne.s32.totalorder %s61, %s75
      %p77 = scmp.eq.s32.totalorder %s30, 0
      %p78 = por %p76, %p77
      %s80 = sadd.s32 %s79, 1
      %p83 = scmp.eq.s32.totalorder %s24, 1
      %p84 = scmp.ne.s32.totalorder %s79, %s81
      %p85 = scmp.eq.s32.totalorder %s24, 0
      %p86 = por %p84, %p85
      %p87 = scmp.ne.s32.totalorder %s79, %s81
      %p88 = scmp.eq.s32.totalorder %s29, 1
      %p89 = por %p87, %p88
      %p90 = scmp.ne.s32.totalorder %s81, %s82
      %p91 = scmp.eq.s32.totalorder %s29, 0
      %p92 = por %p90, %p91
      %p93 = scmp.ne.s32.totalorder %s81, %s82
      %p94 = scmp.eq.s32.totalorder %s30, 1
      %p95 = por %p93, %p94
      %p97 = scmp.ne.s32.totalorder %s82, %s96
      %p98 = scmp.eq.s32.totalorder %s30, 0
      %p99 = por %p97, %p98
      %s101 = sadd.s32 %s100, 1
      %p104 = scmp.eq.s32.totalorder %s24, 1
      %p105 = scmp.ne.s32.totalorder %s100, %s102
      %p106 = scmp.eq.s32.totalorder %s24, 0
      %p107 = por %p105, %p106
      %p108 = scmp.ne.s32.totalorder %s100, %s102
      %p109 = scmp.eq.s32.totalorder %s29, 1
      %p110 = por %p108, %p109
      %p111 = scmp.ne.s32.totalorder %s102, %s103
      %p112 = scmp.eq.s32.totalorder %s29, 0
      %p113 = por %p111, %p112
      %p114 = scmp.ne.s32.totalorder %s102, %s103
      %p115 = scmp.eq.s32.totalorder %s30, 1
      %p116 = por %p114, %p115
      %p118 = scmp.ne.s32.totalorder %s103, %s117
      %p119 = scmp.eq.s32.totalorder %s30, 0
      %p120 = por %p118, %p119
      %s122 = sadd.s32 %s121, 1
      %p125 = scmp.eq.s32.totalorder %s24, 1
      %p126 = scmp.ne.s32.totalorder %s121, %s123
      %p127 = scmp.eq.s32.totalorder %s24, 0
      %p128 = por %p126, %p127
      %p129 = scmp.ne.s32.totalorder %s121, %s123
      %p130 = scmp.eq.s32.totalorder %s29, 1
      %p131 = por %p129, %p130
      %p132 = scmp.ne.s32.totalorder %s123, %s124
      %p133 = scmp.eq.s32.totalorder %s29, 0
      %p134 = por %p132, %p133
      %p135 = scmp.ne.s32.totalorder %s123, %s124
      %p136 = scmp.eq.s32.totalorder %s30, 1
      %p137 = por %p135, %p136
      %p139 = scmp.ne.s32.totalorder %s124, %s138
      %p140 = scmp.eq.s32.totalorder %s30, 0
      %p141 = por %p139, %p140
      %s143 = sadd.s32 %s142, 1
      %p146 = scmp.eq.s32.totalorder %s24, 1
      %p147 = scmp.ne.s32.totalorder %s142, %s144
      %p148 = scmp.eq.s32.totalorder %s24, 0
      %p149 = por %p147, %p148
      %p150 = scmp.ne.s32.totalorder %s142, %s144
      %p151 = scmp.eq.s32.totalorder %s29, 1
      %p152 = por %p150, %p151
      %p153 = scmp.ne.s32.totalorder %s144, %s145
      %p154 = scmp.eq.s32.totalorder %s29, 0
      %p155 = por %p153, %p154
      %p156 = scmp.ne.s32.totalorder %s144, %s145
      %p157 = scmp.eq.s32.totalorder %s30, 1
      %p158 = por %p156, %p157
      %p160 = scmp.ne.s32.totalorder %s145, %s159
      %p161 = scmp.eq.s32.totalorder %s30, 0
      %p162 = por %p160, %p161
      %s164 = sadd.s32 %s163, 1
      %p167 = scmp.eq.s32.totalorder %s24, 1
      %p168 = scmp.ne.s32.totalorder %s163, %s165
      %p169 = scmp.eq.s32.totalorder %s24, 0
      %p170 = por %p168, %p169
      %p171 = scmp.ne.s32.totalorder %s163, %s165
      %p172 = scmp.eq.s32.totalorder %s29, 1
      %p173 = por %p171, %p172
      %p174 = scmp.ne.s32.totalorder %s165, %s166
      %p175 = scmp.eq.s32.totalorder %s29, 0
      %p176 = por %p174, %p175
      %p177 = scmp.ne.s32.totalorder %s165, %s166
      %p178 = scmp.eq.s32.totalorder %s30, 1
      %p179 = por %p177, %p178
      %p181 = scmp.ne.s32.totalorder %s166, %s180
      %p182 = scmp.eq.s32.totalorder %s30, 0
      %p183 = por %p181, %p182
      %s185 = sadd.s32 %s184, 1
      %p188 = scmp.eq.s32.totalorder %s24, 1
      %p189 = scmp.ne.s32.totalorder %s184, %s186
      %p190 = scmp.eq.s32.totalorder %s24, 0
      %p191 = por %p189, %p190
      %p192 = scmp.ne.s32.totalorder %s184, %s186
      %p193 = scmp.eq.s32.totalorder %s29, 1
      %p194 = por %p192, %p193
      %p195 = scmp.ne.s32.totalorder %s186, %s187
      %p196 = scmp.eq.s32.totalorder %s29, 0
      %p197 = por %p195, %p196
      %p198 = scmp.ne.s32.totalorder %s186, %s187
      %p199 = scmp.eq.s32.totalorder %s30, 1
      %p200 = por %p198, %p199
      %p202 = scmp.ne.s32.totalorder %s187, %s201
      %p203 = scmp.eq.s32.totalorder %s30, 0
      %p204 = por %p202, %p203
      %s206 = sadd.s32 %s205, 1
      %p209 = scmp.eq.s32.totalorder %s24, 1
      %p210 = scmp.ne.s32.totalorder %s205, %s207
      %p211 = scmp.eq.s32.totalorder %s24, 0
      %p212 = por %p210, %p211
      %p213 = scmp.ne.s32.totalorder %s205, %s207
      %p214 = scmp.eq.s32.totalorder %s29, 1
      %p215 = por %p213, %p214
      %p216 = scmp.ne.s32.totalorder %s207, %s208
      %p217 = scmp.eq.s32.totalorder %s29, 0
      %p218 = por %p216, %p217
      %p219 = scmp.ne.s32.totalorder %s207, %s208
      %p220 = scmp.eq.s32.totalorder %s30, 1
      %p221 = por %p219, %p220
      %p223 = scmp.ne.s32.totalorder %s208, %s222
      %p224 = scmp.eq.s32.totalorder %s30, 0
      %p225 = por %p223, %p224
      %s227 = sadd.s32 %s226, 1
      %p230 = scmp.eq.s32.totalorder %s24, 1
      %p231 = scmp.ne.s32.totalorder %s226, %s228
      %p232 = scmp.eq.s32.totalorder %s24, 0
      %p233 = por %p231, %p232
      %p234 = scmp.ne.s32.totalorder %s226, %s228
      %p235 = scmp.eq.s32.totalorder %s29, 1
      %p236 = por %p234, %p235
      %p237 = scmp.ne.s32.totalorder %s228, %s229
      %p238 = scmp.eq.s32.totalorder %s29, 0
      %p239 = por %p237, %p238
      %p240 = scmp.ne.s32.totalorder %s228, %s229
      %p241 = scmp.eq.s32.totalorder %s30, 1
      %p242 = por %p240, %p241
      %p244 = scmp.ne.s32.totalorder %s229, %s243
      %p245 = scmp.eq.s32.totalorder %s30, 0
      %p246 = por %p244, %p245
      %s248 = sadd.s32 %s247, 1
      %p251 = scmp.eq.s32.totalorder %s24, 1
      %p252 = scmp.ne.s32.totalorder %s247, %s249
      %p253 = scmp.eq.s32.totalorder %s24, 0
      %p254 = por %p252, %p253
      %p255 = scmp.ne.s32.totalorder %s247, %s249
      %p256 = scmp.eq.s32.totalorder %s29, 1
      %p257 = por %p255, %p256
      %p258 = scmp.ne.s32.totalorder %s249, %s250
      %p259 = scmp.eq.s32.totalorder %s29, 0
      %p260 = por %p258, %p259
      %p261 = scmp.ne.s32.totalorder %s249, %s250
      %p262 = scmp.eq.s32.totalorder %s30, 1
      %p263 = por %p261, %p262
      %p265 = scmp.ne.s32.totalorder %s250, %s264
      %p266 = scmp.eq.s32.totalorder %s30, 0
      %p267 = por %p265, %p266
      %s269 = sadd.s32 %s268, 1
      %p272 = scmp.eq.s32.totalorder %s24, 1
      %p273 = scmp.ne.s32.totalorder %s268, %s270
      %p274 = scmp.eq.s32.totalorder %s24, 0
      %p275 = por %p273, %p274
      %p276 = scmp.ne.s32.totalorder %s268, %s270
      %p277 = scmp.eq.s32.totalorder %s29, 1
      %p278 = por %p276, %p277
      %p279 = scmp.ne.s32.totalorder %s270, %s271
      %p280 = scmp.eq.s32.totalorder %s29, 0
      %p281 = por %p279, %p280
      %p282 = scmp.ne.s32.totalorder %s270, %s271
      %p283 = scmp.eq.s32.totalorder %s30, 1
      %p284 = por %p282, %p283
      %p286 = scmp.ne.s32.totalorder %s271, %s285
      %p287 = scmp.eq.s32.totalorder %s30, 0
      %p288 = por %p286, %p287
      %s290 = sadd.s32 %s289, 1
      %p293 = scmp.eq.s32.totalorder %s24, 1
      %p294 = scmp.ne.s32.totalorder %s289, %s291
      %p295 = scmp.eq.s32.totalorder %s24, 0
      %p296 = por %p294, %p295
      %p297 = scmp.ne.s32.totalorder %s289, %s291
      %p298 = scmp.eq.s32.totalorder %s29, 1
      %p299 = por %p297, %p298
      %p300 = scmp.ne.s32.totalorder %s291, %s292
      %p301 = scmp.eq.s32.totalorder %s29, 0
      %p302 = por %p300, %p301
      %p303 = scmp.ne.s32.totalorder %s291, %s292
      %p304 = scmp.eq.s32.totalorder %s30, 1
      %p305 = por %p303, %p304
      %p307 = scmp.ne.s32.totalorder %s292, %s306
      %p308 = scmp.eq.s32.totalorder %s30, 0
      %p309 = por %p307, %p308
      %s310 = ssub.s32 %s24, %s31
      %p311 = scmp.eq.s32.totalorder %s310, 0
      %s313 = sadd.s32 %s312, 1
      %s314 = scalar_select %p311, %s312, %s313
      %p317 = pneg %p311
      %p318 = scmp.eq.s32.totalorder %s24, 1
      %p319 = por %p317, %p318
      %p320 = scmp.ne.s32.totalorder %s312, %s315
      %p321 = scmp.eq.s32.totalorder %s24, 0
      %p322 = por %p320, %p321
      %p323 = scmp.ne.s32.totalorder %s312, %s315
      %p324 = scmp.eq.s32.totalorder %s29, 1
      %p325 = por %p323, %p324
      %p326 = scmp.ne.s32.totalorder %s315, %s316
      %p327 = scmp.eq.s32.totalorder %s29, 0
      %p328 = por %p326, %p327
      %p329 = scmp.ne.s32.totalorder %s315, %s316
      %p330 = scmp.eq.s32.totalorder %s30, 1
      %p331 = por %p329, %p330
      %p333 = scmp.ne.s32.totalorder %s316, %s332
      %p334 = scmp.eq.s32.totalorder %s30, 0
      %p335 = por %p333, %p334
      %s336 = ssub.s32 %s24, %s31
      %p337 = scmp.eq.s32.totalorder %s336, 0
      %s339 = sadd.s32 %s338, 1
      %s340 = scalar_select %p337, %s338, %s339
      %p343 = pneg %p337
      %p344 = scmp.eq.s32.totalorder %s24, 1
      %p345 = por %p343, %p344
      %p346 = scmp.ne.s32.totalorder %s338, %s341
      %p347 = scmp.eq.s32.totalorder %s24, 0
      %p348 = por %p346, %p347
      %p349 = scmp.ne.s32.totalorder %s338, %s341
      %p350 = scmp.eq.s32.totalorder %s29, 1
      %p351 = por %p349, %p350
      %p352 = scmp.ne.s32.totalorder %s341, %s342
      %p353 = scmp.eq.s32.totalorder %s29, 0
      %p354 = por %p352, %p353
      %p355 = scmp.ne.s32.totalorder %s341, %s342
      %p356 = scmp.eq.s32.totalorder %s30, 1
      %p357 = por %p355, %p356
      %p359 = scmp.ne.s32.totalorder %s342, %s358
      %p360 = scmp.eq.s32.totalorder %s30, 0
      %p361 = por %p359, %p360
      %p362 = scmp.le.s32.totalorder 1, %s24
      %p363 = scmp.lt.s32.totalorder %s24, 3
      %p364 = pnand %p362, %p363
      %p365 = pneg %p364
      // Predicated region
      $region9: #{_lambda_.7} parent=5 // pred_check
        _
      $region10: #{_lambda_.7} parent=5 // pred_check_branch
        %367 = sbr.rel (%p364) target = $region12
      $region11: #{_lambda_.7} parent=5 // pred_region
        %s368 = ssub.s32 %s24, 1
        // Predicated region
        $region13: #{_lambda_.7} parent=11 // pred_check
          %p369 = pneg %p71
        $region14: #{_lambda_.7} parent=11 // pred_check_branch
          %371 = sbr.rel (%p369) target = $region16
        $region15: #{_lambda_.7} parent=11 // pred_region
          _
        $region16: #{_lambda_.7} parent=11 // pred_fallthru
          _
        // Predicated region
        $region17: #{_lambda_.7} parent=11 // pred_check
          %p372 = pneg %p92
        $region18: #{_lambda_.7} parent=11 // pred_check_branch
          %374 = sbr.rel (%p372) target = $region20
        $region19: #{_lambda_.7} parent=11 // pred_region
          _
        $region20: #{_lambda_.7} parent=11 // pred_fallthru
          _
        // Predicated region
        $region21: #{_lambda_.7} parent=11 // pred_check
          %p375 = pneg %p113
        $region22: #{_lambda_.7} parent=11 // pred_check_branch
          %377 = sbr.rel (%p375) target = $region24
        $region23: #{_lambda_.7} parent=11 // pred_region
          _
        $region24: #{_lambda_.7} parent=11 // pred_fallthru
          _
        // Predicated region
        $region25: #{_lambda_.7} parent=11 // pred_check
          %p378 = pneg %p134
        $region26: #{_lambda_.7} parent=11 // pred_check_branch
          %380 = sbr.rel (%p378) target = $region28
        $region27: #{_lambda_.7} parent=11 // pred_region
          _
        $region28: #{_lambda_.7} parent=11 // pred_fallthru
          _
        // Predicated region
        $region29: #{_lambda_.7} parent=11 // pred_check
          %p381 = pneg %p155
        $region30: #{_lambda_.7} parent=11 // pred_check_branch
          %383 = sbr.rel (%p381) target = $region32
        $region31: #{_lambda_.7} parent=11 // pred_region
          _
        $region32: #{_lambda_.7} parent=11 // pred_fallthru
          _
        // Predicated region
        $region33: #{_lambda_.7} parent=11 // pred_check
          %p384 = pneg %p176
        $region34: #{_lambda_.7} parent=11 // pred_check_branch
          %386 = sbr.rel (%p384) target = $region36
        $region35: #{_lambda_.7} parent=11 // pred_region
          _
        $region36: #{_lambda_.7} parent=11 // pred_fallthru
          _
        // Predicated region
        $region37: #{_lambda_.7} parent=11 // pred_check
          %p387 = pneg %p197
        $region38: #{_lambda_.7} parent=11 // pred_check_branch
          %389 = sbr.rel (%p387) target = $region40
        $region39: #{_lambda_.7} parent=11 // pred_region
          _
        $region40: #{_lambda_.7} parent=11 // pred_fallthru
          _
        // Predicated region
        $region41: #{_lambda_.7} parent=11 // pred_check
          %p390 = pneg %p218
        $region42: #{_lambda_.7} parent=11 // pred_check_branch
          %392 = sbr.rel (%p390) target = $region44
        $region43: #{_lambda_.7} parent=11 // pred_region
          _
        $region44: #{_lambda_.7} parent=11 // pred_fallthru
          _
        // Predicated region
        $region45: #{_lambda_.7} parent=11 // pred_check
          %p393 = pneg %p239
        $region46: #{_lambda_.7} parent=11 // pred_check_branch
          %395 = sbr.rel (%p393) target = $region48
        $region47: #{_lambda_.7} parent=11 // pred_region
          _
        $region48: #{_lambda_.7} parent=11 // pred_fallthru
          _
        // Predicated region
        $region49: #{_lambda_.7} parent=11 // pred_check
          %p396 = pneg %p260
        $region50: #{_lambda_.7} parent=11 // pred_check_branch
          %398 = sbr.rel (%p396) target = $region52
        $region51: #{_lambda_.7} parent=11 // pred_region
          _
        $region52: #{_lambda_.7} parent=11 // pred_fallthru
          _
        // Predicated region
        $region53: #{_lambda_.7} parent=11 // pred_check
          %p399 = pneg %p281
        $region54: #{_lambda_.7} parent=11 // pred_check_branch
          %401 = sbr.rel (%p399) target = $region56
        $region55: #{_lambda_.7} parent=11 // pred_region
          _
        $region56: #{_lambda_.7} parent=11 // pred_fallthru
          _
        // Predicated region
        $region57: #{_lambda_.7} parent=11 // pred_check
          %p402 = pneg %p302
        $region58: #{_lambda_.7} parent=11 // pred_check_branch
          %404 = sbr.rel (%p402) target = $region60
        $region59: #{_lambda_.7} parent=11 // pred_region
          _
        $region60: #{_lambda_.7} parent=11 // pred_fallthru
          _
      $region12: #{_lambda_.7} parent=5 // pred_fallthru
        _
      %p405 = scmp.lt.s32.totalorder %s24, 2
      // Predicated region
      $region61: #{_lambda_.7} parent=5 // pred_check
        %p406 = pneg %p405
      $region62: #{_lambda_.7} parent=5 // pred_check_branch
        %408 = sbr.rel (%p406) target = $region64
      $region63: #{_lambda_.7} parent=5 // pred_region
        // Predicated region
        $region65: #{_lambda_.7} parent=63 // pred_check
          %p409 = pneg %p44
        $region66: #{_lambda_.7} parent=63 // pred_check_branch
          %411 = sbr.rel (%p409) target = $region68
        $region67: #{_lambda_.7} parent=63 // pred_region
          %s412 = smul.u32 3, %s24
          %p413 = scmp.lt.s32.totalorder %s412, 5
          %s414 = scalar_select %p413, %s412, 5
          %s415 = smul.addr %s414, 8
          %s416 = scalar_lea.vmem %s0, %s415
          %s417 = smul.u32 3, %s24
        $region68: #{_lambda_.7} parent=63 // pred_fallthru
          _
      $region64: #{_lambda_.7} parent=5 // pred_fallthru
        _
      %p418 = scmp.le.s32.totalorder 1, %s24
      %p419 = scmp.lt.s32.totalorder %s24, 3
      %p420 = pnand %p418, %p419
      %p421 = pneg %p420
      // Predicated region
      $region69: #{_lambda_.7} parent=5 // pred_check
        _
      $region70: #{_lambda_.7} parent=5 // pred_check_branch
        %423 = sbr.rel (%p420) target = $region72
      $region71: #{_lambda_.7} parent=5 // pred_region
        %s424 = ssub.s32 %s24, 1
        %s425 = smul.u32 3, %s29
        %p426 = scmp.lt.s32.totalorder %s425, 5
        %s427 = scalar_select %p426, %s425, 5
        %s428 = smul.addr %s427, 8
        %s429 = scalar_lea.vmem %s0, %s428
        %p430 = pneg %p50
        %p431 = pneg %p47
        %p432 = pneg %p71
        %p433 = pneg %p68
        %p434 = pneg %p92
        %p435 = pneg %p89
        %p436 = pneg %p113
        %p437 = pneg %p110
        %p438 = pneg %p134
        %p439 = pneg %p131
        %p440 = pneg %p155
        %p441 = pneg %p152
        %p442 = pneg %p176
        %p443 = pneg %p173
        %p444 = pneg %p197
        %p445 = pneg %p194
        %p446 = pneg %p218
        %p447 = pneg %p215
        %p448 = pneg %p239
        %p449 = pneg %p236
        %p450 = pneg %p260
        %p451 = pneg %p257
        %p452 = pneg %p281
        %p453 = pneg %p278
        %p454 = pneg %p302
        %p455 = pneg %p299
        %p456 = pneg %p328
        %p457 = pneg %p325
        %s458 = smul.u32 3, %s29
        %p459 = scmp.lt.s32.totalorder %s458, 5
        %s460 = scalar_select %p459, %s458, 5
        %s461 = smul.addr %s460, 8
        %s462 = scalar_lea.vmem %s13, %s461
        %p463 = pneg %p354
        %p464 = pneg %p351
        %s465 = sand.u32 %s341, 1
        %s466 = scalar_lea.sflag [#allocation3], %s465
        %s467 = sand.u32 %s341, 1
        %s468 = smul.addr %s467, 96
        %s469 = scalar_lea.vmem [#allocation2], %s468
        %s470 = smul.u32 3, %s29
        %p471 = scmp.lt.s32.totalorder %s470, 5
        %s472 = scalar_select %p471, %s470, 5
        %s473 = smul.addr %s472, 8
        %s474 = scalar_lea.vmem %s0, %s473
        %s475 = smul.u32 3, %s29
        %s476 = smul.u32 3, %s29
        %p477 = scmp.lt.s32.totalorder %s476, 5
        %s478 = scalar_select %p477, %s476, 5
        %s479 = smul.addr %s478, 8
        %s480 = scalar_lea.vmem %s13, %s479
        %s481 = smul.u32 3, %s29
        %v483 = vld [vmem:[%s474] sm:$0xff]
        %v484 = vld [vmem:[%s474 + $0x8] sm:$0xff]
        %v485 = vld [vmem:[%s474 + $0x10] sm:$0xff]
        %v486 = vld [vmem:[%s1] sm:$0x1]
        %v487 = vld [vmem:[%s2] sm:$0x1]
        %vm488 = vcmask 261120
        %v489 = vsel %vm488, %v483, 0.0
        %490 = vadd.xlane.f32.xlu0 %v489
        %v491 = vpop.xlane.xlu0 %490
        %v492 = vsel %vm488, %v484, 0.0
        %493 = vadd.xlane.f32.xlu0 %v492
        %v494 = vpop.xlane.xlu0 %493
        %v495 = vsel %vm488, %v485, 0.0
        %496 = vadd.xlane.f32.xlu0 %v495
        %v497 = vpop.xlane.xlu0 %496
        %v498 = vrcp.pop 32.0
        %v499 = vmul.f32 %v491, %v498
        %v500 = vmul.f32 %v494, %v498
        %v501 = vmul.f32 %v497, %v498
        %v502 = vsub.f32 %v483, %v499
        %v503 = vsub.f32 %v484, %v500
        %v504 = vsub.f32 %v485, %v501
        %v505 = vmul.f32 %v502, %v502
        %v506 = vmul.f32 %v503, %v503
        %v507 = vmul.f32 %v504, %v504
        %v508 = vsel %vm488, %v505, 0.0
        %509 = vadd.xlane.f32.xlu0 %v508
        %v510 = vpop.xlane.xlu0 %509
        %v511 = vsel %vm488, %v506, 0.0
        %512 = vadd.xlane.f32.xlu0 %v511
        %v513 = vpop.xlane.xlu0 %512
        %v514 = vsel %vm488, %v507, 0.0
        %515 = vadd.xlane.f32.xlu0 %v514
        %v516 = vpop.xlane.xlu0 %515
        %v517 = vmul.f32 %v510, %v498
        %v518 = vmul.f32 %v513, %v498
        %v519 = vmul.f32 %v516, %v498
        %v520 = vadd.f32 %v517, 1e-05
        %v521 = vadd.f32 %v518, 1e-05
        %v522 = vadd.f32 %v519, 1e-05
        %v523 = vrsqrt.pop %v520
        %v524 = vrsqrt.pop %v521
        %v525 = vrsqrt.pop %v522
        %v526 = vmul.f32 %v502, %v523
        %v527 = vmul.f32 %v503, %v524
        %v528 = vmul.f32 %v504, %v525
        %v530 = vlaneseq
        %v531 = vshrl.u32 %v530, 7
        %v532 = vsub.s32 0, %v531
        %v533 = vrot.slane %v486, %v532
        %v535 = vmul.f32 %v526, %v533
        %v536 = vmul.f32 %v527, %v533
        %v537 = vmul.f32 %v528, %v533
        %v539 = vlaneseq
        %v540 = vshrl.u32 %v539, 7
        %v541 = vsub.s32 0, %v540
        %v542 = vrot.slane %v487, %v541
        %v544 = vadd.f32 %v535, %v542
        %v545 = vadd.f32 %v536, %v542
        %v546 = vadd.f32 %v537, %v542
        %v547 = vld [vmem:[%s3] sm:$0xf]
        %v548 = vld [vmem:[%s3 + $0x4] sm:$0xf]
        %v549 = vld [vmem:[%s3 + $0x8] sm:$0xf]
        %v550 = vld [vmem:[%s3 + $0xc] sm:$0xf]
        %v551 = vpack.c.bf16 %v545, %v544
        %v552 = vpack.c.bf16 %v546, %v546
        %v553 = vld [vmem:[%s4] sm:$0x1]
        %v555 = vlaneseq
        %v556 = vshrl.u32 %v555, 7
        %v557 = vsub.s32 0, %v556
        %v558 = vrot.slane %v553, %v557
        %v564 = vunpack.c.l.b16 %v547
        %v565 = vunpack.c.l.b16 %v548
        %v566 = vunpack.c.l.b16 %v549
        %v567 = vunpack.c.l.b16 %v550
        %v568 = vpack.c.b16 %v565, %v564
        %v569 = vpack.c.b16 %v567, %v566
        %v573 = vsel %vm488, %v551, 0
        %v576 = vsel %vm488, %v552, 0
        %578 = vmatprep.subr.bf16.mxu0 0
        %579 = vmatpush1.bf16.msra.mxu0 %v568
        %580 = vmatprep.subr.bf16.mxu0 0
        %581 = vmatpush1.bf16.msra.mxu0 %v569
        %582 = vmatprep.subr.bf16.mxu0 0
        %583 = vmatpush1.bf16.msra.mxu0 0
        %584 = vmatprep.subr.bf16.mxu0 0
        %585 = vmatpush1.bf16.msra.mxu0 0
        %586 = vmatprep.subr.bf16.mxu0 0
        %587 = vmatpush1.bf16.msra.mxu0 0
        %588 = vmatprep.subr.bf16.mxu0 0
        %589 = vmatpush1.bf16.msra.mxu0 0
        %590 = vmatprep.subr.bf16.mxu0 0
        %591 = vmatpush1.bf16.msra.mxu0 0
        %592 = vmatprep.subr.bf16.mxu0 0
        %593 = vmatpush1.bf16.msra.mxu0 0
        %594 = vmatprep.subr.bf16.mxu0 0
        %595 = vmatpush1.bf16.msra.mxu0 0
        %596 = vmatprep.subr.bf16.mxu0 0
        %597 = vmatpush1.bf16.msra.mxu0 0
        %598 = vmatprep.subr.bf16.mxu0 0
        %599 = vmatpush1.bf16.msra.mxu0 0
        %600 = vmatprep.subr.bf16.mxu0 0
        %601 = vmatpush1.bf16.msra.mxu0 0
        %602 = vmatprep.subr.bf16.mxu0 0
        %603 = vmatpush1.bf16.msra.mxu0 0
        %604 = vmatprep.subr.bf16.mxu0 0
        %605 = vmatpush1.bf16.msra.mxu0 0
        %606 = vmatprep.subr.bf16.mxu0 0
        %607 = vmatpush1.bf16.msra.mxu0 0
        %608 = vmatprep.subr.bf16.mxu0 0
        %609 = vmatpush1.bf16.msra.mxu0 0
        %610 = vmatprep.mubr.bf16.mxu0 0
        %611 = vmatmul.mubr.bf16.gmra.mrb[0].mxu0 %v573
        %v612 = vpop.f32.mrb[0].mxu0
        %v613 = vadd.f32 %v558, %v612
        %v614 = vpop.f32.mrb[0].mxu0
        %v615 = vpop.f32.mrb[0].mxu0
        %v616 = vadd.f32 %v558, %v615
        %v617 = vpop.f32.mrb[0].mxu0
        %618 = vmatprep.mubr.bf16.mxu0 0
        %619 = vmatmul.mubr.bf16.gmra.mrb[0].mxu0 %v576
        %v620 = vpop.f32.mrb[0].mxu0
        %v621 = vadd.f32 %v558, %v620
        %v622 = vpop.f32.mrb[0].mxu0
        %v623 = vpop.f32.mrb[0].mxu0
        %v624 = vpop.f32.mrb[0].mxu0
        %625 = vdwg.mxu0
        %v626 = vlaneseq
        %v627 = vshrl.u32 %v626, 7
        %v628 = vadd.s32 %v627, 8
        %v629 = vadd.s32 %v627, 16
        %v630 = vlaneseq
        %v631 = vand.u32 %v630, 127
        %vm632 = vcmp.ge.s32.totalorder %v627, %v631
        %vm633 = vcmp.ge.s32.totalorder %v628, %v631
        %vm634 = vcmp.ge.s32.totalorder %v629, %v631
        %v635 = vpack.c.bf16 %v616, %v613
        %v636 = vpack.c.bf16 %v621, %v621
        %639 = vrot.lane.b32.xlu0 %v635, 96
        %v640 = vpop.permute.xlu0 %639
        %641 = vrot.lane.b32.xlu0 %v636, 96
        %v642 = vpop.permute.xlu0 %641
        %vm643 = vcmask 64512
        %v645 = vsel %vm643, %v635, 0
        %v648 = vsel %vm643, %v636, 0
        %v651 = vsel %vm643, %v640, 0
        %v654 = vsel %vm643, %v642, 0
        %656 = vmatprep.subr.bf16.mxu0 0
        %657 = vmatpush1.bf16.xpose.msra.mxu0 %v651
        %658 = vmatprep.subr.bf16.mxu0 0
        %659 = vmatpush1.bf16.xpose.msra.mxu0 %v654
        %660 = vmatprep.subr.bf16.mxu0 0
        %661 = vmatpush1.bf16.xpose.msra.mxu0 0
        %662 = vmatprep.subr.bf16.mxu0 0
        %663 = vmatpush1.bf16.xpose.msra.mxu0 0
        %664 = vmatprep.subr.bf16.mxu0 0
        %665 = vmatpush1.bf16.xpose.msra.mxu0 0
        %666 = vmatprep.subr.bf16.mxu0 0
        %667 = vmatpush1.bf16.xpose.msra.mxu0 0
        %668 = vmatprep.subr.bf16.mxu0 0
        %669 = vmatpush1.bf16.xpose.msra.mxu0 0
        %670 = vmatprep.subr.bf16.mxu0 0
        %671 = vmatpush1.bf16.xpose.msra.mxu0 0
        %672 = vmatprep.subr.bf16.mxu0 0
        %673 = vmatpush1.bf16.xpose.msra.mxu0 0
        %674 = vmatprep.subr.bf16.mxu0 0
        %675 = vmatpush1.bf16.xpose.msra.mxu0 0
        %676 = vmatprep.subr.bf16.mxu0 0
        %677 = vmatpush1.bf16.xpose.msra.mxu0 0
        %678 = vmatprep.subr.bf16.mxu0 0
        %679 = vmatpush1.bf16.xpose.msra.mxu0 0
        %680 = vmatprep.subr.bf16.mxu0 0
        %681 = vmatpush1.bf16.xpose.msra.mxu0 0
        %682 = vmatprep.subr.bf16.mxu0 0
        %683 = vmatpush1.bf16.xpose.msra.mxu0 0
        %684 = vmatprep.subr.bf16.mxu0 0
        %685 = vmatpush1.bf16.xpose.msra.mxu0 0
        %686 = vmatprep.subr.bf16.mxu0 0
        %687 = vmatpush1.bf16.xpose.msra.mxu0 0
        %688 = vmatprep.mubr.bf16.mxu0 0
        %689 = vmatmul.mubr.bf16.gmra.mrb[0].mxu0 %v645
        %v690 = vpop.f32.mrb[0].mxu0
        %v691 = vadd.f32 0.0, %v690
        %v692 = vpop.f32.mrb[0].mxu0
        %v693 = vpop.f32.mrb[0].mxu0
        %v694 = vadd.f32 0.0, %v693
        %v695 = vpop.f32.mrb[0].mxu0
        %696 = vmatprep.mubr.bf16.mxu0 0
        %697 = vmatmul.mubr.bf16.gmra.mrb[0].mxu0 %v648
        %v698 = vpop.f32.mrb[0].mxu0
        %v699 = vadd.f32 0.0, %v698
        %v700 = vpop.f32.mrb[0].mxu0
        %v701 = vpop.f32.mrb[0].mxu0
        %v702 = vpop.f32.mrb[0].mxu0
        %703 = vdwg.mxu0
        %v704 = vmul.f32 %v691, 0.35355338
        %v705 = vmul.f32 %v694, 0.35355338
        %v706 = vmul.f32 %v699, 0.35355338
        %v707 = vsel %vm632, %v704, -1e+30
        %v708 = vsel %vm633, %v705, -1e+30
        %v709 = vsel %vm634, %v706, -1e+30
        %vm710 = vcmask 195584
        %v711 = vsel %vm710, %v707, -inf
        %712 = vmax.xlane.f32.xlu0 %v711
        %v713 = vpop.xlane.xlu0 %712
        %v714 = vsel %vm710, %v708, -inf
        %715 = vmax.xlane.f32.xlu0 %v714
        %v716 = vpop.xlane.xlu0 %715
        %v717 = vsel %vm710, %v709, -inf
        %718 = vmax.xlane.f32.xlu0 %v717
        %v719 = vpop.xlane.xlu0 %718
        %v720 = vsub.f32 %v707, %v713
        %v721 = vsub.f32 %v708, %v716
        %v722 = vsub.f32 %v709, %v719
        %v723 = vmul.f32 %v720, 1.442695
        %v724 = vpow.pop %v723
        %v725 = vmul.f32 %v721, 1.442695
        %v726 = vpow.pop %v725
        %v727 = vmul.f32 %v722, 1.442695
        %v728 = vpow.pop %v727
        %v729 = vsel %vm710, %v724, 0.0
        %730 = vadd.xlane.f32.xlu0 %v729
        %v731 = vpop.xlane.xlu0 %730
        %v732 = vsel %vm710, %v726, 0.0
        %733 = vadd.xlane.f32.xlu0 %v732
        %v734 = vpop.xlane.xlu0 %733
        %v735 = vsel %vm710, %v728, 0.0
        %736 = vadd.xlane.f32.xlu0 %v735
        %v737 = vpop.xlane.xlu0 %736
        %v738 = vrcp.pop %v731
        %v739 = vrcp.pop %v734
        %v740 = vrcp.pop %v737
        %v741 = vmul.f32 %v724, %v738
        %v742 = vmul.f32 %v726, %v739
        %v743 = vmul.f32 %v728, %v740
        %744 = vst.msk [vmem:[%s469] sm:$0xff] %vm710, %v741
        %745 = vst.msk [vmem:[%s469 + $0x8] sm:$0xff] %vm710, %v742
        %746 = vst.msk [vmem:[%s469 + $0x10] sm:$0xff] %vm710, %v743
        %v747 = vpack.c.bf16 %v742, %v741
        %v748 = vpack.c.bf16 %v743, %v743
        %749 = vrot.lane.b32.xlu0 %v635, 64
        %v750 = vpop.permute.xlu0 %749
        %751 = vrot.lane.b32.xlu0 %v636, 64
        %v752 = vpop.permute.xlu0 %751
        %v755 = vsel %vm710, %v747, 0
        %v758 = vsel %vm710, %v748, 0
        %vm760 = vcmask 1043456
        %v762 = vsel %vm760, %v752, 0
        %764 = vmatprep.subr.bf16.mxu0 0
        %765 = vmatpush1.bf16.msra.mxu0 %v750
        %766 = vmatprep.subr.bf16.mxu0 0
        %767 = vmatpush1.bf16.msra.mxu0 %v762
        %768 = vmatprep.subr.bf16.mxu0 0
        %769 = vmatpush1.bf16.msra.mxu0 0
        %770 = vmatprep.subr.bf16.mxu0 0
        %771 = vmatpush1.bf16.msra.mxu0 0
        %772 = vmatprep.subr.bf16.mxu0 0
        %773 = vmatpush1.bf16.msra.mxu0 0
        %774 = vmatprep.subr.bf16.mxu0 0
        %775 = vmatpush1.bf16.msra.mxu0 0
        %776 = vmatprep.subr.bf16.mxu0 0
        %777 = vmatpush1.bf16.msra.mxu0 0
        %778 = vmatprep.subr.bf16.mxu0 0
        %779 = vmatpush1.bf16.msra.mxu0 0
        %780 = vmatprep.subr.bf16.mxu0 0
        %781 = vmatpush1.bf16.msra.mxu0 0
        %782 = vmatprep.subr.bf16.mxu0 0
        %783 = vmatpush1.bf16.msra.mxu0 0
        %784 = vmatprep.subr.bf16.mxu0 0
        %785 = vmatpush1.bf16.msra.mxu0 0
        %786 = vmatprep.subr.bf16.mxu0 0
        %787 = vmatpush1.bf16.msra.mxu0 0
        %788 = vmatprep.subr.bf16.mxu0 0
        %789 = vmatpush1.bf16.msra.mxu0 0
        %790 = vmatprep.subr.bf16.mxu0 0
        %791 = vmatpush1.bf16.msra.mxu0 0
        %792 = vmatprep.subr.bf16.mxu0 0
        %793 = vmatpush1.bf16.msra.mxu0 0
        %794 = vmatprep.subr.bf16.mxu0 0
        %795 = vmatpush1.bf16.msra.mxu0 0
        %796 = vmatprep.mubr.bf16.mxu0 0
        %797 = vmatmul.mubr.bf16.gmra.mrb[0].mxu0 %v755
        %v798 = vpop.f32.mrb[0].mxu0
        %v799 = vadd.f32 0.0, %v798
        %v800 = vpop.f32.mrb[0].mxu0
        %v801 = vpop.f32.mrb[0].mxu0
        %v802 = vadd.f32 0.0, %v801
        %v803 = vpop.f32.mrb[0].mxu0
        %804 = vmatprep.mubr.bf16.mxu0 0
        %805 = vmatmul.mubr.bf16.gmra.mrb[0].mxu0 %v758
        %v806 = vpop.f32.mrb[0].mxu0
        %v807 = vadd.f32 0.0, %v806
        %v808 = vpop.f32.mrb[0].mxu0
        %v809 = vpop.f32.mrb[0].mxu0
        %v810 = vpop.f32.mrb[0].mxu0
        %811 = vdwg.mxu0
        %812 = vrot.lane.b32.xlu0 %v635, 120
        %v813 = vpop.permute.xlu0 %812
        %814 = vrot.lane.b32.xlu0 %v636, 120
        %v815 = vpop.permute.xlu0 %814
        %816 = vrot.lane.b32.xlu0 %v635, 88
        %v817 = vpop.permute.xlu0 %816
        %818 = vrot.lane.b32.xlu0 %v636, 88
        %v819 = vpop.permute.xlu0 %818
        %v821 = vsel %vm643, %v813, 0
        %v824 = vsel %vm643, %v815, 0
        %v827 = vsel %vm643, %v817, 0
        %v830 = vsel %vm643, %v819, 0
        %832 = vmatprep.subr.bf16.mxu0 0
        %833 = vmatpush1.bf16.xpose.msra.mxu0 %v827
        %834 = vmatprep.subr.bf16.mxu0 0
        %835 = vmatpush1.bf16.xpose.msra.mxu0 %v830
        %836 = vmatprep.subr.bf16.mxu0 0
        %837 = vmatpush1.bf16.xpose.msra.mxu0 0
        %838 = vmatprep.subr.bf16.mxu0 0
        %839 = vmatpush1.bf16.xpose.msra.mxu0 0
        %840 = vmatprep.subr.bf16.mxu0 0
        %841 = vmatpush1.bf16.xpose.msra.mxu0 0
        %842 = vmatprep.subr.bf16.mxu0 0
        %843 = vmatpush1.bf16.xpose.msra.mxu0 0
        %844 = vmatprep.subr.bf16.mxu0 0
        %845 = vmatpush1.bf16.xpose.msra.mxu0 0
        %846 = vmatprep.subr.bf16.mxu0 0
        %847 = vmatpush1.bf16.xpose.msra.mxu0 0
        %848 = vmatprep.subr.bf16.mxu0 0
        %849 = vmatpush1.bf16.xpose.msra.mxu0 0
        %850 = vmatprep.subr.bf16.mxu0 0
        %851 = vmatpush1.bf16.xpose.msra.mxu0 0
        %852 = vmatprep.subr.bf16.mxu0 0
        %853 = vmatpush1.bf16.xpose.msra.mxu0 0
        %854 = vmatprep.subr.bf16.mxu0 0
        %855 = vmatpush1.bf16.xpose.msra.mxu0 0
        %856 = vmatprep.subr.bf16.mxu0 0
        %857 = vmatpush1.bf16.xpose.msra.mxu0 0
        %858 = vmatprep.subr.bf16.mxu0 0
        %859 = vmatpush1.bf16.xpose.msra.mxu0 0
        %860 = vmatprep.subr.bf16.mxu0 0
        %861 = vmatpush1.bf16.xpose.msra.mxu0 0
        %862 = vmatprep.subr.bf16.mxu0 0
        %863 = vmatpush1.bf16.xpose.msra.mxu0 0
        %864 = vmatprep.mubr.bf16.mxu0 0
        %865 = vmatmul.mubr.bf16.gmra.mrb[0].mxu0 %v821
        %v866 = vpop.f32.mrb[0].mxu0
        %v867 = vadd.f32 0.0, %v866
        %v868 = vpop.f32.mrb[0].mxu0
        %v869 = vpop.f32.mrb[0].mxu0
        %v870 = vadd.f32 0.0, %v869
        %v871 = vpop.f32.mrb[0].mxu0
        %872 = vmatprep.mubr.bf16.mxu0 0
        %873 = vmatmul.mubr.bf16.gmra.mrb[0].mxu0 %v824
        %v874 = vpop.f32.mrb[0].mxu0
        %v875 = vadd.f32 0.0, %v874
        %v876 = vpop.f32.mrb[0].mxu0
        %v877 = vpop.f32.mrb[0].mxu0
        %v878 = vpop.f32.mrb[0].mxu0
        %879 = vdwg.mxu0
        %v880 = vmul.f32 %v867, 0.35355338
        %v881 = vmul.f32 %v870, 0.35355338
        %v882 = vmul.f32 %v875, 0.35355338
        %v883 = vsel %vm632, %v880, -1e+30
        %v884 = vsel %vm633, %v881, -1e+30
        %v885 = vsel %vm634, %v882, -1e+30
        %v886 = vsel %vm710, %v883, -inf
        %887 = vmax.xlane.f32.xlu0 %v886
        %v888 = vpop.xlane.xlu0 %887
        %v889 = vsel %vm710, %v884, -inf
        %890 = vmax.xlane.f32.xlu0 %v889
        %v891 = vpop.xlane.xlu0 %890
        %v892 = vsel %vm710, %v885, -inf
        %893 = vmax.xlane.f32.xlu0 %v892
        %v894 = vpop.xlane.xlu0 %893
        %v895 = vsub.f32 %v883, %v888
        %v896 = vsub.f32 %v884, %v891
        %v897 = vsub.f32 %v885, %v894
        %v898 = vmul.f32 %v895, 1.442695
        %v899 = vpow.pop %v898
        %v900 = vmul.f32 %v896, 1.442695
        %v901 = vpow.pop %v900
        %v902 = vmul.f32 %v897, 1.442695
        %v903 = vpow.pop %v902
        %v904 = vsel %vm710, %v899, 0.0
        %905 = vadd.xlane.f32.xlu0 %v904
        %v906 = vpop.xlane.xlu0 %905
        %v907 = vsel %vm710, %v901, 0.0
        %908 = vadd.xlane.f32.xlu0 %v907
        %v909 = vpop.xlane.xlu0 %908
        %v910 = vsel %vm710, %v903, 0.0
        %911 = vadd.xlane.f32.xlu0 %v910
        %v912 = vpop.xlane.xlu0 %911
        %v913 = vrcp.pop %v906
        %v914 = vrcp.pop %v909
        %v915 = vrcp.pop %v912
        %v916 = vmul.f32 %v899, %v913
        %v917 = vmul.f32 %v901, %v914
        %v918 = vmul.f32 %v903, %v915
        %s919 = scalar_lea.vmem %s469, 24 [#allocation2]
        %920 = vst.msk [vmem:[%s919] sm:$0xff] %vm710, %v916
        %921 = vst.msk [vmem:[%s919 + $0x8] sm:$0xff] %vm710, %v917
        %922 = vst.msk [vmem:[%s919 + $0x10] sm:$0xff] %vm710, %v918
        %v923 = vpack.c.bf16 %v917, %v916
        %v924 = vpack.c.bf16 %v918, %v918
        %925 = vrot.lane.b32.xlu0 %v635, 56
        %v926 = vpop.permute.xlu0 %925
        %927 = vrot.lane.b32.xlu0 %v636, 56
        %v928 = vpop.permute.xlu0 %927
        %v931 = vsel %vm710, %v923, 0
        %v934 = vsel %vm710, %v924, 0
        %v937 = vsel %vm760, %v928, 0
        %939 = vmatprep.subr.bf16.mxu0 0
        %940 = vmatpush1.bf16.msra.mxu0 %v926
        %941 = vmatprep.subr.bf16.mxu0 0
        %942 = vmatpush1.bf16.msra.mxu0 %v937
        %943 = vmatprep.subr.bf16.mxu0 0
        %944 = vmatpush1.bf16.msra.mxu0 0
        %945 = vmatprep.subr.bf16.mxu0 0
        %946 = vmatpush1.bf16.msra.mxu0 0
        %947 = vmatprep.subr.bf16.mxu0 0
        %948 = vmatpush1.bf16.msra.mxu0 0
        %949 = vmatprep.subr.bf16.mxu0 0
        %950 = vmatpush1.bf16.msra.mxu0 0
        %951 = vmatprep.subr.bf16.mxu0 0
        %952 = vmatpush1.bf16.msra.mxu0 0
        %953 = vmatprep.subr.bf16.mxu0 0
        %954 = vmatpush1.bf16.msra.mxu0 0
        %955 = vmatprep.subr.bf16.mxu0 0
        %956 = vmatpush1.bf16.msra.mxu0 0
        %957 = vmatprep.subr.bf16.mxu0 0
        %958 = vmatpush1.bf16.msra.mxu0 0
        %959 = vmatprep.subr.bf16.mxu0 0
        %960 = vmatpush1.bf16.msra.mxu0 0
        %961 = vmatprep.subr.bf16.mxu0 0
        %962 = vmatpush1.bf16.msra.mxu0 0
        %963 = vmatprep.subr.bf16.mxu0 0
        %964 = vmatpush1.bf16.msra.mxu0 0
        %965 = vmatprep.subr.bf16.mxu0 0
        %966 = vmatpush1.bf16.msra.mxu0 0
        %967 = vmatprep.subr.bf16.mxu0 0
        %968 = vmatpush1.bf16.msra.mxu0 0
        %969 = vmatprep.subr.bf16.mxu0 0
        %970 = vmatpush1.bf16.msra.mxu0 0
        %971 = vmatprep.mubr.bf16.mxu0 0
        %972 = vmatmul.mubr.bf16.gmra.mrb[0].mxu0 %v931
        %v973 = vpop.f32.mrb[0].mxu0
        %v974 = vadd.f32 0.0, %v973
        %v975 = vpop.f32.mrb[0].mxu0
        %v976 = vpop.f32.mrb[0].mxu0
        %v977 = vadd.f32 0.0, %v976
        %v978 = vpop.f32.mrb[0].mxu0
        %979 = vmatprep.mubr.bf16.mxu0 0
        %980 = vmatmul.mubr.bf16.gmra.mrb[0].mxu0 %v934
        %v981 = vpop.f32.mrb[0].mxu0
        %v982 = vadd.f32 0.0, %v981
        %v983 = vpop.f32.mrb[0].mxu0
        %v984 = vpop.f32.mrb[0].mxu0
        %v985 = vpop.f32.mrb[0].mxu0
        %986 = vdwg.mxu0
        %987 = vrot.lane.b32.xlu0 %v635, 112
        %v988 = vpop.permute.xlu0 %987
        %989 = vrot.lane.b32.xlu0 %v636, 112
        %v990 = vpop.permute.xlu0 %989
        %991 = vrot.lane.b32.xlu0 %v635, 80
        %v992 = vpop.permute.xlu0 %991
        %993 = vrot.lane.b32.xlu0 %v636, 80
        %v994 = vpop.permute.xlu0 %993
        %v996 = vsel %vm643, %v988, 0
        %v999 = vsel %vm643, %v990, 0
        %v1002 = vsel %vm643, %v992, 0
        %v1005 = vsel %vm643, %v994, 0
        %1007 = vmatprep.subr.bf16.mxu0 0
        %1008 = vmatpush1.bf16.xpose.msra.mxu0 %v1002
        %1009 = vmatprep.subr.bf16.mxu0 0
        %1010 = vmatpush1.bf16.xpose.msra.mxu0 %v1005
        %1011 = vmatprep.subr.bf16.mxu0 0
        %1012 = vmatpush1.bf16.xpose.msra.mxu0 0
        %1013 = vmatprep.subr.bf16.mxu0 0
        %1014 = vmatpush1.bf16.xpose.msra.mxu0 0
        %1015 = vmatprep.subr.bf16.mxu0 0
        %1016 = vmatpush1.bf16.xpose.msra.mxu0 0
        %1017 = vmatprep.subr.bf16.mxu0 0
        %1018 = vmatpush1.bf16.xpose.msra.mxu0 0
        %1019 = vmatprep.subr.bf16.mxu0 0
        %1020 = vmatpush1.bf16.xpose.msra.mxu0 0
        %1021 = vmatprep.subr.bf16.mxu0 0
        %1022 = vmatpush1.bf16.xpose.msra.mxu0 0
        %1023 = vmatprep.subr.bf16.mxu0 0
        %1024 = vmatpush1.bf16.xpose.msra.mxu0 0
        %1025 = vmatprep.subr.bf16.mxu0 0
        %1026 = vmatpush1.bf16.xpose.msra.mxu0 0
        %1027 = vmatprep.subr.bf16.mxu0 0
        %1028 = vmatpush1.bf16.xpose.msra.mxu0 0
        %1029 = vmatprep.subr.bf16.mxu0 0
        %1030 = vmatpush1.bf16.xpose.msra.mxu0 0
        %1031 = vmatprep.subr.bf16.mxu0 0
        %1032 = vmatpush1.bf16.xpose.msra.mxu0 0
        %1033 = vmatprep.subr.bf16.mxu0 0
        %1034 = vmatpush1.bf16.xpose.msra.mxu0 0
        %1035 = vmatprep.subr.bf16.mxu0 0
        %1036 = vmatpush1.bf16.xpose.msra.mxu0 0
        %1037 = vmatprep.subr.bf16.mxu0 0
        %1038 = vmatpush1.bf16.xpose.msra.mxu0 0
        %1039 = vmatprep.mubr.bf16.mxu0 0
        %1040 = vmatmul.mubr.bf16.gmra.mrb[0].mxu0 %v996
        %v1041 = vpop.f32.mrb[0].mxu0
        %v1042 = vadd.f32 0.0, %v1041
        %v1043 = vpop.f32.mrb[0].mxu0
        %v1044 = vpop.f32.mrb[0].mxu0
        %v1045 = vadd.f32 0.0, %v1044
        %v1046 = vpop.f32.mrb[0].mxu0
        %1047 = vmatprep.mubr.bf16.mxu0 0
        %1048 = vmatmul.mubr.bf16.gmra.mrb[0].mxu0 %v999
        %v1049 = vpop.f32.mrb[0].mxu0
        %v1050 = vadd.f32 0.0, %v1049
        %v1051 = vpop.f32.mrb[0].mxu0
        %v1052 = vpop.f32.mrb[0].mxu0
        %v1053 = vpop.f32.mrb[0].mxu0
        %1054 = vdwg.mxu0
        %v1055 = vmul.f32 %v1042, 0.35355338
        %v1056 = vmul.f32 %v1045, 0.35355338
        %v1057 = vmul.f32 %v1050, 0.35355338
        %v1058 = vsel %vm632, %v1055, -1e+30
        %v1059 = vsel %vm633, %v1056, -1e+30
        %v1060 = vsel %vm634, %v1057, -1e+30
        %v1061 = vsel %vm710, %v1058, -inf
        %1062 = vmax.xlane.f32.xlu0 %v1061
        %v1063 = vpop.xlane.xlu0 %1062
        %v1064 = vsel %vm710, %v1059, -inf
        %1065 = vmax.xlane.f32.xlu0 %v1064
        %v1066 = vpop.xlane.xlu0 %1065
        %v1067 = vsel %vm710, %v1060, -inf
        %1068 = vmax.xlane.f32.xlu0 %v1067
        %v1069 = vpop.xlane.xlu0 %1068
        %v1070 = vsub.f32 %v1058, %v1063
        %v1071 = vsub.f32 %v1059, %v1066
        %v1072 = vsub.f32 %v1060, %v1069
        %v1073 = vmul.f32 %v1070, 1.442695
        %v1074 = vpow.pop %v1073
        %v1075 = vmul.f32 %v1071, 1.442695
        %v1076 = vpow.pop %v1075
        %v1077 = vmul.f32 %v1072, 1.442695
        %v1078 = vpow.pop %v1077
        %v1079 = vsel %vm710, %v1074, 0.0
        %1080 = vadd.xlane.f32.xlu0 %v1079
        %v1081 = vpop.xlane.xlu0 %1080
        %v1082 = vsel %vm710, %v1076, 0.0
        %1083 = vadd.xlane.f32.xlu0 %v1082
        %v1084 = vpop.xlane.xlu0 %1083
        %v1085 = vsel %vm710, %v1078, 0.0
        %1086 = vadd.xlane.f32.xlu0 %v1085
        %v1087 = vpop.xlane.xlu0 %1086
        %v1088 = vrcp.pop %v1081
        %v1089 = vrcp.pop %v1084
        %v1090 = vrcp.pop %v1087
        %v1091 = vmul.f32 %v1074, %v1088
        %v1092 = vmul.f32 %v1076, %v1089
        %v1093 = vmul.f32 %v1078, %v1090
        %s1094 = scalar_lea.vmem %s469, 48 [#allocation2]
        %1095 = vst.msk [vmem:[%s1094] sm:$0xff] %vm710, %v1091
        %1096 = vst.msk [vmem:[%s1094 + $0x8] sm:$0xff] %vm710, %v1092
        %1097 = vst.msk [vmem:[%s1094 + $0x10] sm:$0xff] %vm710, %v1093
        %v1098 = vpack.c.bf16 %v1092, %v1091
        %v1099 = vpack.c.bf16 %v1093, %v1093
        %1100 = vrot.lane.b32.xlu0 %v635, 48
        %v1101 = vpop.permute.xlu0 %1100
        %1102 = vrot.lane.b32.xlu0 %v636, 48
        %v1103 = vpop.permute.xlu0 %1102
        %v1106 = vsel %vm710, %v1098, 0
        %v1109 = vsel %vm710, %v1099, 0
        %v1112 = vsel %vm760, %v1103, 0
        %1114 = vmatprep.subr.bf16.mxu0 0
        %1115 = vmatpush1.bf16.msra.mxu0 %v1101
        %1116 = vmatprep.subr.bf16.mxu0 0
        %1117 = vmatpush1.bf16.msra.mxu0 %v1112
        %1118 = vmatprep.subr.bf16.mxu0 0
        %1119 = vmatpush1.bf16.msra.mxu0 0
        %1120 = vmatprep.subr.bf16.mxu0 0
        %1121 = vmatpush1.bf16.msra.mxu0 0
        %1122 = vmatprep.subr.bf16.mxu0 0
        %1123 = vmatpush1.bf16.msra.mxu0 0
        %1124 = vmatprep.subr.bf16.mxu0 0
        %1125 = vmatpush1.bf16.msra.mxu0 0
        %1126 = vmatprep.subr.bf16.mxu0 0
        %1127 = vmatpush1.bf16.msra.mxu0 0
        %1128 = vmatprep.subr.bf16.mxu0 0
        %1129 = vmatpush1.bf16.msra.mxu0 0
        %1130 = vmatprep.subr.bf16.mxu0 0
        %1131 = vmatpush1.bf16.msra.mxu0 0
        %1132 = vmatprep.subr.bf16.mxu0 0
        %1133 = vmatpush1.bf16.msra.mxu0 0
        %1134 = vmatprep.subr.bf16.mxu0 0
        %1135 = vmatpush1.bf16.msra.mxu0 0
        %1136 = vmatprep.subr.bf16.mxu0 0
        %1137 = vmatpush1.bf16.msra.mxu0 0
        %1138 = vmatprep.subr.bf16.mxu0 0
        %1139 = vmatpush1.bf16.msra.mxu0 0
        %1140 = vmatprep.subr.bf16.mxu0 0
        %1141 = vmatpush1.bf16.msra.mxu0 0
        %1142 = vmatprep.subr.bf16.mxu0 0
        %1143 = vmatpush1.bf16.msra.mxu0 0
        %1144 = vmatprep.subr.bf16.mxu0 0
        %1145 = vmatpush1.bf16.msra.mxu0 0
        %1146 = vmatprep.mubr.bf16.mxu0 0
        %1147 = vmatmul.mubr.bf16.gmra.mrb[0].mxu0 %v1106
        %v1148 = vpop.f32.mrb[0].mxu0
        %v1149 = vadd.f32 0.0, %v1148
        %v1150 = vpop.f32.mrb[0].mxu0
        %v1151 = vpop.f32.mrb[0].mxu0
        %v1152 = vadd.f32 0.0, %v1151
        %v1153 = vpop.f32.mrb[0].mxu0
        %1154 = vmatprep.mubr.bf16.mxu0 0
        %1155 = vmatmul.mubr.bf16.gmra.mrb[0].mxu0 %v1109
        %v1156 = vpop.f32.mrb[0].mxu0
        %v1157 = vadd.f32 0.0, %v1156
        %v1158 = vpop.f32.mrb[0].mxu0
        %v1159 = vpop.f32.mrb[0].mxu0
        %v1160 = vpop.f32.mrb[0].mxu0
        %1161 = vdwg.mxu0
        %1162 = vrot.lane.b32.xlu0 %v635, 104
        %v1163 = vpop.permute.xlu0 %1162
        %1164 = vrot.lane.b32.xlu0 %v636, 104
        %v1165 = vpop.permute.xlu0 %1164
        %1166 = vrot.lane.b32.xlu0 %v635, 72
        %v1167 = vpop.permute.xlu0 %1166
        %1168 = vrot.lane.b32.xlu0 %v636, 72
        %v1169 = vpop.permute.xlu0 %1168
        %v1171 = vsel %vm643, %v1163, 0
        %v1174 = vsel %vm643, %v1165, 0
        %v1177 = vsel %vm643, %v1167, 0
        %v1180 = vsel %vm643, %v1169, 0
        %1182 = vmatprep.subr.bf16.mxu0 0
        %1183 = vmatpush1.bf16.xpose.msra.mxu0 %v1177
        %1184 = vmatprep.subr.bf16.mxu0 0
        %1185 = vmatpush1.bf16.xpose.msra.mxu0 %v1180
        %1186 = vmatprep.subr.bf16.mxu0 0
        %1187 = vmatpush1.bf16.xpose.msra.mxu0 0
        %1188 = vmatprep.subr.bf16.mxu0 0
        %1189 = vmatpush1.bf16.xpose.msra.mxu0 0
        %1190 = vmatprep.subr.bf16.mxu0 0
        %1191 = vmatpush1.bf16.xpose.msra.mxu0 0
        %1192 = vmatprep.subr.bf16.mxu0 0
        %1193 = vmatpush1.bf16.xpose.msra.mxu0 0
        %1194 = vmatprep.subr.bf16.mxu0 0
        %1195 = vmatpush1.bf16.xpose.msra.mxu0 0
        %1196 = vmatprep.subr.bf16.mxu0 0
        %1197 = vmatpush1.bf16.xpose.msra.mxu0 0
        %1198 = vmatprep.subr.bf16.mxu0 0
        %1199 = vmatpush1.bf16.xpose.msra.mxu0 0
        %1200 = vmatprep.subr.bf16.mxu0 0
        %1201 = vmatpush1.bf16.xpose.msra.mxu0 0
        %1202 = vmatprep.subr.bf16.mxu0 0
        %1203 = vmatpush1.bf16.xpose.msra.mxu0 0
        %1204 = vmatprep.subr.bf16.mxu0 0
        %1205 = vmatpush1.bf16.xpose.msra.mxu0 0
        %1206 = vmatprep.subr.bf16.mxu0 0
        %1207 = vmatpush1.bf16.xpose.msra.mxu0 0
        %1208 = vmatprep.subr.bf16.mxu0 0
        %1209 = vmatpush1.bf16.xpose.msra.mxu0 0
        %1210 = vmatprep.subr.bf16.mxu0 0
        %1211 = vmatpush1.bf16.xpose.msra.mxu0 0
        %1212 = vmatprep.subr.bf16.mxu0 0
        %1213 = vmatpush1.bf16.xpose.msra.mxu0 0
        %1214 = vmatprep.mubr.bf16.mxu0 0
        %1215 = vmatmul.mubr.bf16.gmra.mrb[0].mxu0 %v1171
        %v1216 = vpop.f32.mrb[0].mxu0
        %v1217 = vadd.f32 0.0, %v1216
        %v1218 = vpop.f32.mrb[0].mxu0
        %v1219 = vpop.f32.mrb[0].mxu0
        %v1220 = vadd.f32 0.0, %v1219
        %v1221 = vpop.f32.mrb[0].mxu0
        %1222 = vmatprep.mubr.bf16.mxu0 0
        %1223 = vmatmul.mubr.bf16.gmra.mrb[0].mxu0 %v1174
        %v1224 = vpop.f32.mrb[0].mxu0
        %v1225 = vadd.f32 0.0, %v1224
        %v1226 = vpop.f32.mrb[0].mxu0
        %v1227 = vpop.f32.mrb[0].mxu0
        %v1228 = vpop.f32.mrb[0].mxu0
        %1229 = vdwg.mxu0
        %v1230 = vmul.f32 %v1217, 0.35355338
        %v1231 = vmul.f32 %v1220, 0.35355338
        %v1232 = vmul.f32 %v1225, 0.35355338
        %v1233 = vsel %vm632, %v1230, -1e+30
        %v1234 = vsel %vm633, %v1231, -1e+30
        %v1235 = vsel %vm634, %v1232, -1e+30
        %v1236 = vsel %vm710, %v1233, -inf
        %1237 = vmax.xlane.f32.xlu0 %v1236
        %v1238 = vpop.xlane.xlu0 %1237
        %v1239 = vsel %vm710, %v1234, -inf
        %1240 = vmax.xlane.f32.xlu0 %v1239
        %v1241 = vpop.xlane.xlu0 %1240
        %v1242 = vsel %vm710, %v1235, -inf
        %1243 = vmax.xlane.f32.xlu0 %v1242
        %v1244 = vpop.xlane.xlu0 %1243
        %v1245 = vsub.f32 %v1233, %v1238
        %v1246 = vsub.f32 %v1234, %v1241
        %v1247 = vsub.f32 %v1235, %v1244
        %v1248 = vmul.f32 %v1245, 1.442695
        %v1249 = vpow.pop %v1248
        %v1250 = vmul.f32 %v1246, 1.442695
        %v1251 = vpow.pop %v1250
        %v1252 = vmul.f32 %v1247, 1.442695
        %v1253 = vpow.pop %v1252
        %v1254 = vsel %vm710, %v1249, 0.0
        %1255 = vadd.xlane.f32.xlu0 %v1254
        %v1256 = vpop.xlane.xlu0 %1255
        %v1257 = vsel %vm710, %v1251, 0.0
        %1258 = vadd.xlane.f32.xlu0 %v1257
        %v1259 = vpop.xlane.xlu0 %1258
        %v1260 = vsel %vm710, %v1253, 0.0
        %1261 = vadd.xlane.f32.xlu0 %v1260
        %v1262 = vpop.xlane.xlu0 %1261
        %v1263 = vrcp.pop %v1256
        %v1264 = vrcp.pop %v1259
        %v1265 = vrcp.pop %v1262
        %v1266 = vmul.f32 %v1249, %v1263
        %v1267 = vmul.f32 %v1251, %v1264
        %v1268 = vmul.f32 %v1253, %v1265
        %s1269 = scalar_lea.vmem %s469, 72 [#allocation2]
        %1270 = vst.msk [vmem:[%s1269] sm:$0xff] %vm710, %v1266
        %1271 = vst.msk [vmem:[%s1269 + $0x8] sm:$0xff] %vm710, %v1267
        %1272 = vst.msk [vmem:[%s1269 + $0x10] sm:$0xff] %vm710, %v1268
        %v1273 = vpack.c.bf16 %v1267, %v1266
        %v1274 = vpack.c.bf16 %v1268, %v1268
        %1275 = vrot.lane.b32.xlu0 %v635, 40
        %v1276 = vpop.permute.xlu0 %1275
        %1277 = vrot.lane.b32.xlu0 %v636, 40
        %v1278 = vpop.permute.xlu0 %1277
        %v1281 = vsel %vm710, %v1273, 0
        %v1284 = vsel %vm710, %v1274, 0
        %v1287 = vsel %vm760, %v1278, 0
        %1289 = vmatprep.subr.bf16.mxu0 0
        %1290 = vmatpush1.bf16.msra.mxu0 %v1276
        %1291 = vmatprep.subr.bf16.mxu0 0
        %1292 = vmatpush1.bf16.msra.mxu0 %v1287
        %1293 = vmatprep.subr.bf16.mxu0 0
        %1294 = vmatpush1.bf16.msra.mxu0 0
        %1295 = vmatprep.subr.bf16.mxu0 0
        %1296 = vmatpush1.bf16.msra.mxu0 0
        %1297 = vmatprep.subr.bf16.mxu0 0
        %1298 = vmatpush1.bf16.msra.mxu0 0
        %1299 = vmatprep.subr.bf16.mxu0 0
        %1300 = vmatpush1.bf16.msra.mxu0 0
        %1301 = vmatprep.subr.bf16.mxu0 0
        %1302 = vmatpush1.bf16.msra.mxu0 0
        %1303 = vmatprep.subr.bf16.mxu0 0
        %1304 = vmatpush1.bf16.msra.mxu0 0
        %1305 = vmatprep.subr.bf16.mxu0 0
        %1306 = vmatpush1.bf16.msra.mxu0 0
        %1307 = vmatprep.subr.bf16.mxu0 0
        %1308 = vmatpush1.bf16.msra.mxu0 0
        %1309 = vmatprep.subr.bf16.mxu0 0
        %1310 = vmatpush1.bf16.msra.mxu0 0
        %1311 = vmatprep.subr.bf16.mxu0 0
        %1312 = vmatpush1.bf16.msra.mxu0 0
        %1313 = vmatprep.subr.bf16.mxu0 0
        %1314 = vmatpush1.bf16.msra.mxu0 0
        %1315 = vmatprep.subr.bf16.mxu0 0
        %1316 = vmatpush1.bf16.msra.mxu0 0
        %1317 = vmatprep.subr.bf16.mxu0 0
        %1318 = vmatpush1.bf16.msra.mxu0 0
        %1319 = vmatprep.subr.bf16.mxu0 0
        %1320 = vmatpush1.bf16.msra.mxu0 0
        %1321 = vmatprep.mubr.bf16.mxu0 0
        %1322 = vmatmul.mubr.bf16.gmra.mrb[0].mxu0 %v1281
        %v1323 = vpop.f32.mrb[0].mxu0
        %v1324 = vadd.f32 0.0, %v1323
        %v1325 = vpop.f32.mrb[0].mxu0
        %v1326 = vpop.f32.mrb[0].mxu0
        %v1327 = vadd.f32 0.0, %v1326
        %v1328 = vpop.f32.mrb[0].mxu0
        %1329 = vmatprep.mubr.bf16.mxu0 0
        %1330 = vmatmul.mubr.bf16.gmra.mrb[0].mxu0 %v1284
        %v1331 = vpop.f32.mrb[0].mxu0
        %v1332 = vadd.f32 0.0, %v1331
        %v1333 = vpop.f32.mrb[0].mxu0
        %v1334 = vpop.f32.mrb[0].mxu0
        %v1335 = vpop.f32.mrb[0].mxu0
        %1336 = vdwg.mxu0
        %1340 = vrot.lane.b32.xlu0 %v974, 8
        %v1341 = vpop.permute.xlu0 %1340
        %1342 = vrot.lane.b32.xlu0 %v977, 8
        %v1343 = vpop.permute.xlu0 %1342
        %1344 = vrot.lane.b32.xlu0 %v982, 8
        %v1345 = vpop.permute.xlu0 %1344
        %1352 = vrot.lane.b32.xlu0 %v1149, 16
        %v1353 = vpop.permute.xlu0 %1352
        %1354 = vrot.lane.b32.xlu0 %v1152, 16
        %v1355 = vpop.permute.xlu0 %1354
        %1356 = vrot.lane.b32.xlu0 %v1157, 16
        %v1357 = vpop.permute.xlu0 %1356
        %1364 = vrot.lane.b32.xlu0 %v1324, 24
        %v1365 = vpop.permute.xlu0 %1364
        %1366 = vrot.lane.b32.xlu0 %v1327, 24
        %v1367 = vpop.permute.xlu0 %1366
        %1368 = vrot.lane.b32.xlu0 %v1332, 24
        %v1369 = vpop.permute.xlu0 %1368
        %v1373 = vsel %vm643, %v799, %v1341
        %v1374 = vsel %vm643, %v802, %v1343
        %v1375 = vsel %vm643, %v807, %v1345
        %vm1376 = vcmask 130048
        %v1377 = vsel %vm1376, %v1373, %v1353
        %v1378 = vsel %vm1376, %v1374, %v1355
        %v1379 = vsel %vm1376, %v1375, %v1357
        %v1380 = vsel %vm710, %v1377, %v1365
        %v1381 = vsel %vm710, %v1378, %v1367
        %v1382 = vsel %vm710, %v1379, %v1369
        %v1383 = vld [vmem:[%s5] sm:$0xf]
        %v1384 = vld [vmem:[%s5 + $0x4] sm:$0xf]
        %v1385 = vld [vmem:[%s5 + $0x8] sm:$0xf]
        %v1386 = vld [vmem:[%s5 + $0xc] sm:$0xf]
        %v1387 = vpack.c.bf16 %v1381, %v1380
        %v1388 = vpack.c.bf16 %v1382, %v1382
        %v1393 = vunpack.c.l.b16 %v1383
        %v1394 = vunpack.c.l.b16 %v1384
        %v1395 = vunpack.c.l.b16 %v1385
        %v1396 = vunpack.c.l.b16 %v1386
        %v1397 = vpack.c.b16 %v1394, %v1393
        %v1398 = vpack.c.b16 %v1396, %v1395
        %v1402 = vsel %vm488, %v1387, 0
        %v1405 = vsel %vm488, %v1388, 0
        %1407 = vmatprep.subr.bf16.mxu0 0
        %1408 = vmatpush1.bf16.msra.mxu0 %v1397
        %1409 = vmatprep.subr.bf16.mxu0 0
        %1410 = vmatpush1.bf16.msra.mxu0 %v1398
        %1411 = vmatprep.subr.bf16.mxu0 0
        %1412 = vmatpush1.bf16.msra.mxu0 0
        %1413 = vmatprep.subr.bf16.mxu0 0
        %1414 = vmatpush1.bf16.msra.mxu0 0
        %1415 = vmatprep.subr.bf16.mxu0 0
        %1416 = vmatpush1.bf16.msra.mxu0 0
        %1417 = vmatprep.subr.bf16.mxu0 0
        %1418 = vmatpush1.bf16.msra.mxu0 0
        %1419 = vmatprep.subr.bf16.mxu0 0
        %1420 = vmatpush1.bf16.msra.mxu0 0
        %1421 = vmatprep.subr.bf16.mxu0 0
        %1422 = vmatpush1.bf16.msra.mxu0 0
        %1423 = vmatprep.subr.bf16.mxu0 0
        %1424 = vmatpush1.bf16.msra.mxu0 0
        %1425 = vmatprep.subr.bf16.mxu0 0
        %1426 = vmatpush1.bf16.msra.mxu0 0
        %1427 = vmatprep.subr.bf16.mxu0 0
        %1428 = vmatpush1.bf16.msra.mxu0 0
        %1429 = vmatprep.subr.bf16.mxu0 0
        %1430 = vmatpush1.bf16.msra.mxu0 0
        %1431 = vmatprep.subr.bf16.mxu0 0
        %1432 = vmatpush1.bf16.msra.mxu0 0
        %1433 = vmatprep.subr.bf16.mxu0 0
        %1434 = vmatpush1.bf16.msra.mxu0 0
        %1435 = vmatprep.subr.bf16.mxu0 0
        %1436 = vmatpush1.bf16.msra.mxu0 0
        %1437 = vmatprep.subr.bf16.mxu0 0
        %1438 = vmatpush1.bf16.msra.mxu0 0
        %1439 = vmatprep.mubr.bf16.mxu0 0
        %1440 = vmatmul.mubr.bf16.gmra.mrb[0].mxu0 %v1402
        %v1441 = vpop.f32.mrb[0].mxu0
        %v1442 = vadd.f32 0.0, %v1441
        %v1443 = vpop.f32.mrb[0].mxu0
        %v1444 = vpop.f32.mrb[0].mxu0
        %v1445 = vadd.f32 0.0, %v1444
        %v1446 = vpop.f32.mrb[0].mxu0
        %1447 = vmatprep.mubr.bf16.mxu0 0
        %1448 = vmatmul.mubr.bf16.gmra.mrb[0].mxu0 %v1405
        %v1449 = vpop.f32.mrb[0].mxu0
        %v1450 = vadd.f32 0.0, %v1449
        %v1451 = vpop.f32.mrb[0].mxu0
        %v1452 = vpop.f32.mrb[0].mxu0
        %v1453 = vpop.f32.mrb[0].mxu0
        %1454 = vdwg.mxu0
        %v1455 = vadd.f32 %v483, %v1442
        %v1456 = vadd.f32 %v484, %v1445
        %v1457 = vadd.f32 %v485, %v1450
        %v1458 = vld [vmem:[%s6] sm:$0x1]
        %v1460 = vlaneseq
        %v1461 = vshrl.u32 %v1460, 7
        %v1462 = vsub.s32 0, %v1461
        %v1463 = vrot.slane %v1458, %v1462
        %v1465 = vadd.f32 %v1455, %v1463
        %v1466 = vadd.f32 %v1456, %v1463
        %v1467 = vadd.f32 %v1457, %v1463
        %v1468 = vld [vmem:[%s7] sm:$0x1]
        %v1469 = vld [vmem:[%s8] sm:$0x1]
        %v1470 = vsel %vm488, %v1465, 0.0
        %1471 = vadd.xlane.f32.xlu0 %v1470
        %v1472 = vpop.xlane.xlu0 %1471
        %v1473 = vsel %vm488, %v1466, 0.0
        %1474 = vadd.xlane.f32.xlu0 %v1473
        %v1475 = vpop.xlane.xlu0 %1474
        %v1476 = vsel %vm488, %v1467, 0.0
        %1477 = vadd.xlane.f32.xlu0 %v1476
        %v1478 = vpop.xlane.xlu0 %1477
        %v1479 = vmul.f32 %v1472, %v498
        %v1480 = vmul.f32 %v1475, %v498
        %v1481 = vmul.f32 %v1478, %v498
        %v1482 = vsub.f32 %v1465, %v1479
        %v1483 = vsub.f32 %v1466, %v1480
        %v1484 = vsub.f32 %v1467, %v1481
        %v1485 = vmul.f32 %v1482, %v1482
        %v1486 = vmul.f32 %v1483, %v1483
        %v1487 = vmul.f32 %v1484, %v1484
        %v1488 = vsel %vm488, %v1485, 0.0
        %1489 = vadd.xlane.f32.xlu0 %v1488
        %v1490 = vpop.xlane.xlu0 %1489
        %v1491 = vsel %vm488, %v1486, 0.0
        %1492 = vadd.xlane.f32.xlu0 %v1491
        %v1493 = vpop.xlane.xlu0 %1492
        %v1494 = vsel %vm488, %v1487, 0.0
        %1495 = vadd.xlane.f32.xlu0 %v1494
        %v1496 = vpop.xlane.xlu0 %1495
        %v1497 = vmul.f32 %v1490, %v498
        %v1498 = vmul.f32 %v1493, %v498
        %v1499 = vmul.f32 %v1496, %v498
        %v1500 = vadd.f32 %v1497, 1e-05
        %v1501 = vadd.f32 %v1498, 1e-05
        %v1502 = vadd.f32 %v1499, 1e-05
        %v1503 = vrsqrt.pop %v1500
        %v1504 = vrsqrt.pop %v1501
        %v1505 = vrsqrt.pop %v1502
        %v1506 = vmul.f32 %v1482, %v1503
        %v1507 = vmul.f32 %v1483, %v1504
        %v1508 = vmul.f32 %v1484, %v1505
        %v1510 = vlaneseq
        %v1511 = vshrl.u32 %v1510, 7
        %v1512 = vsub.s32 0, %v1511
        %v1513 = vrot.slane %v1468, %v1512
        %v1515 = vmul.f32 %v1506, %v1513
        %v1516 = vmul.f32 %v1507, %v1513
        %v1517 = vmul.f32 %v1508, %v1513
        %v1519 = vlaneseq
        %v1520 = vshrl.u32 %v1519, 7
        %v1521 = vsub.s32 0, %v1520
        %v1522 = vrot.slane %v1469, %v1521
        %v1524 = vadd.f32 %v1515, %v1522
        %v1525 = vadd.f32 %v1516, %v1522
        %v1526 = vadd.f32 %v1517, %v1522
        %v1527 = vld [vmem:[%s9] sm:$0xf]
        %v1528 = vld [vmem:[%s9 + $0x4] sm:$0xf]
        %v1529 = vld [vmem:[%s9 + $0x8] sm:$0xf]
        %v1530 = vld [vmem:[%s9 + $0xc] sm:$0xf]
        %v1531 = vpack.c.bf16 %v1525, %v1524
        %v1532 = vpack.c.bf16 %v1526, %v1526
        %v1533 = vld [vmem:[%s10] sm:$0x1]
        %v1535 = vlaneseq
        %v1536 = vshrl.u32 %v1535, 7
        %v1537 = vsub.s32 0, %v1536
        %v1538 = vrot.slane %v1533, %v1537
        %v1544 = vunpack.c.l.b16 %v1527
        %v1545 = vunpack.c.l.b16 %v1528
        %v1546 = vunpack.c.l.b16 %v1529
        %v1547 = vunpack.c.l.b16 %v1530
        %v1548 = vpack.c.b16 %v1545, %v1544
        %v1549 = vpack.c.b16 %v1547, %v1546
        %v1553 = vsel %vm488, %v1531, 0
        %v1556 = vsel %vm488, %v1532, 0
        %1558 = vmatprep.subr.bf16.mxu0 0
        %1559 = vmatpush1.bf16.msra.mxu0 %v1548
        %1560 = vmatprep.subr.bf16.mxu0 0
        %1561 = vmatpush1.bf16.msra.mxu0 %v1549
        %1562 = vmatprep.subr.bf16.mxu0 0
        %1563 = vmatpush1.bf16.msra.mxu0 0
        %1564 = vmatprep.subr.bf16.mxu0 0
        %1565 = vmatpush1.bf16.msra.mxu0 0
        %1566 = vmatprep.subr.bf16.mxu0 0
        %1567 = vmatpush1.bf16.msra.mxu0 0
        %1568 = vmatprep.subr.bf16.mxu0 0
        %1569 = vmatpush1.bf16.msra.mxu0 0
        %1570 = vmatprep.subr.bf16.mxu0 0
        %1571 = vmatpush1.bf16.msra.mxu0 0
        %1572 = vmatprep.subr.bf16.mxu0 0
        %1573 = vmatpush1.bf16.msra.mxu0 0
        %1574 = vmatprep.subr.bf16.mxu0 0
        %1575 = vmatpush1.bf16.msra.mxu0 0
        %1576 = vmatprep.subr.bf16.mxu0 0
        %1577 = vmatpush1.bf16.msra.mxu0 0
        %1578 = vmatprep.subr.bf16.mxu0 0
        %1579 = vmatpush1.bf16.msra.mxu0 0
        %1580 = vmatprep.subr.bf16.mxu0 0
        %1581 = vmatpush1.bf16.msra.mxu0 0
        %1582 = vmatprep.subr.bf16.mxu0 0
        %1583 = vmatpush1.bf16.msra.mxu0 0
        %1584 = vmatprep.subr.bf16.mxu0 0
        %1585 = vmatpush1.bf16.msra.mxu0 0
        %1586 = vmatprep.subr.bf16.mxu0 0
        %1587 = vmatpush1.bf16.msra.mxu0 0
        %1588 = vmatprep.subr.bf16.mxu0 0
        %1589 = vmatpush1.bf16.msra.mxu0 0
        %1590 = vmatprep.mubr.bf16.mxu0 0
        %1591 = vmatmul.mubr.bf16.gmra.mrb[0].mxu0 %v1553
        %v1592 = vpop.f32.mrb[0].mxu0
        %v1593 = vadd.f32 %v1538, %v1592
        %v1594 = vpop.f32.mrb[0].mxu0
        %v1595 = vpop.f32.mrb[0].mxu0
        %v1596 = vadd.f32 %v1538, %v1595
        %v1597 = vpop.f32.mrb[0].mxu0
        %1598 = vmatprep.mubr.bf16.mxu0 0
        %1599 = vmatmul.mubr.bf16.gmra.mrb[0].mxu0 %v1556
        %v1600 = vpop.f32.mrb[0].mxu0
        %v1601 = vadd.f32 %v1538, %v1600
        %v1602 = vpop.f32.mrb[0].mxu0
        %v1603 = vpop.f32.mrb[0].mxu0
        %v1604 = vpop.f32.mrb[0].mxu0
        %1605 = vdwg.mxu0
        %v1606 = vmul.f32 %v1593, 0.5
        %v1607 = vmul.f32 %v1596, 0.5
        %v1608 = vmul.f32 %v1601, 0.5
        %v1609 = vmul.f32 %v1593, 0.044715
        %v1610 = vmul.f32 %v1596, 0.044715
        %v1611 = vmul.f32 %v1601, 0.044715
        %v1612 = vmul.f32 %v1609, %v1593
        %v1613 = vmul.f32 %v1610, %v1596
        %v1614 = vmul.f32 %v1611, %v1601
        %v1615 = vmul.f32 %v1612, %v1593
        %v1616 = vmul.f32 %v1613, %v1596
        %v1617 = vmul.f32 %v1614, %v1601
        %v1618 = vadd.f32 %v1593, %v1615
        %v1619 = vadd.f32 %v1596, %v1616
        %v1620 = vadd.f32 %v1601, %v1617
        %v1621 = vmul.f32 %v1618, 0.7978846
        %v1622 = vmul.f32 %v1619, 0.7978846
        %v1623 = vmul.f32 %v1620, 0.7978846
        %v1624 = vtanh.pop %v1621
        %v1625 = vtanh.pop %v1622
        %v1626 = vtanh.pop %v1623
        %v1627 = vadd.f32 %v1624, 1.0
        %v1628 = vadd.f32 %v1625, 1.0
        %v1629 = vadd.f32 %v1626, 1.0
        %v1630 = vmul.f32 %v1606, %v1627
        %v1631 = vmul.f32 %v1607, %v1628
        %v1632 = vmul.f32 %v1608, %v1629
        %v1633 = vld [vmem:[%s11] sm:$0xf]
        %v1634 = vld [vmem:[%s11 + $0x4] sm:$0xf]
        %v1635 = vld [vmem:[%s11 + $0x8] sm:$0xf]
        %v1636 = vld [vmem:[%s11 + $0xc] sm:$0xf]
        %v1637 = vld [vmem:[%s11 + $0x10] sm:$0xf]
        %v1638 = vld [vmem:[%s11 + $0x14] sm:$0xf]
        %v1639 = vld [vmem:[%s11 + $0x18] sm:$0xf]
        %v1640 = vld [vmem:[%s11 + $0x1c] sm:$0xf]
        %v1641 = vld [vmem:[%s11 + $0x20] sm:$0xf]
        %v1642 = vld [vmem:[%s11 + $0x24] sm:$0xf]
        %v1643 = vld [vmem:[%s11 + $0x28] sm:$0xf]
        %v1644 = vld [vmem:[%s11 + $0x2c] sm:$0xf]
        %v1645 = vld [vmem:[%s11 + $0x30] sm:$0xf]
        %v1646 = vld [vmem:[%s11 + $0x34] sm:$0xf]
        %v1647 = vld [vmem:[%s11 + $0x38] sm:$0xf]
        %v1648 = vld [vmem:[%s11 + $0x3c] sm:$0xf]
        %v1649 = vpack.c.bf16 %v1631, %v1630
        %v1650 = vpack.c.bf16 %v1632, %v1632
        %v1667 = vunpack.c.l.b16 %v1633
        %v1668 = vunpack.c.l.b16 %v1634
        %v1669 = vunpack.c.l.b16 %v1635
        %v1670 = vunpack.c.l.b16 %v1636
        %v1671 = vunpack.c.l.b16 %v1637
        %v1672 = vunpack.c.l.b16 %v1638
        %v1673 = vunpack.c.l.b16 %v1639
        %v1674 = vunpack.c.l.b16 %v1640
        %v1675 = vunpack.c.l.b16 %v1641
        %v1676 = vunpack.c.l.b16 %v1642
        %v1677 = vunpack.c.l.b16 %v1643
        %v1678 = vunpack.c.l.b16 %v1644
        %v1679 = vunpack.c.l.b16 %v1645
        %v1680 = vunpack.c.l.b16 %v1646
        %v1681 = vunpack.c.l.b16 %v1647
        %v1682 = vunpack.c.l.b16 %v1648
        %v1683 = vpack.c.b16 %v1668, %v1667
        %v1684 = vpack.c.b16 %v1670, %v1669
        %v1685 = vpack.c.b16 %v1672, %v1671
        %v1686 = vpack.c.b16 %v1674, %v1673
        %v1687 = vpack.c.b16 %v1676, %v1675
        %v1688 = vpack.c.b16 %v1678, %v1677
        %v1689 = vpack.c.b16 %v1680, %v1679
        %v1690 = vpack.c.b16 %v1682, %v1681
        %1699 = vmatprep.subr.bf16.mxu0 0
        %1700 = vmatpush1.bf16.msra.mxu0 %v1683
        %1701 = vmatprep.subr.bf16.mxu0 0
        %1702 = vmatpush1.bf16.msra.mxu0 %v1684
        %1703 = vmatprep.subr.bf16.mxu0 0
        %1704 = vmatpush1.bf16.msra.mxu0 %v1685
        %1705 = vmatprep.subr.bf16.mxu0 0
        %1706 = vmatpush1.bf16.msra.mxu0 %v1686
        %1707 = vmatprep.subr.bf16.mxu0 0
        %1708 = vmatpush1.bf16.msra.mxu0 %v1687
        %1709 = vmatprep.subr.bf16.mxu0 0
        %1710 = vmatpush1.bf16.msra.mxu0 %v1688
        %1711 = vmatprep.subr.bf16.mxu0 0
        %1712 = vmatpush1.bf16.msra.mxu0 %v1689
        %1713 = vmatprep.subr.bf16.mxu0 0
        %1714 = vmatpush1.bf16.msra.mxu0 %v1690
        %1715 = vmatprep.subr.bf16.mxu0 0
        %1716 = vmatpush1.bf16.msra.mxu0 0
        %1717 = vmatprep.subr.bf16.mxu0 0
        %1718 = vmatpush1.bf16.msra.mxu0 0
        %1719 = vmatprep.subr.bf16.mxu0 0
        %1720 = vmatpush1.bf16.msra.mxu0 0
        %1721 = vmatprep.subr.bf16.mxu0 0
        %1722 = vmatpush1.bf16.msra.mxu0 0
        %1723 = vmatprep.subr.bf16.mxu0 0
        %1724 = vmatpush1.bf16.msra.mxu0 0
        %1725 = vmatprep.subr.bf16.mxu0 0
        %1726 = vmatpush1.bf16.msra.mxu0 0
        %1727 = vmatprep.subr.bf16.mxu0 0
        %1728 = vmatpush1.bf16.msra.mxu0 0
        %1729 = vmatprep.subr.bf16.mxu0 0
        %1730 = vmatpush1.bf16.msra.mxu0 0
        %1731 = vmatprep.mubr.bf16.mxu0 0
        %1732 = vmatmul.mubr.bf16.gmra.mrb[0].mxu0 %v1649
        %v1733 = vpop.f32.mrb[0].mxu0
        %v1734 = vadd.f32 0.0, %v1733
        %v1735 = vpop.f32.mrb[0].mxu0
        %v1736 = vpop.f32.mrb[0].mxu0
        %v1737 = vadd.f32 0.0, %v1736
        %v1738 = vpop.f32.mrb[0].mxu0
        %1739 = vmatprep.mubr.bf16.mxu0 0
        %1740 = vmatmul.mubr.bf16.gmra.mrb[0].mxu0 %v1650
        %v1741 = vpop.f32.mrb[0].mxu0
        %v1742 = vadd.f32 0.0, %v1741
        %v1743 = vpop.f32.mrb[0].mxu0
        %v1744 = vpop.f32.mrb[0].mxu0
        %v1745 = vpop.f32.mrb[0].mxu0
        %1746 = vdwg.mxu0
        %v1747 = vadd.f32 %v1465, %v1734
        %v1748 = vadd.f32 %v1466, %v1737
        %v1749 = vadd.f32 %v1467, %v1742
        %v1750 = vld [vmem:[%s12] sm:$0x1]
        %v1752 = vlaneseq
        %v1753 = vshrl.u32 %v1752, 7
        %v1754 = vsub.s32 0, %v1753
        %v1755 = vrot.slane %v1750, %v1754
        %v1757 = vadd.f32 %v1747, %v1755
        %v1758 = vadd.f32 %v1748, %v1755
        %v1759 = vadd.f32 %v1749, %v1755
        %1760 = vst.msk [vmem:[%s480] sm:$0xff] %vm488, %v1757
        %1761 = vst.msk [vmem:[%s480 + $0x8] sm:$0xff] %vm488, %v1758
        %1762 = vst.msk [vmem:[%s480 + $0x10] sm:$0xff] %vm488, %v1759
        %s1763 = smul.u32 3, %s29
        %p1764 = scmp.lt.s32.totalorder %s1763, 5
        %s1765 = scalar_select %p1764, %s1763, 5
        %s1766 = smul.addr %s1765, 8
        %s1767 = scalar_lea.vmem %s13, %s1766
        %s1768 = sand.u32 %s341, 1
        %s1769 = scalar_lea.sflag [#allocation3], %s1768
        %s1770 = sand.u32 %s341, 1
        %s1771 = smul.addr %s1770, 96
        %s1772 = scalar_lea.vmem [#allocation2], %s1771
        // Predicated region
        $region73: #{_lambda_.7} parent=71 // pred_check
          %p1773 = pneg %p325
        $region74: #{_lambda_.7} parent=71 // pred_check_branch
          %1775 = sbr.rel (%p1773) target = $region76
        $region75: #{_lambda_.7} parent=71 // pred_region
          %s1776 = smul.u32 3, %s29
        $region76: #{_lambda_.7} parent=71 // pred_fallthru
          _
        // Predicated region
        $region77: #{_lambda_.7} parent=71 // pred_check
          %p1777 = pneg %p351
        $region78: #{_lambda_.7} parent=71 // pred_check_branch
          %1779 = sbr.rel (%p1777) target = $region80
        $region79: #{_lambda_.7} parent=71 // pred_region
          %s1781 = ssub.s32 1536, 1536
          %1782 = vsyncadd %s1769, %s1781
          %s1783 = smul.addr %s29, 12
          %s1784 = smul.addr %s1783, 128
          %s1785 = scalar_lea.hbm %s14, %s1784
          %s1786 = sshll.u32 %s1772, 4
          %s1787 = int_to_ptr.vmem [resolvable:$true] %s1786
          %1792 = dma.vmem_to_hbm [thread:$0]  %s1787, 1536, %s1785, %s1769, 128, 128, 8
        $region80: #{_lambda_.7} parent=71 // pred_fallthru
          _
      $region72: #{_lambda_.7} parent=5 // pred_fallthru
        _
      %p1793 = scmp.le.s32.totalorder 2, %s24
      // Predicated region
      $region81: #{_lambda_.7} parent=5 // pred_check
        %p1794 = pneg %p1793
      $region82: #{_lambda_.7} parent=5 // pred_check_branch
        %1796 = sbr.rel (%p1794) target = $region84
      $region83: #{_lambda_.7} parent=5 // pred_region
        %s1797 = ssub.s32 %s24, 2
        // Predicated region
        $region85: #{_lambda_.7} parent=83 // pred_check
          %p1798 = pneg %p331
        $region86: #{_lambda_.7} parent=83 // pred_check_branch
          %1800 = sbr.rel (%p1798) target = $region88
        $region87: #{_lambda_.7} parent=83 // pred_region
          %s1801 = smul.u32 3, %s30
          %p1802 = scmp.lt.s32.totalorder %s1801, 5
          %s1803 = scalar_select %p1802, %s1801, 5
          %s1804 = smul.addr %s1803, 8
          %s1805 = scalar_lea.vmem %s13, %s1804
        $region88: #{_lambda_.7} parent=83 // pred_fallthru
          _
        // Predicated region
        $region89: #{_lambda_.7} parent=83 // pred_check
          %p1806 = pneg %p357
        $region90: #{_lambda_.7} parent=83 // pred_check_branch
          %1808 = sbr.rel (%p1806) target = $region92
        $region91: #{_lambda_.7} parent=83 // pred_region
          %s1809 = sand.u32 %s342, 1
          %s1810 = scalar_lea.sflag [#allocation3], %s1809
          %s1811 = sand.u32 %s342, 1
          %s1812 = smul.addr %s1811, 96
          %s1813 = scalar_lea.vmem [#allocation2], %s1812
          %1814 = dma.done %s1810, 1536
        $region92: #{_lambda_.7} parent=83 // pred_fallthru
          _
      $region84: #{_lambda_.7} parent=5 // pred_fallthru
        _
    $region6: #{_lambda_.7} parent=1 // loop_footer
      %s28 = sadd.s32 1, %s24
    $region7: #{_lambda_.7} parent=1 // loop_footer_branch
      %23 = sbr.rel target = $region3
    $region8: #{_lambda_.7} parent=1 // loop_exit
      _
    %1815 = vsyncpa [#allocation3], 1
    %s1816 = scalar_lea.sflag [#allocation3], 1
    %1817 = vsyncpa %s1816, 1

</llo_original>
